<compile_context>
chip_gen: v5e
topology: v5e:2x2
jax: 0.10.0
libtpu: 0.0.40
codegen_flags: <defaults>
</compile_context>

<pallas_src>
import functools

import jax
import jax.numpy as jnp
import numpy as np
from jax.experimental import pallas as pl
from jax.experimental.pallas import tpu as pltpu


# ----------------------------- Pallas kernel ------------------------------- #
def _silu(a):
    """Exact, overflow-safe SiLU: a * sigmoid(a) with sigmoid via tanh (EUP)."""
    return a * (0.5 * jnp.tanh(0.5 * a) + 0.5)


def _resnet_block_kernel(*refs, proj):
    """Fused ResNetBlock forward for one batch image (grid axis 0 = batch).

    refs (proj=False): x, w1, b1, w2, b2, w3, b3, o, y1p_scratch
    refs (proj=True) : x, w1, b1, w2, b2, w3, b3, ws, bs, o, y1p_scratch

      x   : (1, H, W, C1) f32        w1 : (C1, C2)   bf16   b1 : (1, C2) f32
      w2  : (9, C2, C2)  bf16 (tap-major dy*3+dx)           b2 : (1, C2) f32
      w3  : (C2, C3)     bf16                               b3 : (1, C3) f32
      ws  : (C1, C3)     bf16 (projection shortcut)         bs : (1, C3) f32
      o   : (1, H, W, C3) f32
      y1p : (H+2, W+2, C2) bf16 VMEM scratch (zero-bordered cv1 output)
    """
    if proj:
        (x_ref, w1_ref, b1_ref, w2_ref, b2_ref, w3_ref, b3_ref,
         ws_ref, bs_ref, o_ref, y1p_ref) = refs
    else:
        (x_ref, w1_ref, b1_ref, w2_ref, b2_ref, w3_ref, b3_ref,
         o_ref, y1p_ref) = refs
        ws_ref = bs_ref = None

    _, H, W, C1 = x_ref.shape
    C2 = w1_ref.shape[1]
    C3 = w3_ref.shape[1]
    n = H * W

    # ---- cv1: 1x1 conv + BN + SiLU -----------------------------------------
    # x is read and cast to bf16 here and *not* kept live to the residual add.
    x_bf = x_ref[...].reshape(n, C1).astype(jnp.bfloat16)
    a1 = jnp.dot(x_bf, w1_ref[...], preferred_element_type=jnp.float32)
    y1 = _silu(a1 + b1_ref[...])                           # (n, C2) f32

    # ---- stage cv1 output into bf16 zero-bordered halo scratch --------------
    # Only the 1-pixel border is zeroed (interior fully overwritten below).
    zero_row = jnp.zeros((1, W + 2, C2), jnp.bfloat16)
    zero_col = jnp.zeros((H + 2, 1, C2), jnp.bfloat16)
    y1p_ref[0:1, :, :] = zero_row
    y1p_ref[H + 1:H + 2, :, :] = zero_row
    y1p_ref[:, 0:1, :] = zero_col
    y1p_ref[:, W + 1:W + 2, :] = zero_col
    y1p_ref[1:H + 1, 1:W + 1, :] = y1.astype(jnp.bfloat16).reshape(H, W, C2)

    # ---- cv2: 3x3 conv (stride 1, 'same') + BN + SiLU -----------------------
    # 9 direct tap reads from the scratch; accumulator seeded by tap 0.
    acc2 = None
    for dy in range(3):                                    # unrolled taps
        for dx in range(3):
            tap = y1p_ref[dy:dy + H, dx:dx + W, :].reshape(n, C2)   # bf16
            part = jnp.dot(tap, w2_ref[3 * dy + dx],
                           preferred_element_type=jnp.float32)
            acc2 = part if acc2 is None else acc2 + part
    y2 = _silu(acc2 + b2_ref[...])                         # (n, C2) f32

    # ---- cv3: 1x1 conv + BN (no activation) ---------------------------------
    y3 = jnp.dot(y2.astype(jnp.bfloat16), w3_ref[...],
                 preferred_element_type=jnp.float32) + b3_ref[...]

    # ---- shortcut + residual + ReLU -----------------------------------------
    # x_ref is re-read here (still resident in its VMEM input buffer) instead
    # of holding an f32 copy live across the whole kernel.
    if ws_ref is None:
        sc = x_ref[...].reshape(n, C3)                     # identity shortcut
    else:
        sc = jnp.dot(x_ref[...].reshape(n, C1).astype(jnp.bfloat16),
                     ws_ref[...],
                     preferred_element_type=jnp.float32) + bs_ref[...]

    out = jnp.maximum(y3 + sc, 0.0)
    o_ref[...] = out.reshape(1, H, W, C3).astype(o_ref.dtype)


# ------------------------------ wrappers ------------------------------------ #
def resnet_block_forward_nhwc(x, w1f, b1f, w2f, b2f, w3f, b3f,
                              wsf=None, bsf=None, *, s=1):
    """NHWC fast path (no layout transposes).  x: (B, H, W, C1) f32."""
    if s != 1:
        # TODO(synk): stride > 1 (strided 3x3 + strided 1x1 shortcut) not implemented.
        raise NotImplementedError("ResNetBlock Pallas kernel supports s == 1 only")

    B, H, W, C1 = x.shape
    C2 = w1f.shape[-1]
    C3 = w3f.shape[-1]
    proj = wsf is not None
    if not proj:
        assert C1 == C3, "identity shortcut requires c1 == e*c2"

    # Fused weights -> bf16 for the MXU; biases stay f32 (added to f32 acc).
    w1 = w1f.reshape(C1, C2).astype(jnp.bfloat16)
    w2 = w2f.reshape(9, C2, C2).astype(jnp.bfloat16)       # tap-major (dy*3+dx)
    w3 = w3f.reshape(C2, C3).astype(jnp.bfloat16)
    b1 = b1f.reshape(1, C2).astype(jnp.float32)
    b2 = b2f.reshape(1, C2).astype(jnp.float32)
    b3 = b3f.reshape(1, C3).astype(jnp.float32)

    operands = [x.astype(jnp.float32), w1, b1, w2, b2, w3, b3]
    in_specs = [
        pl.BlockSpec((1, H, W, C1), lambda b: (b, 0, 0, 0)),
        pl.BlockSpec((C1, C2), lambda b: (0, 0)),
        pl.BlockSpec((1, C2), lambda b: (0, 0)),
        pl.BlockSpec((9, C2, C2), lambda b: (0, 0, 0)),
        pl.BlockSpec((1, C2), lambda b: (0, 0)),
        pl.BlockSpec((C2, C3), lambda b: (0, 0)),
        pl.BlockSpec((1, C3), lambda b: (0, 0)),
    ]
    if proj:
        ws = wsf.reshape(C1, C3).astype(jnp.bfloat16)
        bs = bsf.reshape(1, C3).astype(jnp.float32)
        operands += [ws, bs]
        in_specs += [pl.BlockSpec((C1, C3), lambda b: (0, 0)),
                     pl.BlockSpec((1, C3), lambda b: (0, 0))]

    # VMEM budget derived from the actual chip (v7x: 64 MiB, v5e/v6e: 128 MiB).
    try:
        vmem_cap = int(pltpu.get_tpu_info().vmem_capacity_bytes)
    except Exception:
        vmem_cap = 128 * 1024 * 1024
    vmem_limit = min(vmem_cap // 2, 64 * 1024 * 1024)

    flops = 2 * B * H * W * (C1 * C2 + 9 * C2 * C2 + C2 * C3
                             + (C1 * C3 if proj else 0))
    bytes_accessed = int(B * H * W * C1) * 4 + int(B * H * W * C3) * 4 + sum(
        int(o.size) * o.dtype.itemsize for o in operands[1:])
    cost = pl.CostEstimate(flops=int(flops),
                           transcendentals=int(2 * B * H * W * C2),
                           bytes_accessed=int(bytes_accessed))

    kern = functools.partial(_resnet_block_kernel, proj=proj)
    return pl.pallas_call(
        kern,
        out_shape=jax.ShapeDtypeStruct((B, H, W, C3), jnp.float32),
        grid=(B,),
        in_specs=in_specs,
        out_specs=pl.BlockSpec((1, H, W, C3), lambda b: (b, 0, 0, 0)),
        scratch_shapes=[pltpu.VMEM((H + 2, W + 2, C2), jnp.bfloat16)],
        compiler_params=pltpu.CompilerParams(
            dimension_semantics=("parallel",),
            vmem_limit_bytes=int(vmem_limit)),
        cost_estimate=cost,
    )(*operands)


def resnet_block_forward(x_nchw, w1f, b1f, w2f, b2f, w3f, b3f,
                         wsf=None, bsf=None, *, s=1):
    """PyTorch-interface wrapper: x_nchw (B, C1, H, W) f32 -> (B, C3, H, W).

    Keeps the NCHW interface for parity with the spec; pipelines that stay NHWC
    end-to-end should call resnet_block_forward_nhwc directly and skip the two
    full-tensor HBM transposes (the main v5e bandwidth item).
    """
    x = jnp.transpose(x_nchw, (0, 2, 3, 1)).astype(jnp.float32)       # NHWC
    out_nhwc = resnet_block_forward_nhwc(x, w1f, b1f, w2f, b2f, w3f, b3f,
                                         wsf, bsf, s=s)
    return jnp.transpose(out_nhwc, (0, 3, 1, 2))                      # NCHW


# ----------------------- deterministic param setup -------------------------- #
def make_fused_conv_bn(key, cin, cout, k, eps=1e-3):
    """Conv2d(bias=False) + BatchNorm2d(eval) folded into (w_hwio, bias)."""
    kw, kg, kb, km, kv = jax.random.split(key, 5)
    w = 0.1 * jax.random.normal(kw, (k, k, cin, cout), jnp.float32)   # HWIO
    gamma = 1.0 + 0.1 * jax.random.normal(kg, (cout,), jnp.float32)
    beta = 0.1 * jax.random.normal(kb, (cout,), jnp.float32)
    mean = 0.1 * jax.random.normal(km, (cout,), jnp.float32)
    var = jnp.abs(jax.random.normal(kv, (cout,), jnp.float32)) + 0.5
    scale = gamma / jnp.sqrt(var + eps)
    return w * scale, beta - mean * scale


# ------------------------------ reference ----------------------------------- #
def ref_resnet_block(x_nchw, w1f, b1f, w2f, b2f, w3f, b3f, wsf=None, bsf=None):
    x = jnp.transpose(x_nchw, (0, 2, 3, 1))

    def conv_bn(h, w, b, act):
        y = jax.lax.conv_general_dilated(
            h, w, (1, 1), "SAME",
            dimension_numbers=("NHWC", "HWIO", "NHWC"),
            precision=jax.lax.Precision.HIGHEST) + b
        return y * jax.nn.sigmoid(y) if act else y

    y = conv_bn(x, w1f, b1f, True)
    y = conv_bn(y, w2f, b2f, True)
    y = conv_bn(y, w3f, b3f, False)
    sc = conv_bn(x, wsf, bsf, False) if wsf is not None else x
    out = jax.nn.relu(y + sc)
    return jnp.transpose(out, (0, 3, 1, 2))


# -------------------------------- main -------------------------------------- #
if __name__ == "__main__":
    B, H, W = 2, 16, 16
    # bf16 MXU inputs vs f32-HIGHEST reference -> loose-ish tolerance.
    TOL = dict(rtol=2e-2, atol=2e-2)

    # Case A: ResNetBlock(c1=16, c2=4, s=1, e=4) -> c3 = 16 == c1 (identity shortcut)
    c1, c2, e = 16, 4, 4
    c3 = e * c2
    kx, k1, k2, k3 = jax.random.split(jax.random.PRNGKey(0), 4)
    x = jax.random.normal(kx, (B, c1, H, W), jnp.float32)
    w1f, b1f = make_fused_conv_bn(k1, c1, c2, 1)
    w2f, b2f = make_fused_conv_bn(k2, c2, c2, 3)
    w3f, b3f = make_fused_conv_bn(k3, c2, c3, 1)

    out = jax.block_until_ready(
        resnet_block_forward(x, w1f, b1f, w2f, b2f, w3f, b3f))
    ref = jax.block_until_ready(
        ref_resnet_block(x, w1f, b1f, w2f, b2f, w3f, b3f))
    np.testing.assert_allclose(np.asarray(out), np.asarray(ref), **TOL)

    # Case B: ResNetBlock(c1=8, c2=4, s=1, e=4) -> c3 = 16 != c1 (1x1 projection shortcut)
    c1b = 8
    kxb, k1b, k2b, k3b, ksb = jax.random.split(jax.random.PRNGKey(0), 5)
    xb = jax.random.normal(kxb, (B, c1b, H, W), jnp.float32)
    w1b, b1b = make_fused_conv_bn(k1b, c1b, c2, 1)
    w2b, b2b = make_fused_conv_bn(k2b, c2, c2, 3)
    w3b, b3b = make_fused_conv_bn(k3b, c2, c3, 1)
    wsb, bsb = make_fused_conv_bn(ksb, c1b, c3, 1)

    outb = jax.block_until_ready(
        resnet_block_forward(xb, w1b, b1b, w2b, b2b, w3b, b3b, wsb, bsb))
    refb = jax.block_until_ready(
        ref_resnet_block(xb, w1b, b1b, w2b, b2b, w3b, b3b, wsb, bsb))
    np.testing.assert_allclose(np.asarray(outb), np.asarray(refb), **TOL)

    print("KERNEL_OK")
</pallas_src>

<mosaic_0001>
module attributes {stable_mosaic.version = 11 : i64} {
  func.func @_resnet_block_kernel(%arg0: i32, %arg1: memref<1x16x16x16xf32, #tpu.memory_space<vmem>>, %arg2: memref<16x4xbf16, #tpu.memory_space<vmem>>, %arg3: memref<1x4xf32, #tpu.memory_space<vmem>>, %arg4: memref<9x4x4xbf16, #tpu.memory_space<vmem>>, %arg5: memref<1x4xf32, #tpu.memory_space<vmem>>, %arg6: memref<4x16xbf16, #tpu.memory_space<vmem>>, %arg7: memref<1x16xf32, #tpu.memory_space<vmem>>, %arg8: memref<1x16x16x16xf32, #tpu.memory_space<vmem>>, %arg9: memref<18x18x4xbf16, #tpu.memory_space<vmem>>) attributes {dimension_semantics = [#tpu.dimension_semantics<parallel>], iteration_bounds = array<i64: 2>, scalar_prefetch = 0 : i64, scratch_operands = 1 : i64, tpu.core_type = #tpu.core_type<tc>, window_params = [{transform_indices = @transform_0, window_bounds = array<i64: 1, 16, 16, 16>}, {pipeline_mode = #tpu.pipeline_mode<synchronous>, transform_indices = @transform_1, window_bounds = array<i64: 16, 4>}, {pipeline_mode = #tpu.pipeline_mode<synchronous>, transform_indices = @transform_2, window_bounds = array<i64: 1, 4>}, {pipeline_mode = #tpu.pipeline_mode<synchronous>, transform_indices = @transform_3, window_bounds = array<i64: 9, 4, 4>}, {pipeline_mode = #tpu.pipeline_mode<synchronous>, transform_indices = @transform_4, window_bounds = array<i64: 1, 4>}, {pipeline_mode = #tpu.pipeline_mode<synchronous>, transform_indices = @transform_5, window_bounds = array<i64: 4, 16>}, {pipeline_mode = #tpu.pipeline_mode<synchronous>, transform_indices = @transform_6, window_bounds = array<i64: 1, 16>}, {transform_indices = @transform_7, window_bounds = array<i64: 1, 16, 16, 16>}]} {
    %c0 = arith.constant 0 : index
    %c0_0 = arith.constant 0 : index
    %c0_1 = arith.constant 0 : index
    %c0_2 = arith.constant 0 : index
    %0 = vector.load %arg1[%c0, %c0_0, %c0_1, %c0_2] : memref<1x16x16x16xf32, #tpu.memory_space<vmem>>, vector<1x16x16x16xf32>
    %1 = vector.shape_cast %0 : vector<1x16x16x16xf32> to vector<256x16xf32>
    %2 = arith.truncf %1 : vector<256x16xf32> to vector<256x16xbf16>
    %c0_3 = arith.constant 0 : index
    %c0_4 = arith.constant 0 : index
    %3 = vector.load %arg2[%c0_3, %c0_4] : memref<16x4xbf16, #tpu.memory_space<vmem>>, vector<16x4xbf16>
    %cst = arith.constant dense<0.000000e+00> : vector<256x4xf32>
    %4 = tpu.matmul %2, %3, %cst {dimension_numbers = #tpu.dot_dimension_numbers<[1], [0], [0], [1], [0, 0, 1, 1], [], []>} : vector<256x16xbf16>, vector<16x4xbf16>, vector<256x4xf32> -> vector<256x4xf32>
    %c0_5 = arith.constant 0 : index
    %c0_6 = arith.constant 0 : index
    %5 = vector.load %arg3[%c0_5, %c0_6] : memref<1x4xf32, #tpu.memory_space<vmem>>, vector<1x4xf32>
    %6 = vector.broadcast %5 : vector<1x4xf32> to vector<256x4xf32>
    %7 = arith.addf %4, %6 : vector<256x4xf32>
    %cst_7 = arith.constant 5.000000e-01 : f32
    %8 = vector.broadcast %cst_7 : f32 to vector<256x4xf32>
    %9 = arith.mulf %8, %7 : vector<256x4xf32>
    %10 = math.tanh %9 : vector<256x4xf32>
    %cst_8 = arith.constant 5.000000e-01 : f32
    %11 = vector.broadcast %cst_8 : f32 to vector<256x4xf32>
    %12 = arith.mulf %11, %10 : vector<256x4xf32>
    %cst_9 = arith.constant 5.000000e-01 : f32
    %13 = vector.broadcast %cst_9 : f32 to vector<256x4xf32>
    %14 = arith.addf %12, %13 : vector<256x4xf32>
    %15 = arith.mulf %7, %14 : vector<256x4xf32>
    %cst_10 = arith.constant 0.000000e+00 : bf16
    %16 = vector.broadcast %cst_10 : bf16 to vector<1x18x4xbf16>
    %cst_11 = arith.constant 0.000000e+00 : bf16
    %17 = vector.broadcast %cst_11 : bf16 to vector<18x1x4xbf16>
    %c0_12 = arith.constant 0 : index
    %c0_13 = arith.constant 0 : index
    %c0_14 = arith.constant 0 : index
    %18 = vector.load %arg9[%c0_12, %c0_13, %c0_14] : memref<18x18x4xbf16, #tpu.memory_space<vmem>>, vector<1x18x4xbf16>
    tpu.vector_store %arg9[%c0_12, %c0_13, %c0_14], %16 {strides = array<i32>} : memref<18x18x4xbf16, #tpu.memory_space<vmem>>, vector<1x18x4xbf16>,
    %c17 = arith.constant 17 : index
    %c0_15 = arith.constant 0 : index
    %c0_16 = arith.constant 0 : index
    %19 = vector.load %arg9[%c17, %c0_15, %c0_16] : memref<18x18x4xbf16, #tpu.memory_space<vmem>>, vector<1x18x4xbf16>
    tpu.vector_store %arg9[%c17, %c0_15, %c0_16], %16 {strides = array<i32>} : memref<18x18x4xbf16, #tpu.memory_space<vmem>>, vector<1x18x4xbf16>,
    %c0_17 = arith.constant 0 : index
    %c0_18 = arith.constant 0 : index
    %c0_19 = arith.constant 0 : index
    %20 = vector.load %arg9[%c0_17, %c0_18, %c0_19] : memref<18x18x4xbf16, #tpu.memory_space<vmem>>, vector<18x1x4xbf16>
    tpu.vector_store %arg9[%c0_17, %c0_18, %c0_19], %17 {strides = array<i32>} : memref<18x18x4xbf16, #tpu.memory_space<vmem>>, vector<18x1x4xbf16>,
    %c0_20 = arith.constant 0 : index
    %c17_21 = arith.constant 17 : index
    %c0_22 = arith.constant 0 : index
    %21 = vector.load %arg9[%c0_20, %c17_21, %c0_22] : memref<18x18x4xbf16, #tpu.memory_space<vmem>>, vector<18x1x4xbf16>
    tpu.vector_store %arg9[%c0_20, %c17_21, %c0_22], %17 {strides = array<i32>} : memref<18x18x4xbf16, #tpu.memory_space<vmem>>, vector<18x1x4xbf16>,
    %22 = arith.truncf %15 : vector<256x4xf32> to vector<256x4xbf16>
    %23 = vector.shape_cast %22 : vector<256x4xbf16> to vector<16x16x4xbf16>
    %c1 = arith.constant 1 : index
    %c1_23 = arith.constant 1 : index
    %c0_24 = arith.constant 0 : index
    %24 = vector.load %arg9[%c1, %c1_23, %c0_24] : memref<18x18x4xbf16, #tpu.memory_space<vmem>>, vector<16x16x4xbf16>
    tpu.vector_store %arg9[%c1, %c1_23, %c0_24], %23 {strides = array<i32>} : memref<18x18x4xbf16, #tpu.memory_space<vmem>>, vector<16x16x4xbf16>,
    %c0_25 = arith.constant 0 : index
    %c0_26 = arith.constant 0 : index
    %c0_27 = arith.constant 0 : index
    %25 = vector.load %arg9[%c0_25, %c0_26, %c0_27] : memref<18x18x4xbf16, #tpu.memory_space<vmem>>, vector<16x16x4xbf16>
    %26 = vector.shape_cast %25 : vector<16x16x4xbf16> to vector<256x4xbf16>
    %c0_28 = arith.constant 0 : index
    %c0_29 = arith.constant 0 : index
    %c0_30 = arith.constant 0 : index
    %27 = vector.load %arg4[%c0_28, %c0_29, %c0_30] : memref<9x4x4xbf16, #tpu.memory_space<vmem>>, vector<1x4x4xbf16>
    %28 = vector.shape_cast %27 : vector<1x4x4xbf16> to vector<4x4xbf16>
    %cst_31 = arith.constant dense<0.000000e+00> : vector<256x4xf32>
    %29 = tpu.matmul %26, %28, %cst_31 {dimension_numbers = #tpu.dot_dimension_numbers<[1], [0], [0], [1], [0, 0, 1, 1], [], []>} : vector<256x4xbf16>, vector<4x4xbf16>, vector<256x4xf32> -> vector<256x4xf32>
    %c0_32 = arith.constant 0 : index
    %c1_33 = arith.constant 1 : index
    %c0_34 = arith.constant 0 : index
    %30 = vector.load %arg9[%c0_32, %c1_33, %c0_34] : memref<18x18x4xbf16, #tpu.memory_space<vmem>>, vector<16x16x4xbf16>
    %31 = vector.shape_cast %30 : vector<16x16x4xbf16> to vector<256x4xbf16>
    %c1_35 = arith.constant 1 : index
    %c0_36 = arith.constant 0 : index
    %c0_37 = arith.constant 0 : index
    %32 = vector.load %arg4[%c1_35, %c0_36, %c0_37] : memref<9x4x4xbf16, #tpu.memory_space<vmem>>, vector<1x4x4xbf16>
    %33 = vector.shape_cast %32 : vector<1x4x4xbf16> to vector<4x4xbf16>
    %cst_38 = arith.constant dense<0.000000e+00> : vector<256x4xf32>
    %34 = tpu.matmul %31, %33, %cst_38 {dimension_numbers = #tpu.dot_dimension_numbers<[1], [0], [0], [1], [0, 0, 1, 1], [], []>} : vector<256x4xbf16>, vector<4x4xbf16>, vector<256x4xf32> -> vector<256x4xf32>
    %35 = arith.addf %29, %34 : vector<256x4xf32>
    %c0_39 = arith.constant 0 : index
    %c2 = arith.constant 2 : index
    %c0_40 = arith.constant 0 : index
    %36 = vector.load %arg9[%c0_39, %c2, %c0_40] : memref<18x18x4xbf16, #tpu.memory_space<vmem>>, vector<16x16x4xbf16>
    %37 = vector.shape_cast %36 : vector<16x16x4xbf16> to vector<256x4xbf16>
    %c2_41 = arith.constant 2 : index
    %c0_42 = arith.constant 0 : index
    %c0_43 = arith.constant 0 : index
    %38 = vector.load %arg4[%c2_41, %c0_42, %c0_43] : memref<9x4x4xbf16, #tpu.memory_space<vmem>>, vector<1x4x4xbf16>
    %39 = vector.shape_cast %38 : vector<1x4x4xbf16> to vector<4x4xbf16>
    %cst_44 = arith.constant dense<0.000000e+00> : vector<256x4xf32>
    %40 = tpu.matmul %37, %39, %cst_44 {dimension_numbers = #tpu.dot_dimension_numbers<[1], [0], [0], [1], [0, 0, 1, 1], [], []>} : vector<256x4xbf16>, vector<4x4xbf16>, vector<256x4xf32> -> vector<256x4xf32>
    %41 = arith.addf %35, %40 : vector<256x4xf32>
    %c1_45 = arith.constant 1 : index
    %c0_46 = arith.constant 0 : index
    %c0_47 = arith.constant 0 : index
    %42 = vector.load %arg9[%c1_45, %c0_46, %c0_47] : memref<18x18x4xbf16, #tpu.memory_space<vmem>>, vector<16x16x4xbf16>
    %43 = vector.shape_cast %42 : vector<16x16x4xbf16> to vector<256x4xbf16>
    %c3 = arith.constant 3 : index
    %c0_48 = arith.constant 0 : index
    %c0_49 = arith.constant 0 : index
    %44 = vector.load %arg4[%c3, %c0_48, %c0_49] : memref<9x4x4xbf16, #tpu.memory_space<vmem>>, vector<1x4x4xbf16>
    %45 = vector.shape_cast %44 : vector<1x4x4xbf16> to vector<4x4xbf16>
    %cst_50 = arith.constant dense<0.000000e+00> : vector<256x4xf32>
    %46 = tpu.matmul %43, %45, %cst_50 {dimension_numbers = #tpu.dot_dimension_numbers<[1], [0], [0], [1], [0, 0, 1, 1], [], []>} : vector<256x4xbf16>, vector<4x4xbf16>, vector<256x4xf32> -> vector<256x4xf32>
    %47 = arith.addf %41, %46 : vector<256x4xf32>
    %c1_51 = arith.constant 1 : index
    %c1_52 = arith.constant 1 : index
    %c0_53 = arith.constant 0 : index
    %48 = vector.load %arg9[%c1_51, %c1_52, %c0_53] : memref<18x18x4xbf16, #tpu.memory_space<vmem>>, vector<16x16x4xbf16>
    %49 = vector.shape_cast %48 : vector<16x16x4xbf16> to vector<256x4xbf16>
    %c4 = arith.constant 4 : index
    %c0_54 = arith.constant 0 : index
    %c0_55 = arith.constant 0 : index
    %50 = vector.load %arg4[%c4, %c0_54, %c0_55] : memref<9x4x4xbf16, #tpu.memory_space<vmem>>, vector<1x4x4xbf16>
    %51 = vector.shape_cast %50 : vector<1x4x4xbf16> to vector<4x4xbf16>
    %cst_56 = arith.constant dense<0.000000e+00> : vector<256x4xf32>
    %52 = tpu.matmul %49, %51, %cst_56 {dimension_numbers = #tpu.dot_dimension_numbers<[1], [0], [0], [1], [0, 0, 1, 1], [], []>} : vector<256x4xbf16>, vector<4x4xbf16>, vector<256x4xf32> -> vector<256x4xf32>
    %53 = arith.addf %47, %52 : vector<256x4xf32>
    %c1_57 = arith.constant 1 : index
    %c2_58 = arith.constant 2 : index
    %c0_59 = arith.constant 0 : index
    %54 = vector.load %arg9[%c1_57, %c2_58, %c0_59] : memref<18x18x4xbf16, #tpu.memory_space<vmem>>, vector<16x16x4xbf16>
    %55 = vector.shape_cast %54 : vector<16x16x4xbf16> to vector<256x4xbf16>
    %c5 = arith.constant 5 : index
    %c0_60 = arith.constant 0 : index
    %c0_61 = arith.constant 0 : index
    %56 = vector.load %arg4[%c5, %c0_60, %c0_61] : memref<9x4x4xbf16, #tpu.memory_space<vmem>>, vector<1x4x4xbf16>
    %57 = vector.shape_cast %56 : vector<1x4x4xbf16> to vector<4x4xbf16>
    %cst_62 = arith.constant dense<0.000000e+00> : vector<256x4xf32>
    %58 = tpu.matmul %55, %57, %cst_62 {dimension_numbers = #tpu.dot_dimension_numbers<[1], [0], [0], [1], [0, 0, 1, 1], [], []>} : vector<256x4xbf16>, vector<4x4xbf16>, vector<256x4xf32> -> vector<256x4xf32>
    %59 = arith.addf %53, %58 : vector<256x4xf32>
    %c2_63 = arith.constant 2 : index
    %c0_64 = arith.constant 0 : index
    %c0_65 = arith.constant 0 : index
    %60 = vector.load %arg9[%c2_63, %c0_64, %c0_65] : memref<18x18x4xbf16, #tpu.memory_space<vmem>>, vector<16x16x4xbf16>
    %61 = vector.shape_cast %60 : vector<16x16x4xbf16> to vector<256x4xbf16>
    %c6 = arith.constant 6 : index
    %c0_66 = arith.constant 0 : index
    %c0_67 = arith.constant 0 : index
    %62 = vector.load %arg4[%c6, %c0_66, %c0_67] : memref<9x4x4xbf16, #tpu.memory_space<vmem>>, vector<1x4x4xbf16>
    %63 = vector.shape_cast %62 : vector<1x4x4xbf16> to vector<4x4xbf16>
    %cst_68 = arith.constant dense<0.000000e+00> : vector<256x4xf32>
    %64 = tpu.matmul %61, %63, %cst_68 {dimension_numbers = #tpu.dot_dimension_numbers<[1], [0], [0], [1], [0, 0, 1, 1], [], []>} : vector<256x4xbf16>, vector<4x4xbf16>, vector<256x4xf32> -> vector<256x4xf32>
    %65 = arith.addf %59, %64 : vector<256x4xf32>
    %c2_69 = arith.constant 2 : index
    %c1_70 = arith.constant 1 : index
    %c0_71 = arith.constant 0 : index
    %66 = vector.load %arg9[%c2_69, %c1_70, %c0_71] : memref<18x18x4xbf16, #tpu.memory_space<vmem>>, vector<16x16x4xbf16>
    %67 = vector.shape_cast %66 : vector<16x16x4xbf16> to vector<256x4xbf16>
    %c7 = arith.constant 7 : index
    %c0_72 = arith.constant 0 : index
    %c0_73 = arith.constant 0 : index
    %68 = vector.load %arg4[%c7, %c0_72, %c0_73] : memref<9x4x4xbf16, #tpu.memory_space<vmem>>, vector<1x4x4xbf16>
    %69 = vector.shape_cast %68 : vector<1x4x4xbf16> to vector<4x4xbf16>
    %cst_74 = arith.constant dense<0.000000e+00> : vector<256x4xf32>
    %70 = tpu.matmul %67, %69, %cst_74 {dimension_numbers = #tpu.dot_dimension_numbers<[1], [0], [0], [1], [0, 0, 1, 1], [], []>} : vector<256x4xbf16>, vector<4x4xbf16>, vector<256x4xf32> -> vector<256x4xf32>
    %71 = arith.addf %65, %70 : vector<256x4xf32>
    %c2_75 = arith.constant 2 : index
    %c2_76 = arith.constant 2 : index
    %c0_77 = arith.constant 0 : index
    %72 = vector.load %arg9[%c2_75, %c2_76, %c0_77] : memref<18x18x4xbf16, #tpu.memory_space<vmem>>, vector<16x16x4xbf16>
    %73 = vector.shape_cast %72 : vector<16x16x4xbf16> to vector<256x4xbf16>
    %c8 = arith.constant 8 : index
    %c0_78 = arith.constant 0 : index
    %c0_79 = arith.constant 0 : index
    %74 = vector.load %arg4[%c8, %c0_78, %c0_79] : memref<9x4x4xbf16, #tpu.memory_space<vmem>>, vector<1x4x4xbf16>
    %75 = vector.shape_cast %74 : vector<1x4x4xbf16> to vector<4x4xbf16>
    %cst_80 = arith.constant dense<0.000000e+00> : vector<256x4xf32>
    %76 = tpu.matmul %73, %75, %cst_80 {dimension_numbers = #tpu.dot_dimension_numbers<[1], [0], [0], [1], [0, 0, 1, 1], [], []>} : vector<256x4xbf16>, vector<4x4xbf16>, vector<256x4xf32> -> vector<256x4xf32>
    %77 = arith.addf %71, %76 : vector<256x4xf32>
    %c0_81 = arith.constant 0 : index
    %c0_82 = arith.constant 0 : index
    %78 = vector.load %arg5[%c0_81, %c0_82] : memref<1x4xf32, #tpu.memory_space<vmem>>, vector<1x4xf32>
    %79 = vector.broadcast %78 : vector<1x4xf32> to vector<256x4xf32>
    %80 = arith.addf %77, %79 : vector<256x4xf32>
    %cst_83 = arith.constant 5.000000e-01 : f32
    %81 = vector.broadcast %cst_83 : f32 to vector<256x4xf32>
    %82 = arith.mulf %81, %80 : vector<256x4xf32>
    %83 = math.tanh %82 : vector<256x4xf32>
    %cst_84 = arith.constant 5.000000e-01 : f32
    %84 = vector.broadcast %cst_84 : f32 to vector<256x4xf32>
    %85 = arith.mulf %84, %83 : vector<256x4xf32>
    %cst_85 = arith.constant 5.000000e-01 : f32
    %86 = vector.broadcast %cst_85 : f32 to vector<256x4xf32>
    %87 = arith.addf %85, %86 : vector<256x4xf32>
    %88 = arith.mulf %80, %87 : vector<256x4xf32>
    %89 = arith.truncf %88 : vector<256x4xf32> to vector<256x4xbf16>
    %c0_86 = arith.constant 0 : index
    %c0_87 = arith.constant 0 : index
    %90 = vector.load %arg6[%c0_86, %c0_87] : memref<4x16xbf16, #tpu.memory_space<vmem>>, vector<4x16xbf16>
    %cst_88 = arith.constant dense<0.000000e+00> : vector<256x16xf32>
    %91 = tpu.matmul %89, %90, %cst_88 {dimension_numbers = #tpu.dot_dimension_numbers<[1], [0], [0], [1], [0, 0, 1, 1], [], []>} : vector<256x4xbf16>, vector<4x16xbf16>, vector<256x16xf32> -> vector<256x16xf32>
    %c0_89 = arith.constant 0 : index
    %c0_90 = arith.constant 0 : index
    %92 = vector.load %arg7[%c0_89, %c0_90] : memref<1x16xf32, #tpu.memory_space<vmem>>, vector<1x16xf32>
    %93 = vector.broadcast %92 : vector<1x16xf32> to vector<256x16xf32>
    %94 = arith.addf %91, %93 : vector<256x16xf32>
    %c0_91 = arith.constant 0 : index
    %c0_92 = arith.constant 0 : index
    %c0_93 = arith.constant 0 : index
    %c0_94 = arith.constant 0 : index
    %95 = vector.load %arg1[%c0_91, %c0_92, %c0_93, %c0_94] : memref<1x16x16x16xf32, #tpu.memory_space<vmem>>, vector<1x16x16x16xf32>
    %96 = vector.shape_cast %95 : vector<1x16x16x16xf32> to vector<256x16xf32>
    %97 = arith.addf %94, %96 : vector<256x16xf32>
    %cst_95 = arith.constant 0.000000e+00 : f32
    %98 = vector.broadcast %cst_95 : f32 to vector<256x16xf32>
    %99 = arith.maximumf %97, %98 : vector<256x16xf32>
    %100 = vector.shape_cast %99 : vector<256x16xf32> to vector<1x16x16x16xf32>
    %c0_96 = arith.constant 0 : index
    %c0_97 = arith.constant 0 : index
    %c0_98 = arith.constant 0 : index
    %c0_99 = arith.constant 0 : index
    %101 = vector.load %arg8[%c0_96, %c0_97, %c0_98, %c0_99] : memref<1x16x16x16xf32, #tpu.memory_space<vmem>>, vector<1x16x16x16xf32>
    tpu.vector_store %arg8[%c0_96, %c0_97, %c0_98, %c0_99], %100 {strides = array<i32>} : memref<1x16x16x16xf32, #tpu.memory_space<vmem>>, vector<1x16x16x16xf32>,
    return
  }
  func.func @transform_0(%arg0: i32) -> (i32, i32, i32, i32) {
    %c0_i32 = arith.constant 0 : i32
    %c0_i32_0 = arith.constant 0 : i32
    %c0_i32_1 = arith.constant 0 : i32
    %c0_i32_2 = arith.constant 0 : i32
    return %arg0, %c0_i32, %c0_i32_0, %c0_i32_1 : i32, i32, i32, i32
  }
  func.func @transform_1(%arg0: i32) -> (i32, i32) {
    %c0_i32 = arith.constant 0 : i32
    %c0_i32_0 = arith.constant 0 : i32
    %c0_i32_1 = arith.constant 0 : i32
    return %c0_i32, %c0_i32_0 : i32, i32
  }
  func.func @transform_2(%arg0: i32) -> (i32, i32) {
    %c0_i32 = arith.constant 0 : i32
    %c0_i32_0 = arith.constant 0 : i32
    %c0_i32_1 = arith.constant 0 : i32
    return %c0_i32, %c0_i32_0 : i32, i32
  }
  func.func @transform_3(%arg0: i32) -> (i32, i32, i32) {
    %c0_i32 = arith.constant 0 : i32
    %c0_i32_0 = arith.constant 0 : i32
    %c0_i32_1 = arith.constant 0 : i32
    %c0_i32_2 = arith.constant 0 : i32
    return %c0_i32, %c0_i32_0, %c0_i32_1 : i32, i32, i32
  }
  func.func @transform_4(%arg0: i32) -> (i32, i32) {
    %c0_i32 = arith.constant 0 : i32
    %c0_i32_0 = arith.constant 0 : i32
    %c0_i32_1 = arith.constant 0 : i32
    return %c0_i32, %c0_i32_0 : i32, i32
  }
  func.func @transform_5(%arg0: i32) -> (i32, i32) {
    %c0_i32 = arith.constant 0 : i32
    %c0_i32_0 = arith.constant 0 : i32
    %c0_i32_1 = arith.constant 0 : i32
    return %c0_i32, %c0_i32_0 : i32, i32
  }
  func.func @transform_6(%arg0: i32) -> (i32, i32) {
    %c0_i32 = arith.constant 0 : i32
    %c0_i32_0 = arith.constant 0 : i32
    %c0_i32_1 = arith.constant 0 : i32
    return %c0_i32, %c0_i32_0 : i32, i32
  }
  func.func @transform_7(%arg0: i32) -> (i32, i32, i32, i32) {
    %c0_i32 = arith.constant 0 : i32
    %c0_i32_0 = arith.constant 0 : i32
    %c0_i32_1 = arith.constant 0 : i32
    %c0_i32_2 = arith.constant 0 : i32
    return %arg0, %c0_i32, %c0_i32_0, %c0_i32_1 : i32, i32, i32, i32
  }
}

</mosaic_0001>

<llo_original>
// kernel: tpu_custom_call.1
$region0: #{tpu_custom_call.1}
  #allocation0 [shape = 'u32[]', space=smem, size = 0x4, offset = 0x4, fixed_abs, tag = 'smem constant byte address 0x4 - core index']
  #allocation1 [shape = 'u32[72,128]{1,0:T(1,128)}', space=vmem, size = 0x9000, scoped, tag = 'internal scratch']
  #allocation2 [shape = 'bf16[18,18,4]{2,1,0:T(8,128)(2,1)}', space=vmem, size = 0x1b000, scoped, tag = 'scratch operand']
  %s0 = inlined_call_operand.hbm [shape: f32[2,16,16,16], index: 0, kind: input, shape index: {}]
  %s1 = inlined_call_operand.vmem [shape: bf16[16,4], index: 1, kind: input, shape index: {}]
  %s2 = inlined_call_operand.vmem [shape: f32[1,4], index: 2, kind: input, shape index: {}]
  %s3 = inlined_call_operand.vmem [shape: bf16[9,4,4], index: 3, kind: input, shape index: {}]
  %s4 = inlined_call_operand.vmem [shape: f32[1,4], index: 4, kind: input, shape index: {}]
  %s5 = inlined_call_operand.vmem [shape: bf16[4,16], index: 5, kind: input, shape index: {}]
  %s6 = inlined_call_operand.vmem [shape: f32[1,16], index: 6, kind: input, shape index: {}]
  %s7 = inlined_call_operand.hbm [shape: f32[2,16,16,16], index: 7, kind: output, shape index: {}]
  %s8 = sld [smem:[#allocation0]]
  $region65: #{tpu_custom_call.1} parent=0
    _
  %s10 = ssub.s32 1, %s8
  %s11 = scalar_select 0, %s10, %s8
  $region1: #{tpu_custom_call.1} parent=0
    #allocation3 [shape = 'u8[262144]{0}', space=vmem, size = 0x40000, scoped, tag = 'input window, operand 0']
    #allocation4 [shape = 's32[2]{0}', space=sflag, size = 0x8, scoped, tag = 'scoped memory for tpu_custom_call.1']
    #allocation5 [shape = 's32[2]{0}', space=sflag, size = 0x8, scoped, tag = 'scoped memory for tpu_custom_call.1']
    #allocation6 [shape = 'u8[262144]{0}', space=vmem, size = 0x40000, scoped, tag = 'output window, operand 0']
    %12 = vsyncpa [#allocation4], 0
    %s13 = scalar_lea.sflag [#allocation4], 1
    %14 = vsyncpa %s13, 0
    %15 = vsyncpa [#allocation5], 0
    %s16 = scalar_lea.sflag [#allocation5], 1
    %17 = vsyncpa %s16, 0
    loop: start=0, step=1, limit=4
    $region2: #{tpu_custom_call.1} parent=1 // loop_pre_header
      _
    $region3: #{tpu_custom_call.1} parent=1 // loop_header
      %s19 = sphi 0, %s23
      %p20 = scmp.ge.s32.totalorder %s19, 4
      %s29 = sphi 0, %s31
      %s32 = sphi 0, %s29
      %s33 = sphi 0, %s32
      %s49 = sphi 0, %s33
      %s53 = sphi 0, %s53
      %s55 = sphi 0, %s53
      %s56 = sphi 0, %s55
      %s70 = sphi 0, %s56
      %s74 = sphi 0, %s74
      %s76 = sphi 0, %s74
      %s77 = sphi 0, %s76
      %s91 = sphi 0, %s77
      %s95 = sphi 0, %s95
      %s97 = sphi 0, %s95
      %s98 = sphi 0, %s97
      %s112 = sphi 0, %s98
      %s116 = sphi 0, %s116
      %s118 = sphi 0, %s116
      %s119 = sphi 0, %s118
      %s133 = sphi 0, %s119
      %s137 = sphi 0, %s137
      %s139 = sphi 0, %s137
      %s140 = sphi 0, %s139
      %s154 = sphi 0, %s140
      %s158 = sphi 0, %s158
      %s160 = sphi 0, %s158
      %s161 = sphi 0, %s160
      %s175 = sphi 0, %s161
      %s181 = sphi 0, %s183
      %s184 = sphi 0, %s181
      %s185 = sphi 0, %s184
      %s201 = sphi 0, %s185
    $region4: #{tpu_custom_call.1} parent=1 // loop_header_branch
      %22 = sbr.rel (%p20) target = $region8
    $region5: #{tpu_custom_call.1} parent=1 // loop_body
      %s24 = ssub.s32 %s19, 1
      %s25 = ssub.s32 %s19, 2
      %s26 = sadd.s32 %s19, 1
      %s27 = ssub.s32 %s19, %s26
      %p28 = scmp.eq.s32.totalorder %s27, 0
      %s30 = sadd.s32 %s29, 1
      %s31 = scalar_select %p28, %s29, %s30
      %p34 = pneg %p28
      %p35 = scmp.eq.s32.totalorder %s19, 1
      %p36 = por %p34, %p35
      %p37 = scmp.ne.s32.totalorder %s29, %s32
      %p38 = scmp.eq.s32.totalorder %s19, 0
      %p39 = por %p37, %p38
      %p40 = scmp.ne.s32.totalorder %s29, %s32
      %p41 = scmp.eq.s32.totalorder %s24, 1
      %p42 = por %p40, %p41
      %p43 = scmp.ne.s32.totalorder %s32, %s33
      %p44 = scmp.eq.s32.totalorder %s24, 0
      %p45 = por %p43, %p44
      %p46 = scmp.ne.s32.totalorder %s32, %s33
      %p47 = scmp.eq.s32.totalorder %s25, 1
      %p48 = por %p46, %p47
      %p50 = scmp.ne.s32.totalorder %s33, %s49
      %p51 = scmp.eq.s32.totalorder %s25, 0
      %p52 = por %p50, %p51
      %s54 = sadd.s32 %s53, 1
      %p57 = scmp.eq.s32.totalorder %s19, 1
      %p58 = scmp.ne.s32.totalorder %s53, %s55
      %p59 = scmp.eq.s32.totalorder %s19, 0
      %p60 = por %p58, %p59
      %p61 = scmp.ne.s32.totalorder %s53, %s55
      %p62 = scmp.eq.s32.totalorder %s24, 1
      %p63 = por %p61, %p62
      %p64 = scmp.ne.s32.totalorder %s55, %s56
      %p65 = scmp.eq.s32.totalorder %s24, 0
      %p66 = por %p64, %p65
      %p67 = scmp.ne.s32.totalorder %s55, %s56
      %p68 = scmp.eq.s32.totalorder %s25, 1
      %p69 = por %p67, %p68
      %p71 = scmp.ne.s32.totalorder %s56, %s70
      %p72 = scmp.eq.s32.totalorder %s25, 0
      %p73 = por %p71, %p72
      %s75 = sadd.s32 %s74, 1
      %p78 = scmp.eq.s32.totalorder %s19, 1
      %p79 = scmp.ne.s32.totalorder %s74, %s76
      %p80 = scmp.eq.s32.totalorder %s19, 0
      %p81 = por %p79, %p80
      %p82 = scmp.ne.s32.totalorder %s74, %s76
      %p83 = scmp.eq.s32.totalorder %s24, 1
      %p84 = por %p82, %p83
      %p85 = scmp.ne.s32.totalorder %s76, %s77
      %p86 = scmp.eq.s32.totalorder %s24, 0
      %p87 = por %p85, %p86
      %p88 = scmp.ne.s32.totalorder %s76, %s77
      %p89 = scmp.eq.s32.totalorder %s25, 1
      %p90 = por %p88, %p89
      %p92 = scmp.ne.s32.totalorder %s77, %s91
      %p93 = scmp.eq.s32.totalorder %s25, 0
      %p94 = por %p92, %p93
      %s96 = sadd.s32 %s95, 1
      %p99 = scmp.eq.s32.totalorder %s19, 1
      %p100 = scmp.ne.s32.totalorder %s95, %s97
      %p101 = scmp.eq.s32.totalorder %s19, 0
      %p102 = por %p100, %p101
      %p103 = scmp.ne.s32.totalorder %s95, %s97
      %p104 = scmp.eq.s32.totalorder %s24, 1
      %p105 = por %p103, %p104
      %p106 = scmp.ne.s32.totalorder %s97, %s98
      %p107 = scmp.eq.s32.totalorder %s24, 0
      %p108 = por %p106, %p107
      %p109 = scmp.ne.s32.totalorder %s97, %s98
      %p110 = scmp.eq.s32.totalorder %s25, 1
      %p111 = por %p109, %p110
      %p113 = scmp.ne.s32.totalorder %s98, %s112
      %p114 = scmp.eq.s32.totalorder %s25, 0
      %p115 = por %p113, %p114
      %s117 = sadd.s32 %s116, 1
      %p120 = scmp.eq.s32.totalorder %s19, 1
      %p121 = scmp.ne.s32.totalorder %s116, %s118
      %p122 = scmp.eq.s32.totalorder %s19, 0
      %p123 = por %p121, %p122
      %p124 = scmp.ne.s32.totalorder %s116, %s118
      %p125 = scmp.eq.s32.totalorder %s24, 1
      %p126 = por %p124, %p125
      %p127 = scmp.ne.s32.totalorder %s118, %s119
      %p128 = scmp.eq.s32.totalorder %s24, 0
      %p129 = por %p127, %p128
      %p130 = scmp.ne.s32.totalorder %s118, %s119
      %p131 = scmp.eq.s32.totalorder %s25, 1
      %p132 = por %p130, %p131
      %p134 = scmp.ne.s32.totalorder %s119, %s133
      %p135 = scmp.eq.s32.totalorder %s25, 0
      %p136 = por %p134, %p135
      %s138 = sadd.s32 %s137, 1
      %p141 = scmp.eq.s32.totalorder %s19, 1
      %p142 = scmp.ne.s32.totalorder %s137, %s139
      %p143 = scmp.eq.s32.totalorder %s19, 0
      %p144 = por %p142, %p143
      %p145 = scmp.ne.s32.totalorder %s137, %s139
      %p146 = scmp.eq.s32.totalorder %s24, 1
      %p147 = por %p145, %p146
      %p148 = scmp.ne.s32.totalorder %s139, %s140
      %p149 = scmp.eq.s32.totalorder %s24, 0
      %p150 = por %p148, %p149
      %p151 = scmp.ne.s32.totalorder %s139, %s140
      %p152 = scmp.eq.s32.totalorder %s25, 1
      %p153 = por %p151, %p152
      %p155 = scmp.ne.s32.totalorder %s140, %s154
      %p156 = scmp.eq.s32.totalorder %s25, 0
      %p157 = por %p155, %p156
      %s159 = sadd.s32 %s158, 1
      %p162 = scmp.eq.s32.totalorder %s19, 1
      %p163 = scmp.ne.s32.totalorder %s158, %s160
      %p164 = scmp.eq.s32.totalorder %s19, 0
      %p165 = por %p163, %p164
      %p166 = scmp.ne.s32.totalorder %s158, %s160
      %p167 = scmp.eq.s32.totalorder %s24, 1
      %p168 = por %p166, %p167
      %p169 = scmp.ne.s32.totalorder %s160, %s161
      %p170 = scmp.eq.s32.totalorder %s24, 0
      %p171 = por %p169, %p170
      %p172 = scmp.ne.s32.totalorder %s160, %s161
      %p173 = scmp.eq.s32.totalorder %s25, 1
      %p174 = por %p172, %p173
      %p176 = scmp.ne.s32.totalorder %s161, %s175
      %p177 = scmp.eq.s32.totalorder %s25, 0
      %p178 = por %p176, %p177
      %s179 = ssub.s32 %s19, %s26
      %p180 = scmp.eq.s32.totalorder %s179, 0
      %s182 = sadd.s32 %s181, 1
      %s183 = scalar_select %p180, %s181, %s182
      %p186 = pneg %p180
      %p187 = scmp.eq.s32.totalorder %s19, 1
      %p188 = por %p186, %p187
      %p189 = scmp.ne.s32.totalorder %s181, %s184
      %p190 = scmp.eq.s32.totalorder %s19, 0
      %p191 = por %p189, %p190
      %p192 = scmp.ne.s32.totalorder %s181, %s184
      %p193 = scmp.eq.s32.totalorder %s24, 1
      %p194 = por %p192, %p193
      %p195 = scmp.ne.s32.totalorder %s184, %s185
      %p196 = scmp.eq.s32.totalorder %s24, 0
      %p197 = por %p195, %p196
      %p198 = scmp.ne.s32.totalorder %s184, %s185
      %p199 = scmp.eq.s32.totalorder %s25, 1
      %p200 = por %p198, %p199
      %p202 = scmp.ne.s32.totalorder %s185, %s201
      %p203 = scmp.eq.s32.totalorder %s25, 0
      %p204 = por %p202, %p203
      %p205 = scmp.le.s32.totalorder 1, %s19
      %p206 = scmp.lt.s32.totalorder %s19, 3
      %p207 = pnand %p205, %p206
      %p208 = pneg %p207
      // Predicated region
      $region9: #{tpu_custom_call.1} parent=5 // pred_check
        _
      $region10: #{tpu_custom_call.1} parent=5 // pred_check_branch
        %210 = sbr.rel (%p207) target = $region12
      $region11: #{tpu_custom_call.1} parent=5 // pred_region
        %s211 = ssub.s32 %s19, 1
        // Predicated region
        $region13: #{tpu_custom_call.1} parent=11 // pred_check
          %p212 = pneg %p66
        $region14: #{tpu_custom_call.1} parent=11 // pred_check_branch
          %214 = sbr.rel (%p212) target = $region16
        $region15: #{tpu_custom_call.1} parent=11 // pred_region
          _
        $region16: #{tpu_custom_call.1} parent=11 // pred_fallthru
          _
        // Predicated region
        $region17: #{tpu_custom_call.1} parent=11 // pred_check
          %p215 = pneg %p87
        $region18: #{tpu_custom_call.1} parent=11 // pred_check_branch
          %217 = sbr.rel (%p215) target = $region20
        $region19: #{tpu_custom_call.1} parent=11 // pred_region
          _
        $region20: #{tpu_custom_call.1} parent=11 // pred_fallthru
          _
        // Predicated region
        $region21: #{tpu_custom_call.1} parent=11 // pred_check
          %p218 = pneg %p108
        $region22: #{tpu_custom_call.1} parent=11 // pred_check_branch
          %220 = sbr.rel (%p218) target = $region24
        $region23: #{tpu_custom_call.1} parent=11 // pred_region
          _
        $region24: #{tpu_custom_call.1} parent=11 // pred_fallthru
          _
        // Predicated region
        $region25: #{tpu_custom_call.1} parent=11 // pred_check
          %p221 = pneg %p129
        $region26: #{tpu_custom_call.1} parent=11 // pred_check_branch
          %223 = sbr.rel (%p221) target = $region28
        $region27: #{tpu_custom_call.1} parent=11 // pred_region
          _
        $region28: #{tpu_custom_call.1} parent=11 // pred_fallthru
          _
        // Predicated region
        $region29: #{tpu_custom_call.1} parent=11 // pred_check
          %p224 = pneg %p150
        $region30: #{tpu_custom_call.1} parent=11 // pred_check_branch
          %226 = sbr.rel (%p224) target = $region32
        $region31: #{tpu_custom_call.1} parent=11 // pred_region
          _
        $region32: #{tpu_custom_call.1} parent=11 // pred_fallthru
          _
        // Predicated region
        $region33: #{tpu_custom_call.1} parent=11 // pred_check
          %p227 = pneg %p171
        $region34: #{tpu_custom_call.1} parent=11 // pred_check_branch
          %229 = sbr.rel (%p227) target = $region36
        $region35: #{tpu_custom_call.1} parent=11 // pred_region
          _
        $region36: #{tpu_custom_call.1} parent=11 // pred_fallthru
          _
      $region12: #{tpu_custom_call.1} parent=5 // pred_fallthru
        _
      %p230 = scmp.lt.s32.totalorder %s19, 2
      // Predicated region
      $region37: #{tpu_custom_call.1} parent=5 // pred_check
        %p231 = pneg %p230
      $region38: #{tpu_custom_call.1} parent=5 // pred_check_branch
        %233 = sbr.rel (%p231) target = $region40
      $region39: #{tpu_custom_call.1} parent=5 // pred_region
        // Predicated region
        $region41: #{tpu_custom_call.1} parent=39 // pred_check
          %p234 = pneg %p39
        $region42: #{tpu_custom_call.1} parent=39 // pred_check_branch
          %236 = sbr.rel (%p234) target = $region44
        $region43: #{tpu_custom_call.1} parent=39 // pred_region
          %s237 = sand.u32 %s29, 1
          %s238 = scalar_lea.sflag [#allocation4], %s237
          %s239 = sand.u32 %s29, 1
          %s240 = smul.addr %s239, 256
          %s241 = scalar_lea.vmem [#allocation3], %s240
          %243 = vsyncadd %s238, 0
          %s244 = smul.addr %s19, 32
          %s245 = smul.addr %s244, 8
          %s246 = scalar_lea.hbm %s0, %s245
          %s247 = sshll.u32 %s246, 4
          %s248 = int_to_ptr.hbm [resolvable:$true] %s247
          %s249 = sshll.u32 %s241, 4
          %s250 = int_to_ptr.vmem [resolvable:$true] %s249
          %255 = dma.hbm_to_vmem [thread:$0]  %s248, 4096, %s250, %s238, 128, 128, 8
        $region44: #{tpu_custom_call.1} parent=39 // pred_fallthru
          _
      $region40: #{tpu_custom_call.1} parent=5 // pred_fallthru
        _
      %p256 = scmp.le.s32.totalorder 1, %s19
      %p257 = scmp.lt.s32.totalorder %s19, 3
      %p258 = pnand %p256, %p257
      %p259 = pneg %p258
      // Predicated region
      $region45: #{tpu_custom_call.1} parent=5 // pred_check
        _
      $region46: #{tpu_custom_call.1} parent=5 // pred_check_branch
        %261 = sbr.rel (%p258) target = $region48
      $region47: #{tpu_custom_call.1} parent=5 // pred_region
        %s262 = ssub.s32 %s19, 1
        %s263 = sand.u32 %s32, 1
        %s264 = scalar_lea.sflag [#allocation4], %s263
        %s265 = sand.u32 %s32, 1
        %s266 = smul.addr %s265, 256
        %s267 = scalar_lea.vmem [#allocation3], %s266
        // Predicated region
        $region49: #{tpu_custom_call.1} parent=47 // pred_check
          %p268 = pneg %p45
        $region50: #{tpu_custom_call.1} parent=47 // pred_check_branch
          %270 = sbr.rel (%p268) target = $region52
        $region51: #{tpu_custom_call.1} parent=47 // pred_region
          %272 = dma.done %s264, 4096
        $region52: #{tpu_custom_call.1} parent=47 // pred_fallthru
          _
        %s273 = sand.u32 %s32, 1
        %s274 = scalar_lea.sflag [#allocation4], %s273
        %s275 = sand.u32 %s32, 1
        %s276 = smul.addr %s275, 256
        %s277 = scalar_lea.vmem [#allocation3], %s276
        %p278 = pneg %p45
        %p279 = pneg %p42
        %p280 = pneg %p66
        %p281 = pneg %p63
        %p282 = pneg %p87
        %p283 = pneg %p84
        %p284 = pneg %p108
        %p285 = pneg %p105
        %p286 = pneg %p129
        %p287 = pneg %p126
        %p288 = pneg %p150
        %p289 = pneg %p147
        %p290 = pneg %p171
        %p291 = pneg %p168
        %p292 = pneg %p197
        %p293 = pneg %p194
        %s294 = sand.u32 %s184, 1
        %s295 = scalar_lea.sflag [#allocation5], %s294
        %s296 = sand.u32 %s184, 1
        %s297 = smul.addr %s296, 256
        %s298 = scalar_lea.vmem [#allocation6], %s297
        %v300 = vld [vmem:[%s267] sm:$0xff]
        %v301 = vld [vmem:[%s267 + $0x8] sm:$0xff]
        %v302 = vld [vmem:[%s267 + $0x10] sm:$0xff]
        %v303 = vld [vmem:[%s267 + $0x18] sm:$0xff]
        %v304 = vld [vmem:[%s267 + $0x20] sm:$0xff]
        %v305 = vld [vmem:[%s267 + $0x28] sm:$0xff]
        %v306 = vld [vmem:[%s267 + $0x30] sm:$0xff]
        %v307 = vld [vmem:[%s267 + $0x38] sm:$0xff]
        %v308 = vld [vmem:[%s267 + $0x40] sm:$0xff]
        %v309 = vld [vmem:[%s267 + $0x48] sm:$0xff]
        %v310 = vld [vmem:[%s267 + $0x50] sm:$0xff]
        %v311 = vld [vmem:[%s267 + $0x58] sm:$0xff]
        %v312 = vld [vmem:[%s267 + $0x60] sm:$0xff]
        %v313 = vld [vmem:[%s267 + $0x68] sm:$0xff]
        %v314 = vld [vmem:[%s267 + $0x70] sm:$0xff]
        %v315 = vld [vmem:[%s267 + $0x78] sm:$0xff]
        %v316 = vld [vmem:[%s267 + $0x80] sm:$0xff]
        %v317 = vld [vmem:[%s267 + $0x88] sm:$0xff]
        %v318 = vld [vmem:[%s267 + $0x90] sm:$0xff]
        %v319 = vld [vmem:[%s267 + $0x98] sm:$0xff]
        %v320 = vld [vmem:[%s267 + $0xa0] sm:$0xff]
        %v321 = vld [vmem:[%s267 + $0xa8] sm:$0xff]
        %v322 = vld [vmem:[%s267 + $0xb0] sm:$0xff]
        %v323 = vld [vmem:[%s267 + $0xb8] sm:$0xff]
        %v324 = vld [vmem:[%s267 + $0xc0] sm:$0xff]
        %v325 = vld [vmem:[%s267 + $0xc8] sm:$0xff]
        %v326 = vld [vmem:[%s267 + $0xd0] sm:$0xff]
        %v327 = vld [vmem:[%s267 + $0xd8] sm:$0xff]
        %v328 = vld [vmem:[%s267 + $0xe0] sm:$0xff]
        %v329 = vld [vmem:[%s267 + $0xe8] sm:$0xff]
        %v330 = vld [vmem:[%s267 + $0xf0] sm:$0xff]
        %v331 = vld [vmem:[%s267 + $0xf8] sm:$0xff]
        %v332 = vpack.c.bf16 %v301, %v300
        %v333 = vpack.c.bf16 %v303, %v302
        %v334 = vpack.c.bf16 %v305, %v304
        %v335 = vpack.c.bf16 %v307, %v306
        %v336 = vpack.c.bf16 %v309, %v308
        %v337 = vpack.c.bf16 %v311, %v310
        %v338 = vpack.c.bf16 %v313, %v312
        %v339 = vpack.c.bf16 %v315, %v314
        %v340 = vpack.c.bf16 %v317, %v316
        %v341 = vpack.c.bf16 %v319, %v318
        %v342 = vpack.c.bf16 %v321, %v320
        %v343 = vpack.c.bf16 %v323, %v322
        %v344 = vpack.c.bf16 %v325, %v324
        %v345 = vpack.c.bf16 %v327, %v326
        %v346 = vpack.c.bf16 %v329, %v328
        %v347 = vpack.c.bf16 %v331, %v330
        %v348 = vld [vmem:[%s1] sm:$0xf]
        %v349 = vld [vmem:[%s1 + $0x4] sm:$0xf]
        %v350 = vld [vmem:[%s2] sm:$0x1]
        %v352 = vperm.slane %v350, 0
        %v356 = vunpack.c.l.b16 %v348
        %v357 = vunpack.c.l.b16 %v349
        %v358 = vpack.c.b16 %v357, %v356
        %vm360 = vcmask 130048
        %v362 = vsel %vm360, %v332, 0
        %v365 = vsel %vm360, %v333, 0
        %v368 = vsel %vm360, %v334, 0
        %v371 = vsel %vm360, %v335, 0
        %v374 = vsel %vm360, %v336, 0
        %v377 = vsel %vm360, %v337, 0
        %v380 = vsel %vm360, %v338, 0
        %v383 = vsel %vm360, %v339, 0
        %v386 = vsel %vm360, %v340, 0
        %v389 = vsel %vm360, %v341, 0
        %v392 = vsel %vm360, %v342, 0
        %v395 = vsel %vm360, %v343, 0
        %v398 = vsel %vm360, %v344, 0
        %v401 = vsel %vm360, %v345, 0
        %v404 = vsel %vm360, %v346, 0
        %v407 = vsel %vm360, %v347, 0
        %409 = vmatpush.bf16.msra.mxu0 0
        %410 = vmatpush.bf16.msra.mxu0 0
        %411 = vmatpush.bf16.msra.mxu0 0
        %412 = vmatpush.bf16.msra.mxu0 0
        %413 = vmatpush.bf16.msra.mxu0 0
        %414 = vmatpush.bf16.msra.mxu0 0
        %415 = vmatpush.bf16.msra.mxu0 0
        %416 = vmatpush.bf16.msra.mxu0 %v358
        %417 = vmatmul.bf16.gmra.mxu0 %v362
        %v418 = vpop.f32.mrf.mxu0
        %v419 = vadd.f32 %v352, %v418
        %v420 = vpop.f32.mrf.mxu0
        %v421 = vadd.f32 %v352, %v420
        %422 = vmatmul.bf16.gmra.mxu0 %v365
        %v423 = vpop.f32.mrf.mxu0
        %v424 = vadd.f32 %v352, %v423
        %v425 = vpop.f32.mrf.mxu0
        %v426 = vadd.f32 %v352, %v425
        %427 = vmatmul.bf16.gmra.mxu0 %v368
        %v428 = vpop.f32.mrf.mxu0
        %v429 = vadd.f32 %v352, %v428
        %v430 = vpop.f32.mrf.mxu0
        %v431 = vadd.f32 %v352, %v430
        %432 = vmatmul.bf16.gmra.mxu0 %v371
        %v433 = vpop.f32.mrf.mxu0
        %v434 = vadd.f32 %v352, %v433
        %v435 = vpop.f32.mrf.mxu0
        %v436 = vadd.f32 %v352, %v435
        %437 = vmatmul.bf16.gmra.mxu0 %v374
        %v438 = vpop.f32.mrf.mxu0
        %v439 = vadd.f32 %v352, %v438
        %v440 = vpop.f32.mrf.mxu0
        %v441 = vadd.f32 %v352, %v440
        %442 = vmatmul.bf16.gmra.mxu0 %v377
        %v443 = vpop.f32.mrf.mxu0
        %v444 = vadd.f32 %v352, %v443
        %v445 = vpop.f32.mrf.mxu0
        %v446 = vadd.f32 %v352, %v445
        %447 = vmatmul.bf16.gmra.mxu0 %v380
        %v448 = vpop.f32.mrf.mxu0
        %v449 = vadd.f32 %v352, %v448
        %v450 = vpop.f32.mrf.mxu0
        %v451 = vadd.f32 %v352, %v450
        %452 = vmatmul.bf16.gmra.mxu0 %v383
        %v453 = vpop.f32.mrf.mxu0
        %v454 = vadd.f32 %v352, %v453
        %v455 = vpop.f32.mrf.mxu0
        %v456 = vadd.f32 %v352, %v455
        %457 = vmatmul.bf16.gmra.mxu0 %v386
        %v458 = vpop.f32.mrf.mxu0
        %v459 = vadd.f32 %v352, %v458
        %v460 = vpop.f32.mrf.mxu0
        %v461 = vadd.f32 %v352, %v460
        %462 = vmatmul.bf16.gmra.mxu0 %v389
        %v463 = vpop.f32.mrf.mxu0
        %v464 = vadd.f32 %v352, %v463
        %v465 = vpop.f32.mrf.mxu0
        %v466 = vadd.f32 %v352, %v465
        %467 = vmatmul.bf16.gmra.mxu0 %v392
        %v468 = vpop.f32.mrf.mxu0
        %v469 = vadd.f32 %v352, %v468
        %v470 = vpop.f32.mrf.mxu0
        %v471 = vadd.f32 %v352, %v470
        %472 = vmatmul.bf16.gmra.mxu0 %v395
        %v473 = vpop.f32.mrf.mxu0
        %v474 = vadd.f32 %v352, %v473
        %v475 = vpop.f32.mrf.mxu0
        %v476 = vadd.f32 %v352, %v475
        %477 = vmatmul.bf16.gmra.mxu0 %v398
        %v478 = vpop.f32.mrf.mxu0
        %v479 = vadd.f32 %v352, %v478
        %v480 = vpop.f32.mrf.mxu0
        %v481 = vadd.f32 %v352, %v480
        %482 = vmatmul.bf16.gmra.mxu0 %v401
        %v483 = vpop.f32.mrf.mxu0
        %v484 = vadd.f32 %v352, %v483
        %v485 = vpop.f32.mrf.mxu0
        %v486 = vadd.f32 %v352, %v485
        %487 = vmatmul.bf16.gmra.mxu0 %v404
        %v488 = vpop.f32.mrf.mxu0
        %v489 = vadd.f32 %v352, %v488
        %v490 = vpop.f32.mrf.mxu0
        %v491 = vadd.f32 %v352, %v490
        %492 = vmatmul.bf16.gmra.mxu0 %v407
        %v493 = vpop.f32.mrf.mxu0
        %v494 = vadd.f32 %v352, %v493
        %v495 = vpop.f32.mrf.mxu0
        %v496 = vadd.f32 %v352, %v495
        %497 = vdwg.mxu0
        %v498 = vmul.f32 %v419, 0.5
        %v499 = vmul.f32 %v421, 0.5
        %v500 = vmul.f32 %v424, 0.5
        %v501 = vmul.f32 %v426, 0.5
        %v502 = vmul.f32 %v429, 0.5
        %v503 = vmul.f32 %v431, 0.5
        %v504 = vmul.f32 %v434, 0.5
        %v505 = vmul.f32 %v436, 0.5
        %v506 = vmul.f32 %v439, 0.5
        %v507 = vmul.f32 %v441, 0.5
        %v508 = vmul.f32 %v444, 0.5
        %v509 = vmul.f32 %v446, 0.5
        %v510 = vmul.f32 %v449, 0.5
        %v511 = vmul.f32 %v451, 0.5
        %v512 = vmul.f32 %v454, 0.5
        %v513 = vmul.f32 %v456, 0.5
        %v514 = vmul.f32 %v459, 0.5
        %v515 = vmul.f32 %v461, 0.5
        %v516 = vmul.f32 %v464, 0.5
        %v517 = vmul.f32 %v466, 0.5
        %v518 = vmul.f32 %v469, 0.5
        %v519 = vmul.f32 %v471, 0.5
        %v520 = vmul.f32 %v474, 0.5
        %v521 = vmul.f32 %v476, 0.5
        %v522 = vmul.f32 %v479, 0.5
        %v523 = vmul.f32 %v481, 0.5
        %v524 = vmul.f32 %v484, 0.5
        %v525 = vmul.f32 %v486, 0.5
        %v526 = vmul.f32 %v489, 0.5
        %v527 = vmul.f32 %v491, 0.5
        %v528 = vmul.f32 %v494, 0.5
        %v529 = vmul.f32 %v496, 0.5
        %v530 = vtanh.pop %v498
        %v531 = vtanh.pop %v499
        %v532 = vtanh.pop %v500
        %v533 = vtanh.pop %v501
        %v534 = vtanh.pop %v502
        %v535 = vtanh.pop %v503
        %v536 = vtanh.pop %v504
        %v537 = vtanh.pop %v505
        %v538 = vtanh.pop %v506
        %v539 = vtanh.pop %v507
        %v540 = vtanh.pop %v508
        %v541 = vtanh.pop %v509
        %v542 = vtanh.pop %v510
        %v543 = vtanh.pop %v511
        %v544 = vtanh.pop %v512
        %v545 = vtanh.pop %v513
        %v546 = vtanh.pop %v514
        %v547 = vtanh.pop %v515
        %v548 = vtanh.pop %v516
        %v549 = vtanh.pop %v517
        %v550 = vtanh.pop %v518
        %v551 = vtanh.pop %v519
        %v552 = vtanh.pop %v520
        %v553 = vtanh.pop %v521
        %v554 = vtanh.pop %v522
        %v555 = vtanh.pop %v523
        %v556 = vtanh.pop %v524
        %v557 = vtanh.pop %v525
        %v558 = vtanh.pop %v526
        %v559 = vtanh.pop %v527
        %v560 = vtanh.pop %v528
        %v561 = vtanh.pop %v529
        %v562 = vmul.f32 %v530, 0.5
        %v563 = vmul.f32 %v531, 0.5
        %v564 = vmul.f32 %v532, 0.5
        %v565 = vmul.f32 %v533, 0.5
        %v566 = vmul.f32 %v534, 0.5
        %v567 = vmul.f32 %v535, 0.5
        %v568 = vmul.f32 %v536, 0.5
        %v569 = vmul.f32 %v537, 0.5
        %v570 = vmul.f32 %v538, 0.5
        %v571 = vmul.f32 %v539, 0.5
        %v572 = vmul.f32 %v540, 0.5
        %v573 = vmul.f32 %v541, 0.5
        %v574 = vmul.f32 %v542, 0.5
        %v575 = vmul.f32 %v543, 0.5
        %v576 = vmul.f32 %v544, 0.5
        %v577 = vmul.f32 %v545, 0.5
        %v578 = vmul.f32 %v546, 0.5
        %v579 = vmul.f32 %v547, 0.5
        %v580 = vmul.f32 %v548, 0.5
        %v581 = vmul.f32 %v549, 0.5
        %v582 = vmul.f32 %v550, 0.5
        %v583 = vmul.f32 %v551, 0.5
        %v584 = vmul.f32 %v552, 0.5
        %v585 = vmul.f32 %v553, 0.5
        %v586 = vmul.f32 %v554, 0.5
        %v587 = vmul.f32 %v555, 0.5
        %v588 = vmul.f32 %v556, 0.5
        %v589 = vmul.f32 %v557, 0.5
        %v590 = vmul.f32 %v558, 0.5
        %v591 = vmul.f32 %v559, 0.5
        %v592 = vmul.f32 %v560, 0.5
        %v593 = vmul.f32 %v561, 0.5
        %v594 = vadd.f32 %v562, 0.5
        %v595 = vadd.f32 %v563, 0.5
        %v596 = vadd.f32 %v564, 0.5
        %v597 = vadd.f32 %v565, 0.5
        %v598 = vadd.f32 %v566, 0.5
        %v599 = vadd.f32 %v567, 0.5
        %v600 = vadd.f32 %v568, 0.5
        %v601 = vadd.f32 %v569, 0.5
        %v602 = vadd.f32 %v570, 0.5
        %v603 = vadd.f32 %v571, 0.5
        %v604 = vadd.f32 %v572, 0.5
        %v605 = vadd.f32 %v573, 0.5
        %v606 = vadd.f32 %v574, 0.5
        %v607 = vadd.f32 %v575, 0.5
        %v608 = vadd.f32 %v576, 0.5
        %v609 = vadd.f32 %v577, 0.5
        %v610 = vadd.f32 %v578, 0.5
        %v611 = vadd.f32 %v579, 0.5
        %v612 = vadd.f32 %v580, 0.5
        %v613 = vadd.f32 %v581, 0.5
        %v614 = vadd.f32 %v582, 0.5
        %v615 = vadd.f32 %v583, 0.5
        %v616 = vadd.f32 %v584, 0.5
        %v617 = vadd.f32 %v585, 0.5
        %v618 = vadd.f32 %v586, 0.5
        %v619 = vadd.f32 %v587, 0.5
        %v620 = vadd.f32 %v588, 0.5
        %v621 = vadd.f32 %v589, 0.5
        %v622 = vadd.f32 %v590, 0.5
        %v623 = vadd.f32 %v591, 0.5
        %v624 = vadd.f32 %v592, 0.5
        %v625 = vadd.f32 %v593, 0.5
        %v626 = vmul.f32 %v419, %v594
        %v627 = vmul.f32 %v421, %v595
        %v628 = vmul.f32 %v424, %v596
        %v629 = vmul.f32 %v426, %v597
        %v630 = vmul.f32 %v429, %v598
        %v631 = vmul.f32 %v431, %v599
        %v632 = vmul.f32 %v434, %v600
        %v633 = vmul.f32 %v436, %v601
        %v634 = vmul.f32 %v439, %v602
        %v635 = vmul.f32 %v441, %v603
        %v636 = vmul.f32 %v444, %v604
        %v637 = vmul.f32 %v446, %v605
        %v638 = vmul.f32 %v449, %v606
        %v639 = vmul.f32 %v451, %v607
        %v640 = vmul.f32 %v454, %v608
        %v641 = vmul.f32 %v456, %v609
        %v642 = vmul.f32 %v459, %v610
        %v643 = vmul.f32 %v461, %v611
        %v644 = vmul.f32 %v464, %v612
        %v645 = vmul.f32 %v466, %v613
        %v646 = vmul.f32 %v469, %v614
        %v647 = vmul.f32 %v471, %v615
        %v648 = vmul.f32 %v474, %v616
        %v649 = vmul.f32 %v476, %v617
        %v650 = vmul.f32 %v479, %v618
        %v651 = vmul.f32 %v481, %v619
        %v652 = vmul.f32 %v484, %v620
        %v653 = vmul.f32 %v486, %v621
        %v654 = vmul.f32 %v489, %v622
        %v655 = vmul.f32 %v491, %v623
        %v656 = vmul.f32 %v494, %v624
        %v657 = vmul.f32 %v496, %v625
        %vm658 = vcmask 27648
        %659 = vst.msk [vmem:[#allocation2] sm:$0xf] %vm658, 0
        %660 = vst.msk [vmem:[#allocation2 + $0x4] sm:$0xf] %vm658, 0
        %vm661 = vcmask 24576
        %662 = vst.msk [vmem:[#allocation2 + $0x8] sm:$0x1] %vm661, 0
        %s663 = scalar_lea.vmem [#allocation2], 204
        %664 = vst.msk [vmem:[%s663] sm:$0xf] %vm658, 0
        %665 = vst.msk [vmem:[%s663 + $0x4] sm:$0xf] %vm658, 0
        %666 = vst.msk [vmem:[%s663 + $0x8] sm:$0x1] %vm661, 0
        %vm667 = vcmask 24576
        %vm668 = vsmask.f32 256
        %vm669 = vmand %vm667, %vm668
        %v670 = vld [vmem:[#allocation2] sm:$0x1]
        %v671 = vsel %vm669, 0, %v670
        %672 = vst [vmem:[#allocation2] sm:$0x1] %v671
        %v673 = vld [vmem:[#allocation2 + $0xc] sm:$0x1]
        %v674 = vsel %vm669, 0, %v673
        %675 = vst [vmem:[#allocation2 + $0xc] sm:$0x1] %v674
        %v676 = vld [vmem:[#allocation2 + $0x18] sm:$0x1]
        %v677 = vsel %vm669, 0, %v676
        %678 = vst [vmem:[#allocation2 + $0x18] sm:$0x1] %v677
        %v679 = vld [vmem:[#allocation2 + $0x24] sm:$0x1]
        %v680 = vsel %vm669, 0, %v679
        %681 = vst [vmem:[#allocation2 + $0x24] sm:$0x1] %v680
        %v682 = vld [vmem:[#allocation2 + $0x30] sm:$0x1]
        %v683 = vsel %vm669, 0, %v682
        %684 = vst [vmem:[#allocation2 + $0x30] sm:$0x1] %v683
        %v685 = vld [vmem:[#allocation2 + $0x3c] sm:$0x1]
        %v686 = vsel %vm669, 0, %v685
        %687 = vst [vmem:[#allocation2 + $0x3c] sm:$0x1] %v686
        %v688 = vld [vmem:[#allocation2 + $0x48] sm:$0x1]
        %v689 = vsel %vm669, 0, %v688
        %690 = vst [vmem:[#allocation2 + $0x48] sm:$0x1] %v689
        %v691 = vld [vmem:[#allocation2 + $0x54] sm:$0x1]
        %v692 = vsel %vm669, 0, %v691
        %693 = vst [vmem:[#allocation2 + $0x54] sm:$0x1] %v692
        %v694 = vld [vmem:[#allocation2 + $0x60] sm:$0x1]
        %v695 = vsel %vm669, 0, %v694
        %696 = vst [vmem:[#allocation2 + $0x60] sm:$0x1] %v695
        %v697 = vld [vmem:[#allocation2 + $0x6c] sm:$0x1]
        %v698 = vsel %vm669, 0, %v697
        %699 = vst [vmem:[#allocation2 + $0x6c] sm:$0x1] %v698
        %v700 = vld [vmem:[#allocation2 + $0x78] sm:$0x1]
        %v701 = vsel %vm669, 0, %v700
        %702 = vst [vmem:[#allocation2 + $0x78] sm:$0x1] %v701
        %v703 = vld [vmem:[#allocation2 + $0x84] sm:$0x1]
        %v704 = vsel %vm669, 0, %v703
        %705 = vst [vmem:[#allocation2 + $0x84] sm:$0x1] %v704
        %v706 = vld [vmem:[#allocation2 + $0x90] sm:$0x1]
        %v707 = vsel %vm669, 0, %v706
        %708 = vst [vmem:[#allocation2 + $0x90] sm:$0x1] %v707
        %v709 = vld [vmem:[#allocation2 + $0x9c] sm:$0x1]
        %v710 = vsel %vm669, 0, %v709
        %711 = vst [vmem:[#allocation2 + $0x9c] sm:$0x1] %v710
        %v712 = vld [vmem:[#allocation2 + $0xa8] sm:$0x1]
        %v713 = vsel %vm669, 0, %v712
        %714 = vst [vmem:[#allocation2 + $0xa8] sm:$0x1] %v713
        %v715 = vld [vmem:[#allocation2 + $0xb4] sm:$0x1]
        %v716 = vsel %vm669, 0, %v715
        %717 = vst [vmem:[#allocation2 + $0xb4] sm:$0x1] %v716
        %v718 = vld [vmem:[#allocation2 + $0xc0] sm:$0x1]
        %v719 = vsel %vm669, 0, %v718
        %720 = vst [vmem:[#allocation2 + $0xc0] sm:$0x1] %v719
        %v721 = vld [vmem:[#allocation2 + $0xcc] sm:$0x1]
        %v722 = vsel %vm669, 0, %v721
        %723 = vst [vmem:[#allocation2 + $0xcc] sm:$0x1] %v722
        %vm724 = vsmask.f32 7938
        %vm725 = vmand %vm667, %vm724
        %v726 = vld [vmem:[#allocation2 + $0x8] sm:$0x1]
        %v727 = vsel %vm725, 0, %v726
        %728 = vst [vmem:[#allocation2 + $0x8] sm:$0x1] %v727
        %v729 = vld [vmem:[#allocation2 + $0x14] sm:$0x1]
        %v730 = vsel %vm725, 0, %v729
        %731 = vst [vmem:[#allocation2 + $0x14] sm:$0x1] %v730
        %v732 = vld [vmem:[#allocation2 + $0x20] sm:$0x1]
        %v733 = vsel %vm725, 0, %v732
        %734 = vst [vmem:[#allocation2 + $0x20] sm:$0x1] %v733
        %v735 = vld [vmem:[#allocation2 + $0x2c] sm:$0x1]
        %v736 = vsel %vm725, 0, %v735
        %737 = vst [vmem:[#allocation2 + $0x2c] sm:$0x1] %v736
        %v738 = vld [vmem:[#allocation2 + $0x38] sm:$0x1]
        %v739 = vsel %vm725, 0, %v738
        %740 = vst [vmem:[#allocation2 + $0x38] sm:$0x1] %v739
        %v741 = vld [vmem:[#allocation2 + $0x44] sm:$0x1]
        %v742 = vsel %vm725, 0, %v741
        %743 = vst [vmem:[#allocation2 + $0x44] sm:$0x1] %v742
        %v744 = vld [vmem:[#allocation2 + $0x50] sm:$0x1]
        %v745 = vsel %vm725, 0, %v744
        %746 = vst [vmem:[#allocation2 + $0x50] sm:$0x1] %v745
        %v747 = vld [vmem:[#allocation2 + $0x5c] sm:$0x1]
        %v748 = vsel %vm725, 0, %v747
        %749 = vst [vmem:[#allocation2 + $0x5c] sm:$0x1] %v748
        %v750 = vld [vmem:[#allocation2 + $0x68] sm:$0x1]
        %v751 = vsel %vm725, 0, %v750
        %752 = vst [vmem:[#allocation2 + $0x68] sm:$0x1] %v751
        %v753 = vld [vmem:[#allocation2 + $0x74] sm:$0x1]
        %v754 = vsel %vm725, 0, %v753
        %755 = vst [vmem:[#allocation2 + $0x74] sm:$0x1] %v754
        %v756 = vld [vmem:[#allocation2 + $0x80] sm:$0x1]
        %v757 = vsel %vm725, 0, %v756
        %758 = vst [vmem:[#allocation2 + $0x80] sm:$0x1] %v757
        %v759 = vld [vmem:[#allocation2 + $0x8c] sm:$0x1]
        %v760 = vsel %vm725, 0, %v759
        %761 = vst [vmem:[#allocation2 + $0x8c] sm:$0x1] %v760
        %v762 = vld [vmem:[#allocation2 + $0x98] sm:$0x1]
        %v763 = vsel %vm725, 0, %v762
        %764 = vst [vmem:[#allocation2 + $0x98] sm:$0x1] %v763
        %v765 = vld [vmem:[#allocation2 + $0xa4] sm:$0x1]
        %v766 = vsel %vm725, 0, %v765
        %767 = vst [vmem:[#allocation2 + $0xa4] sm:$0x1] %v766
        %v768 = vld [vmem:[#allocation2 + $0xb0] sm:$0x1]
        %v769 = vsel %vm725, 0, %v768
        %770 = vst [vmem:[#allocation2 + $0xb0] sm:$0x1] %v769
        %v771 = vld [vmem:[#allocation2 + $0xbc] sm:$0x1]
        %v772 = vsel %vm725, 0, %v771
        %773 = vst [vmem:[#allocation2 + $0xbc] sm:$0x1] %v772
        %v774 = vld [vmem:[#allocation2 + $0xc8] sm:$0x1]
        %v775 = vsel %vm725, 0, %v774
        %776 = vst [vmem:[#allocation2 + $0xc8] sm:$0x1] %v775
        %v777 = vld [vmem:[#allocation2 + $0xd4] sm:$0x1]
        %v778 = vsel %vm725, 0, %v777
        %779 = vst [vmem:[#allocation2 + $0xd4] sm:$0x1] %v778
        %v780 = vpack.c.bf16 %v626, %v626
        %v781 = vpack.c.bf16 %v627, %v627
        %v782 = vpack.c.bf16 %v628, %v628
        %v783 = vpack.c.bf16 %v629, %v629
        %v784 = vpack.c.bf16 %v630, %v630
        %v785 = vpack.c.bf16 %v631, %v631
        %v786 = vpack.c.bf16 %v632, %v632
        %v787 = vpack.c.bf16 %v633, %v633
        %v788 = vpack.c.bf16 %v634, %v634
        %v789 = vpack.c.bf16 %v635, %v635
        %v790 = vpack.c.bf16 %v636, %v636
        %v791 = vpack.c.bf16 %v637, %v637
        %v792 = vpack.c.bf16 %v638, %v638
        %v793 = vpack.c.bf16 %v639, %v639
        %v794 = vpack.c.bf16 %v640, %v640
        %v795 = vpack.c.bf16 %v641, %v641
        %v796 = vpack.c.bf16 %v642, %v642
        %v797 = vpack.c.bf16 %v643, %v643
        %v798 = vpack.c.bf16 %v644, %v644
        %v799 = vpack.c.bf16 %v645, %v645
        %v800 = vpack.c.bf16 %v646, %v646
        %v801 = vpack.c.bf16 %v647, %v647
        %v802 = vpack.c.bf16 %v648, %v648
        %v803 = vpack.c.bf16 %v649, %v649
        %v804 = vpack.c.bf16 %v650, %v650
        %v805 = vpack.c.bf16 %v651, %v651
        %v806 = vpack.c.bf16 %v652, %v652
        %v807 = vpack.c.bf16 %v653, %v653
        %v808 = vpack.c.bf16 %v654, %v654
        %v809 = vpack.c.bf16 %v655, %v655
        %v810 = vpack.c.bf16 %v656, %v656
        %v811 = vpack.c.bf16 %v657, %v657
        %vm812 = vsmask.f32 4368
        %vm813 = vmor %vm668, %vm812
        %v815 = vshrl.u32 %v780, 16
        %v817 = vrot.slane %v815, 7
        %v818 = vshll.u32 %v780, 16
        %v820 = vor.u32 %v817, %v818
        %v821 = vrot.slane %v817, 4
        %v823 = vshrl.u32 %v781, 16
        %v825 = vrot.slane %v823, 7
        %v826 = vshll.u32 %v781, 16
        %v828 = vor.u32 %v825, %v826
        %v829 = vsel %vm813, %v821, %v828
        %v830 = vrot.slane %v825, 4
        %v832 = vshrl.u32 %v782, 16
        %v834 = vrot.slane %v832, 7
        %v835 = vshll.u32 %v782, 16
        %v837 = vor.u32 %v834, %v835
        %v838 = vrot.slane %v834, 4
        %v840 = vshrl.u32 %v783, 16
        %v842 = vrot.slane %v840, 7
        %v843 = vshll.u32 %v783, 16
        %v845 = vor.u32 %v842, %v843
        %v846 = vsel %vm813, %v838, %v845
        %v847 = vrot.slane %v842, 4
        %v849 = vshrl.u32 %v784, 16
        %v851 = vrot.slane %v849, 7
        %v852 = vshll.u32 %v784, 16
        %v854 = vor.u32 %v851, %v852
        %v855 = vrot.slane %v851, 4
        %v857 = vshrl.u32 %v785, 16
        %v859 = vrot.slane %v857, 7
        %v860 = vshll.u32 %v785, 16
        %v862 = vor.u32 %v859, %v860
        %v863 = vsel %vm813, %v855, %v862
        %v864 = vrot.slane %v859, 4
        %v866 = vshrl.u32 %v786, 16
        %v868 = vrot.slane %v866, 7
        %v869 = vshll.u32 %v786, 16
        %v871 = vor.u32 %v868, %v869
        %v872 = vrot.slane %v868, 4
        %v874 = vshrl.u32 %v787, 16
        %v876 = vrot.slane %v874, 7
        %v877 = vshll.u32 %v787, 16
        %v879 = vor.u32 %v876, %v877
        %v880 = vsel %vm813, %v872, %v879
        %v881 = vrot.slane %v876, 4
        %v883 = vshrl.u32 %v788, 16
        %v885 = vrot.slane %v883, 7
        %v886 = vshll.u32 %v788, 16
        %v888 = vor.u32 %v885, %v886
        %v889 = vrot.slane %v885, 4
        %v891 = vshrl.u32 %v789, 16
        %v893 = vrot.slane %v891, 7
        %v894 = vshll.u32 %v789, 16
        %v896 = vor.u32 %v893, %v894
        %v897 = vsel %vm813, %v889, %v896
        %v898 = vrot.slane %v893, 4
        %v900 = vshrl.u32 %v790, 16
        %v902 = vrot.slane %v900, 7
        %v903 = vshll.u32 %v790, 16
        %v905 = vor.u32 %v902, %v903
        %v906 = vrot.slane %v902, 4
        %v908 = vshrl.u32 %v791, 16
        %v910 = vrot.slane %v908, 7
        %v911 = vshll.u32 %v791, 16
        %v913 = vor.u32 %v910, %v911
        %v914 = vsel %vm813, %v906, %v913
        %v915 = vrot.slane %v910, 4
        %v917 = vshrl.u32 %v792, 16
        %v919 = vrot.slane %v917, 7
        %v920 = vshll.u32 %v792, 16
        %v922 = vor.u32 %v919, %v920
        %v923 = vrot.slane %v919, 4
        %v925 = vshrl.u32 %v793, 16
        %v927 = vrot.slane %v925, 7
        %v928 = vshll.u32 %v793, 16
        %v930 = vor.u32 %v927, %v928
        %v931 = vsel %vm813, %v923, %v930
        %v932 = vrot.slane %v927, 4
        %v934 = vshrl.u32 %v794, 16
        %v936 = vrot.slane %v934, 7
        %v937 = vshll.u32 %v794, 16
        %v939 = vor.u32 %v936, %v937
        %v940 = vrot.slane %v936, 4
        %v942 = vshrl.u32 %v795, 16
        %v944 = vrot.slane %v942, 7
        %v945 = vshll.u32 %v795, 16
        %v947 = vor.u32 %v944, %v945
        %v948 = vsel %vm813, %v940, %v947
        %v949 = vrot.slane %v944, 4
        %v951 = vshrl.u32 %v796, 16
        %v953 = vrot.slane %v951, 7
        %v954 = vshll.u32 %v796, 16
        %v956 = vor.u32 %v953, %v954
        %v957 = vrot.slane %v953, 4
        %v959 = vshrl.u32 %v797, 16
        %v961 = vrot.slane %v959, 7
        %v962 = vshll.u32 %v797, 16
        %v964 = vor.u32 %v961, %v962
        %v965 = vsel %vm813, %v957, %v964
        %v966 = vrot.slane %v961, 4
        %v968 = vshrl.u32 %v798, 16
        %v970 = vrot.slane %v968, 7
        %v971 = vshll.u32 %v798, 16
        %v973 = vor.u32 %v970, %v971
        %v974 = vrot.slane %v970, 4
        %v976 = vshrl.u32 %v799, 16
        %v978 = vrot.slane %v976, 7
        %v979 = vshll.u32 %v799, 16
        %v981 = vor.u32 %v978, %v979
        %v982 = vsel %vm813, %v974, %v981
        %v983 = vrot.slane %v978, 4
        %v985 = vshrl.u32 %v800, 16
        %v987 = vrot.slane %v985, 7
        %v988 = vshll.u32 %v800, 16
        %v990 = vor.u32 %v987, %v988
        %v991 = vrot.slane %v987, 4
        %v993 = vshrl.u32 %v801, 16
        %v995 = vrot.slane %v993, 7
        %v996 = vshll.u32 %v801, 16
        %v998 = vor.u32 %v995, %v996
        %v999 = vsel %vm813, %v991, %v998
        %v1000 = vrot.slane %v995, 4
        %v1002 = vshrl.u32 %v802, 16
        %v1004 = vrot.slane %v1002, 7
        %v1005 = vshll.u32 %v802, 16
        %v1007 = vor.u32 %v1004, %v1005
        %v1008 = vrot.slane %v1004, 4
        %v1010 = vshrl.u32 %v803, 16
        %v1012 = vrot.slane %v1010, 7
        %v1013 = vshll.u32 %v803, 16
        %v1015 = vor.u32 %v1012, %v1013
        %v1016 = vsel %vm813, %v1008, %v1015
        %v1017 = vrot.slane %v1012, 4
        %v1019 = vshrl.u32 %v804, 16
        %v1021 = vrot.slane %v1019, 7
        %v1022 = vshll.u32 %v804, 16
        %v1024 = vor.u32 %v1021, %v1022
        %v1025 = vrot.slane %v1021, 4
        %v1027 = vshrl.u32 %v805, 16
        %v1029 = vrot.slane %v1027, 7
        %v1030 = vshll.u32 %v805, 16
        %v1032 = vor.u32 %v1029, %v1030
        %v1033 = vsel %vm813, %v1025, %v1032
        %v1034 = vrot.slane %v1029, 4
        %v1036 = vshrl.u32 %v806, 16
        %v1038 = vrot.slane %v1036, 7
        %v1039 = vshll.u32 %v806, 16
        %v1041 = vor.u32 %v1038, %v1039
        %v1042 = vrot.slane %v1038, 4
        %v1044 = vshrl.u32 %v807, 16
        %v1046 = vrot.slane %v1044, 7
        %v1047 = vshll.u32 %v807, 16
        %v1049 = vor.u32 %v1046, %v1047
        %v1050 = vsel %vm813, %v1042, %v1049
        %v1051 = vrot.slane %v1046, 4
        %v1053 = vshrl.u32 %v808, 16
        %v1055 = vrot.slane %v1053, 7
        %v1056 = vshll.u32 %v808, 16
        %v1058 = vor.u32 %v1055, %v1056
        %v1059 = vrot.slane %v1055, 4
        %v1061 = vshrl.u32 %v809, 16
        %v1063 = vrot.slane %v1061, 7
        %v1064 = vshll.u32 %v809, 16
        %v1066 = vor.u32 %v1063, %v1064
        %v1067 = vsel %vm813, %v1059, %v1066
        %v1068 = vrot.slane %v1063, 4
        %v1070 = vshrl.u32 %v810, 16
        %v1072 = vrot.slane %v1070, 7
        %v1073 = vshll.u32 %v810, 16
        %v1075 = vor.u32 %v1072, %v1073
        %v1076 = vrot.slane %v1072, 4
        %v1078 = vshrl.u32 %v811, 16
        %v1080 = vrot.slane %v1078, 7
        %v1081 = vshll.u32 %v811, 16
        %v1083 = vor.u32 %v1080, %v1081
        %v1084 = vsel %vm813, %v1076, %v1083
        %v1085 = vrot.slane %v1080, 4
        %s1134 = scalar_lea.vmem [#allocation2], 12
        %vm1135 = vcmask 27648
        %vm1136 = vmand %vm1135, %vm724
        %v1137 = vld [vmem:[%s1134] sm:$0xf]
        %v1138 = vsel %vm1136, %v820, %v1137
        %1139 = vst [vmem:[%s1134] sm:$0xf] %v1138
        %1140 = vst.msk [vmem:[%s1134 + $0x4] sm:$0xf] %vm658, %v829
        %v1141 = vld [vmem:[%s1134 + $0x8] sm:$0x1]
        %v1142 = vsel %vm669, %v830, %v1141
        %1143 = vst [vmem:[%s1134 + $0x8] sm:$0x1] %v1142
        %v1144 = vld [vmem:[%s1134 + $0xc] sm:$0xf]
        %v1145 = vsel %vm1136, %v837, %v1144
        %1146 = vst [vmem:[%s1134 + $0xc] sm:$0xf] %v1145
        %1147 = vst.msk [vmem:[%s1134 + $0x10] sm:$0xf] %vm658, %v846
        %v1148 = vld [vmem:[%s1134 + $0x14] sm:$0x1]
        %v1149 = vsel %vm669, %v847, %v1148
        %1150 = vst [vmem:[%s1134 + $0x14] sm:$0x1] %v1149
        %v1151 = vld [vmem:[%s1134 + $0x18] sm:$0xf]
        %v1152 = vsel %vm1136, %v854, %v1151
        %1153 = vst [vmem:[%s1134 + $0x18] sm:$0xf] %v1152
        %1154 = vst.msk [vmem:[%s1134 + $0x1c] sm:$0xf] %vm658, %v863
        %v1155 = vld [vmem:[%s1134 + $0x20] sm:$0x1]
        %v1156 = vsel %vm669, %v864, %v1155
        %1157 = vst [vmem:[%s1134 + $0x20] sm:$0x1] %v1156
        %v1158 = vld [vmem:[%s1134 + $0x24] sm:$0xf]
        %v1159 = vsel %vm1136, %v871, %v1158
        %1160 = vst [vmem:[%s1134 + $0x24] sm:$0xf] %v1159
        %1161 = vst.msk [vmem:[%s1134 + $0x28] sm:$0xf] %vm658, %v880
        %v1162 = vld [vmem:[%s1134 + $0x2c] sm:$0x1]
        %v1163 = vsel %vm669, %v881, %v1162
        %1164 = vst [vmem:[%s1134 + $0x2c] sm:$0x1] %v1163
        %v1165 = vld [vmem:[%s1134 + $0x30] sm:$0xf]
        %v1166 = vsel %vm1136, %v888, %v1165
        %1167 = vst [vmem:[%s1134 + $0x30] sm:$0xf] %v1166
        %1168 = vst.msk [vmem:[%s1134 + $0x34] sm:$0xf] %vm658, %v897
        %v1169 = vld [vmem:[%s1134 + $0x38] sm:$0x1]
        %v1170 = vsel %vm669, %v898, %v1169
        %1171 = vst [vmem:[%s1134 + $0x38] sm:$0x1] %v1170
        %v1172 = vld [vmem:[%s1134 + $0x3c] sm:$0xf]
        %v1173 = vsel %vm1136, %v905, %v1172
        %1174 = vst [vmem:[%s1134 + $0x3c] sm:$0xf] %v1173
        %1175 = vst.msk [vmem:[%s1134 + $0x40] sm:$0xf] %vm658, %v914
        %v1176 = vld [vmem:[%s1134 + $0x44] sm:$0x1]
        %v1177 = vsel %vm669, %v915, %v1176
        %1178 = vst [vmem:[%s1134 + $0x44] sm:$0x1] %v1177
        %v1179 = vld [vmem:[%s1134 + $0x48] sm:$0xf]
        %v1180 = vsel %vm1136, %v922, %v1179
        %1181 = vst [vmem:[%s1134 + $0x48] sm:$0xf] %v1180
        %1182 = vst.msk [vmem:[%s1134 + $0x4c] sm:$0xf] %vm658, %v931
        %v1183 = vld [vmem:[%s1134 + $0x50] sm:$0x1]
        %v1184 = vsel %vm669, %v932, %v1183
        %1185 = vst [vmem:[%s1134 + $0x50] sm:$0x1] %v1184
        %v1186 = vld [vmem:[%s1134 + $0x54] sm:$0xf]
        %v1187 = vsel %vm1136, %v939, %v1186
        %1188 = vst [vmem:[%s1134 + $0x54] sm:$0xf] %v1187
        %1189 = vst.msk [vmem:[%s1134 + $0x58] sm:$0xf] %vm658, %v948
        %v1190 = vld [vmem:[%s1134 + $0x5c] sm:$0x1]
        %v1191 = vsel %vm669, %v949, %v1190
        %1192 = vst [vmem:[%s1134 + $0x5c] sm:$0x1] %v1191
        %v1193 = vld [vmem:[%s1134 + $0x60] sm:$0xf]
        %v1194 = vsel %vm1136, %v956, %v1193
        %1195 = vst [vmem:[%s1134 + $0x60] sm:$0xf] %v1194
        %1196 = vst.msk [vmem:[%s1134 + $0x64] sm:$0xf] %vm658, %v965
        %v1197 = vld [vmem:[%s1134 + $0x68] sm:$0x1]
        %v1198 = vsel %vm669, %v966, %v1197
        %1199 = vst [vmem:[%s1134 + $0x68] sm:$0x1] %v1198
        %v1200 = vld [vmem:[%s1134 + $0x6c] sm:$0xf]
        %v1201 = vsel %vm1136, %v973, %v1200
        %1202 = vst [vmem:[%s1134 + $0x6c] sm:$0xf] %v1201
        %1203 = vst.msk [vmem:[%s1134 + $0x70] sm:$0xf] %vm658, %v982
        %v1204 = vld [vmem:[%s1134 + $0x74] sm:$0x1]
        %v1205 = vsel %vm669, %v983, %v1204
        %1206 = vst [vmem:[%s1134 + $0x74] sm:$0x1] %v1205
        %v1207 = vld [vmem:[%s1134 + $0x78] sm:$0xf]
        %v1208 = vsel %vm1136, %v990, %v1207
        %1209 = vst [vmem:[%s1134 + $0x78] sm:$0xf] %v1208
        %1210 = vst.msk [vmem:[%s1134 + $0x7c] sm:$0xf] %vm658, %v999
        %v1211 = vld [vmem:[%s1134 + $0x80] sm:$0x1]
        %v1212 = vsel %vm669, %v1000, %v1211
        %1213 = vst [vmem:[%s1134 + $0x80] sm:$0x1] %v1212
        %v1214 = vld [vmem:[%s1134 + $0x84] sm:$0xf]
        %v1215 = vsel %vm1136, %v1007, %v1214
        %1216 = vst [vmem:[%s1134 + $0x84] sm:$0xf] %v1215
        %1217 = vst.msk [vmem:[%s1134 + $0x88] sm:$0xf] %vm658, %v1016
        %v1218 = vld [vmem:[%s1134 + $0x8c] sm:$0x1]
        %v1219 = vsel %vm669, %v1017, %v1218
        %1220 = vst [vmem:[%s1134 + $0x8c] sm:$0x1] %v1219
        %v1221 = vld [vmem:[%s1134 + $0x90] sm:$0xf]
        %v1222 = vsel %vm1136, %v1024, %v1221
        %1223 = vst [vmem:[%s1134 + $0x90] sm:$0xf] %v1222
        %1224 = vst.msk [vmem:[%s1134 + $0x94] sm:$0xf] %vm658, %v1033
        %v1225 = vld [vmem:[%s1134 + $0x98] sm:$0x1]
        %v1226 = vsel %vm669, %v1034, %v1225
        %1227 = vst [vmem:[%s1134 + $0x98] sm:$0x1] %v1226
        %v1228 = vld [vmem:[%s1134 + $0x9c] sm:$0xf]
        %v1229 = vsel %vm1136, %v1041, %v1228
        %1230 = vst [vmem:[%s1134 + $0x9c] sm:$0xf] %v1229
        %1231 = vst.msk [vmem:[%s1134 + $0xa0] sm:$0xf] %vm658, %v1050
        %v1232 = vld [vmem:[%s1134 + $0xa4] sm:$0x1]
        %v1233 = vsel %vm669, %v1051, %v1232
        %1234 = vst [vmem:[%s1134 + $0xa4] sm:$0x1] %v1233
        %v1235 = vld [vmem:[%s1134 + $0xa8] sm:$0xf]
        %v1236 = vsel %vm1136, %v1058, %v1235
        %1237 = vst [vmem:[%s1134 + $0xa8] sm:$0xf] %v1236
        %1238 = vst.msk [vmem:[%s1134 + $0xac] sm:$0xf] %vm658, %v1067
        %v1239 = vld [vmem:[%s1134 + $0xb0] sm:$0x1]
        %v1240 = vsel %vm669, %v1068, %v1239
        %1241 = vst [vmem:[%s1134 + $0xb0] sm:$0x1] %v1240
        %v1242 = vld [vmem:[%s1134 + $0xb4] sm:$0xf]
        %v1243 = vsel %vm1136, %v1075, %v1242
        %1244 = vst [vmem:[%s1134 + $0xb4] sm:$0xf] %v1243
        %1245 = vst.msk [vmem:[%s1134 + $0xb8] sm:$0xf] %vm658, %v1084
        %v1246 = vld [vmem:[%s1134 + $0xbc] sm:$0x1]
        %v1247 = vsel %vm669, %v1085, %v1246
        %1248 = vst [vmem:[%s1134 + $0xbc] sm:$0x1] %v1247
        %v1249 = vld [vmem:[#allocation2] sm:$0xf]
        %v1250 = vld [vmem:[#allocation2 + $0x4] sm:$0xf]
        %v1251 = vld [vmem:[#allocation2 + $0xc] sm:$0xf]
        %v1252 = vld [vmem:[#allocation2 + $0x10] sm:$0xf]
        %v1253 = vld [vmem:[#allocation2 + $0x18] sm:$0xf]
        %v1254 = vld [vmem:[#allocation2 + $0x1c] sm:$0xf]
        %v1255 = vld [vmem:[#allocation2 + $0x24] sm:$0xf]
        %v1256 = vld [vmem:[#allocation2 + $0x28] sm:$0xf]
        %v1257 = vld [vmem:[#allocation2 + $0x30] sm:$0xf]
        %v1258 = vld [vmem:[#allocation2 + $0x34] sm:$0xf]
        %v1259 = vld [vmem:[#allocation2 + $0x3c] sm:$0xf]
        %v1260 = vld [vmem:[#allocation2 + $0x40] sm:$0xf]
        %v1261 = vld [vmem:[#allocation2 + $0x48] sm:$0xf]
        %v1262 = vld [vmem:[#allocation2 + $0x4c] sm:$0xf]
        %v1263 = vld [vmem:[#allocation2 + $0x54] sm:$0xf]
        %v1264 = vld [vmem:[#allocation2 + $0x58] sm:$0xf]
        %v1265 = vld [vmem:[#allocation2 + $0x60] sm:$0xf]
        %v1266 = vld [vmem:[#allocation2 + $0x64] sm:$0xf]
        %v1267 = vld [vmem:[#allocation2 + $0x6c] sm:$0xf]
        %v1268 = vld [vmem:[#allocation2 + $0x70] sm:$0xf]
        %v1269 = vld [vmem:[#allocation2 + $0x78] sm:$0xf]
        %v1270 = vld [vmem:[#allocation2 + $0x7c] sm:$0xf]
        %v1271 = vld [vmem:[#allocation2 + $0x84] sm:$0xf]
        %v1272 = vld [vmem:[#allocation2 + $0x88] sm:$0xf]
        %v1273 = vld [vmem:[#allocation2 + $0x90] sm:$0xf]
        %v1274 = vld [vmem:[#allocation2 + $0x94] sm:$0xf]
        %v1275 = vld [vmem:[#allocation2 + $0x9c] sm:$0xf]
        %v1276 = vld [vmem:[#allocation2 + $0xa0] sm:$0xf]
        %v1277 = vld [vmem:[#allocation2 + $0xa8] sm:$0xf]
        %v1278 = vld [vmem:[#allocation2 + $0xac] sm:$0xf]
        %v1279 = vld [vmem:[#allocation2 + $0xb4] sm:$0xf]
        %v1280 = vld [vmem:[#allocation2 + $0xb8] sm:$0xf]
        %v1281 = vld [vmem:[%s3] sm:$0x3]
        %v1282 = vld [vmem:[#allocation2 + $0x8] sm:$0x1]
        %v1283 = vld [vmem:[#allocation2 + $0x14] sm:$0x1]
        %v1284 = vld [vmem:[#allocation2 + $0x20] sm:$0x1]
        %v1285 = vld [vmem:[#allocation2 + $0x2c] sm:$0x1]
        %v1286 = vld [vmem:[#allocation2 + $0x38] sm:$0x1]
        %v1287 = vld [vmem:[#allocation2 + $0x44] sm:$0x1]
        %v1288 = vld [vmem:[#allocation2 + $0x50] sm:$0x1]
        %v1289 = vld [vmem:[#allocation2 + $0x5c] sm:$0x1]
        %v1290 = vld [vmem:[#allocation2 + $0x68] sm:$0x1]
        %v1291 = vld [vmem:[#allocation2 + $0x74] sm:$0x1]
        %v1292 = vld [vmem:[#allocation2 + $0x80] sm:$0x1]
        %v1293 = vld [vmem:[#allocation2 + $0x8c] sm:$0x1]
        %v1294 = vld [vmem:[#allocation2 + $0x98] sm:$0x1]
        %v1295 = vld [vmem:[#allocation2 + $0xa4] sm:$0x1]
        %v1296 = vld [vmem:[#allocation2 + $0xb0] sm:$0x1]
        %v1297 = vld [vmem:[#allocation2 + $0xbc] sm:$0x1]
        %vm1298 = vsmask.f32 3328
        %vm1299 = vsmask.f32 7440
        %vm1300 = vmor %vm1298, %vm1299
        %v1302 = vshrl.u32 %v1249, 16
        %v1304 = vrot.slane %v1302, 4
        %v1305 = vshll.u32 %v1249, 16
        %v1307 = vrot.slane %v1305, 5
        %v1308 = vor.u32 %v1304, %v1307
        %v1309 = vrot.slane %v1308, 4
        %v1311 = vshll.u32 %v1250, 16
        %v1313 = vrot.slane %v1311, 5
        %v1314 = vsel %vm1300, %v1309, %v1313
        %v1315 = vshrl.u32 %v1250, 16
        %v1317 = vrot.slane %v1315, 4
        %v1318 = vor.u32 %v1317, %v1313
        %v1319 = vrot.slane %v1318, 4
        %v1321 = vshll.u32 %v1282, 16
        %v1323 = vrot.slane %v1321, 5
        %v1324 = vsel %vm1300, %v1319, %v1323
        %v1326 = vshrl.u32 %v1251, 16
        %v1328 = vrot.slane %v1326, 4
        %v1329 = vshll.u32 %v1251, 16
        %v1331 = vrot.slane %v1329, 5
        %v1332 = vor.u32 %v1328, %v1331
        %v1333 = vrot.slane %v1332, 4
        %v1335 = vshll.u32 %v1252, 16
        %v1337 = vrot.slane %v1335, 5
        %v1338 = vsel %vm1300, %v1333, %v1337
        %v1339 = vshrl.u32 %v1252, 16
        %v1341 = vrot.slane %v1339, 4
        %v1342 = vor.u32 %v1341, %v1337
        %v1343 = vrot.slane %v1342, 4
        %v1345 = vshll.u32 %v1283, 16
        %v1347 = vrot.slane %v1345, 5
        %v1348 = vsel %vm1300, %v1343, %v1347
        %v1350 = vshrl.u32 %v1253, 16
        %v1352 = vrot.slane %v1350, 4
        %v1353 = vshll.u32 %v1253, 16
        %v1355 = vrot.slane %v1353, 5
        %v1356 = vor.u32 %v1352, %v1355
        %v1357 = vrot.slane %v1356, 4
        %v1359 = vshll.u32 %v1254, 16
        %v1361 = vrot.slane %v1359, 5
        %v1362 = vsel %vm1300, %v1357, %v1361
        %v1363 = vshrl.u32 %v1254, 16
        %v1365 = vrot.slane %v1363, 4
        %v1366 = vor.u32 %v1365, %v1361
        %v1367 = vrot.slane %v1366, 4
        %v1369 = vshll.u32 %v1284, 16
        %v1371 = vrot.slane %v1369, 5
        %v1372 = vsel %vm1300, %v1367, %v1371
        %v1374 = vshrl.u32 %v1255, 16
        %v1376 = vrot.slane %v1374, 4
        %v1377 = vshll.u32 %v1255, 16
        %v1379 = vrot.slane %v1377, 5
        %v1380 = vor.u32 %v1376, %v1379
        %v1381 = vrot.slane %v1380, 4
        %v1383 = vshll.u32 %v1256, 16
        %v1385 = vrot.slane %v1383, 5
        %v1386 = vsel %vm1300, %v1381, %v1385
        %v1387 = vshrl.u32 %v1256, 16
        %v1389 = vrot.slane %v1387, 4
        %v1390 = vor.u32 %v1389, %v1385
        %v1391 = vrot.slane %v1390, 4
        %v1393 = vshll.u32 %v1285, 16
        %v1395 = vrot.slane %v1393, 5
        %v1396 = vsel %vm1300, %v1391, %v1395
        %v1398 = vshrl.u32 %v1257, 16
        %v1400 = vrot.slane %v1398, 4
        %v1401 = vshll.u32 %v1257, 16
        %v1403 = vrot.slane %v1401, 5
        %v1404 = vor.u32 %v1400, %v1403
        %v1405 = vrot.slane %v1404, 4
        %v1407 = vshll.u32 %v1258, 16
        %v1409 = vrot.slane %v1407, 5
        %v1410 = vsel %vm1300, %v1405, %v1409
        %v1411 = vshrl.u32 %v1258, 16
        %v1413 = vrot.slane %v1411, 4
        %v1414 = vor.u32 %v1413, %v1409
        %v1415 = vrot.slane %v1414, 4
        %v1417 = vshll.u32 %v1286, 16
        %v1419 = vrot.slane %v1417, 5
        %v1420 = vsel %vm1300, %v1415, %v1419
        %v1422 = vshrl.u32 %v1259, 16
        %v1424 = vrot.slane %v1422, 4
        %v1425 = vshll.u32 %v1259, 16
        %v1427 = vrot.slane %v1425, 5
        %v1428 = vor.u32 %v1424, %v1427
        %v1429 = vrot.slane %v1428, 4
        %v1431 = vshll.u32 %v1260, 16
        %v1433 = vrot.slane %v1431, 5
        %v1434 = vsel %vm1300, %v1429, %v1433
        %v1435 = vshrl.u32 %v1260, 16
        %v1437 = vrot.slane %v1435, 4
        %v1438 = vor.u32 %v1437, %v1433
        %v1439 = vrot.slane %v1438, 4
        %v1441 = vshll.u32 %v1287, 16
        %v1443 = vrot.slane %v1441, 5
        %v1444 = vsel %vm1300, %v1439, %v1443
        %v1446 = vshrl.u32 %v1261, 16
        %v1448 = vrot.slane %v1446, 4
        %v1449 = vshll.u32 %v1261, 16
        %v1451 = vrot.slane %v1449, 5
        %v1452 = vor.u32 %v1448, %v1451
        %v1453 = vrot.slane %v1452, 4
        %v1455 = vshll.u32 %v1262, 16
        %v1457 = vrot.slane %v1455, 5
        %v1458 = vsel %vm1300, %v1453, %v1457
        %v1459 = vshrl.u32 %v1262, 16
        %v1461 = vrot.slane %v1459, 4
        %v1462 = vor.u32 %v1461, %v1457
        %v1463 = vrot.slane %v1462, 4
        %v1465 = vshll.u32 %v1288, 16
        %v1467 = vrot.slane %v1465, 5
        %v1468 = vsel %vm1300, %v1463, %v1467
        %v1470 = vshrl.u32 %v1263, 16
        %v1472 = vrot.slane %v1470, 4
        %v1473 = vshll.u32 %v1263, 16
        %v1475 = vrot.slane %v1473, 5
        %v1476 = vor.u32 %v1472, %v1475
        %v1477 = vrot.slane %v1476, 4
        %v1479 = vshll.u32 %v1264, 16
        %v1481 = vrot.slane %v1479, 5
        %v1482 = vsel %vm1300, %v1477, %v1481
        %v1483 = vshrl.u32 %v1264, 16
        %v1485 = vrot.slane %v1483, 4
        %v1486 = vor.u32 %v1485, %v1481
        %v1487 = vrot.slane %v1486, 4
        %v1489 = vshll.u32 %v1289, 16
        %v1491 = vrot.slane %v1489, 5
        %v1492 = vsel %vm1300, %v1487, %v1491
        %v1494 = vshrl.u32 %v1265, 16
        %v1496 = vrot.slane %v1494, 4
        %v1497 = vshll.u32 %v1265, 16
        %v1499 = vrot.slane %v1497, 5
        %v1500 = vor.u32 %v1496, %v1499
        %v1501 = vrot.slane %v1500, 4
        %v1503 = vshll.u32 %v1266, 16
        %v1505 = vrot.slane %v1503, 5
        %v1506 = vsel %vm1300, %v1501, %v1505
        %v1507 = vshrl.u32 %v1266, 16
        %v1509 = vrot.slane %v1507, 4
        %v1510 = vor.u32 %v1509, %v1505
        %v1511 = vrot.slane %v1510, 4
        %v1513 = vshll.u32 %v1290, 16
        %v1515 = vrot.slane %v1513, 5
        %v1516 = vsel %vm1300, %v1511, %v1515
        %v1518 = vshrl.u32 %v1267, 16
        %v1520 = vrot.slane %v1518, 4
        %v1521 = vshll.u32 %v1267, 16
        %v1523 = vrot.slane %v1521, 5
        %v1524 = vor.u32 %v1520, %v1523
        %v1525 = vrot.slane %v1524, 4
        %v1527 = vshll.u32 %v1268, 16
        %v1529 = vrot.slane %v1527, 5
        %v1530 = vsel %vm1300, %v1525, %v1529
        %v1531 = vshrl.u32 %v1268, 16
        %v1533 = vrot.slane %v1531, 4
        %v1534 = vor.u32 %v1533, %v1529
        %v1535 = vrot.slane %v1534, 4
        %v1537 = vshll.u32 %v1291, 16
        %v1539 = vrot.slane %v1537, 5
        %v1540 = vsel %vm1300, %v1535, %v1539
        %v1542 = vshrl.u32 %v1269, 16
        %v1544 = vrot.slane %v1542, 4
        %v1545 = vshll.u32 %v1269, 16
        %v1547 = vrot.slane %v1545, 5
        %v1548 = vor.u32 %v1544, %v1547
        %v1549 = vrot.slane %v1548, 4
        %v1551 = vshll.u32 %v1270, 16
        %v1553 = vrot.slane %v1551, 5
        %v1554 = vsel %vm1300, %v1549, %v1553
        %v1555 = vshrl.u32 %v1270, 16
        %v1557 = vrot.slane %v1555, 4
        %v1558 = vor.u32 %v1557, %v1553
        %v1559 = vrot.slane %v1558, 4
        %v1561 = vshll.u32 %v1292, 16
        %v1563 = vrot.slane %v1561, 5
        %v1564 = vsel %vm1300, %v1559, %v1563
        %v1566 = vshrl.u32 %v1271, 16
        %v1568 = vrot.slane %v1566, 4
        %v1569 = vshll.u32 %v1271, 16
        %v1571 = vrot.slane %v1569, 5
        %v1572 = vor.u32 %v1568, %v1571
        %v1573 = vrot.slane %v1572, 4
        %v1575 = vshll.u32 %v1272, 16
        %v1577 = vrot.slane %v1575, 5
        %v1578 = vsel %vm1300, %v1573, %v1577
        %v1579 = vshrl.u32 %v1272, 16
        %v1581 = vrot.slane %v1579, 4
        %v1582 = vor.u32 %v1581, %v1577
        %v1583 = vrot.slane %v1582, 4
        %v1585 = vshll.u32 %v1293, 16
        %v1587 = vrot.slane %v1585, 5
        %v1588 = vsel %vm1300, %v1583, %v1587
        %v1590 = vshrl.u32 %v1273, 16
        %v1592 = vrot.slane %v1590, 4
        %v1593 = vshll.u32 %v1273, 16
        %v1595 = vrot.slane %v1593, 5
        %v1596 = vor.u32 %v1592, %v1595
        %v1597 = vrot.slane %v1596, 4
        %v1599 = vshll.u32 %v1274, 16
        %v1601 = vrot.slane %v1599, 5
        %v1602 = vsel %vm1300, %v1597, %v1601
        %v1603 = vshrl.u32 %v1274, 16
        %v1605 = vrot.slane %v1603, 4
        %v1606 = vor.u32 %v1605, %v1601
        %v1607 = vrot.slane %v1606, 4
        %v1609 = vshll.u32 %v1294, 16
        %v1611 = vrot.slane %v1609, 5
        %v1612 = vsel %vm1300, %v1607, %v1611
        %v1614 = vshrl.u32 %v1275, 16
        %v1616 = vrot.slane %v1614, 4
        %v1617 = vshll.u32 %v1275, 16
        %v1619 = vrot.slane %v1617, 5
        %v1620 = vor.u32 %v1616, %v1619
        %v1621 = vrot.slane %v1620, 4
        %v1623 = vshll.u32 %v1276, 16
        %v1625 = vrot.slane %v1623, 5
        %v1626 = vsel %vm1300, %v1621, %v1625
        %v1627 = vshrl.u32 %v1276, 16
        %v1629 = vrot.slane %v1627, 4
        %v1630 = vor.u32 %v1629, %v1625
        %v1631 = vrot.slane %v1630, 4
        %v1633 = vshll.u32 %v1295, 16
        %v1635 = vrot.slane %v1633, 5
        %v1636 = vsel %vm1300, %v1631, %v1635
        %v1638 = vshrl.u32 %v1277, 16
        %v1640 = vrot.slane %v1638, 4
        %v1641 = vshll.u32 %v1277, 16
        %v1643 = vrot.slane %v1641, 5
        %v1644 = vor.u32 %v1640, %v1643
        %v1645 = vrot.slane %v1644, 4
        %v1647 = vshll.u32 %v1278, 16
        %v1649 = vrot.slane %v1647, 5
        %v1650 = vsel %vm1300, %v1645, %v1649
        %v1651 = vshrl.u32 %v1278, 16
        %v1653 = vrot.slane %v1651, 4
        %v1654 = vor.u32 %v1653, %v1649
        %v1655 = vrot.slane %v1654, 4
        %v1657 = vshll.u32 %v1296, 16
        %v1659 = vrot.slane %v1657, 5
        %v1660 = vsel %vm1300, %v1655, %v1659
        %v1662 = vshrl.u32 %v1279, 16
        %v1664 = vrot.slane %v1662, 4
        %v1665 = vshll.u32 %v1279, 16
        %v1667 = vrot.slane %v1665, 5
        %v1668 = vor.u32 %v1664, %v1667
        %v1669 = vrot.slane %v1668, 4
        %v1671 = vshll.u32 %v1280, 16
        %v1673 = vrot.slane %v1671, 5
        %v1674 = vsel %vm1300, %v1669, %v1673
        %v1675 = vshrl.u32 %v1280, 16
        %v1677 = vrot.slane %v1675, 4
        %v1678 = vor.u32 %v1677, %v1673
        %v1679 = vrot.slane %v1678, 4
        %v1681 = vshll.u32 %v1297, 16
        %v1683 = vrot.slane %v1681, 5
        %v1684 = vsel %vm1300, %v1679, %v1683
        %s1685 = scalar_lea.vmem %s3, 2
        %v1686 = vld [vmem:[%s1685] sm:$0x3]
        %v1687 = vunpack.c.l.b16 %v1314
        %v1688 = vunpack.c.l.b16 %v1324
        %v1689 = vunpack.c.l.b16 %v1338
        %v1690 = vunpack.c.l.b16 %v1348
        %v1691 = vunpack.c.l.b16 %v1362
        %v1692 = vunpack.c.l.b16 %v1372
        %v1693 = vunpack.c.l.b16 %v1386
        %v1694 = vunpack.c.l.b16 %v1396
        %v1695 = vunpack.c.l.b16 %v1410
        %v1696 = vunpack.c.l.b16 %v1420
        %v1697 = vunpack.c.l.b16 %v1434
        %v1698 = vunpack.c.l.b16 %v1444
        %v1699 = vunpack.c.l.b16 %v1458
        %v1700 = vunpack.c.l.b16 %v1468
        %v1701 = vunpack.c.l.b16 %v1482
        %v1702 = vunpack.c.l.b16 %v1492
        %v1703 = vunpack.c.l.b16 %v1506
        %v1704 = vunpack.c.l.b16 %v1516
        %v1705 = vunpack.c.l.b16 %v1530
        %v1706 = vunpack.c.l.b16 %v1540
        %v1707 = vunpack.c.l.b16 %v1554
        %v1708 = vunpack.c.l.b16 %v1564
        %v1709 = vunpack.c.l.b16 %v1578
        %v1710 = vunpack.c.l.b16 %v1588
        %v1711 = vunpack.c.l.b16 %v1602
        %v1712 = vunpack.c.l.b16 %v1612
        %v1713 = vunpack.c.l.b16 %v1626
        %v1714 = vunpack.c.l.b16 %v1636
        %v1715 = vunpack.c.l.b16 %v1650
        %v1716 = vunpack.c.l.b16 %v1660
        %v1717 = vunpack.c.l.b16 %v1674
        %v1718 = vunpack.c.l.b16 %v1684
        %v1719 = vpack.c.b16 %v1688, %v1687
        %v1720 = vpack.c.b16 %v1690, %v1689
        %v1721 = vpack.c.b16 %v1692, %v1691
        %v1722 = vpack.c.b16 %v1694, %v1693
        %v1723 = vpack.c.b16 %v1696, %v1695
        %v1724 = vpack.c.b16 %v1698, %v1697
        %v1725 = vpack.c.b16 %v1700, %v1699
        %v1726 = vpack.c.b16 %v1702, %v1701
        %v1727 = vpack.c.b16 %v1704, %v1703
        %v1728 = vpack.c.b16 %v1706, %v1705
        %v1729 = vpack.c.b16 %v1708, %v1707
        %v1730 = vpack.c.b16 %v1710, %v1709
        %v1731 = vpack.c.b16 %v1712, %v1711
        %v1732 = vpack.c.b16 %v1714, %v1713
        %v1733 = vpack.c.b16 %v1716, %v1715
        %v1734 = vpack.c.b16 %v1718, %v1717
        %vm1735 = vcmask 31744
        %v1737 = vsel %vm1735, %v1719, 0
        %v1740 = vsel %vm1735, %v1720, 0
        %v1743 = vsel %vm1735, %v1721, 0
        %v1746 = vsel %vm1735, %v1722, 0
        %v1749 = vsel %vm1735, %v1723, 0
        %v1752 = vsel %vm1735, %v1724, 0
        %v1755 = vsel %vm1735, %v1725, 0
        %v1758 = vsel %vm1735, %v1726, 0
        %v1761 = vsel %vm1735, %v1727, 0
        %v1764 = vsel %vm1735, %v1728, 0
        %v1767 = vsel %vm1735, %v1729, 0
        %v1770 = vsel %vm1735, %v1730, 0
        %v1773 = vsel %vm1735, %v1731, 0
        %v1776 = vsel %vm1735, %v1732, 0
        %v1779 = vsel %vm1735, %v1733, 0
        %v1782 = vsel %vm1735, %v1734, 0
        %vm1784 = vcmask 1041408
        %v1786 = vsel %vm1784, %v1686, 0
        %1788 = vmatpush.bf16.msra.mxu0 0
        %1789 = vmatpush.bf16.msra.mxu0 0
        %1790 = vmatpush.bf16.msra.mxu0 0
        %1791 = vmatpush.bf16.msra.mxu0 0
        %1792 = vmatpush.bf16.msra.mxu0 0
        %1793 = vmatpush.bf16.msra.mxu0 0
        %1794 = vmatpush.bf16.msra.mxu0 0
        %1795 = vmatpush.bf16.msra.mxu0 %v1786
        %1796 = vmatmul.bf16.gmra.mxu0 %v1737
        %v1797 = vpop.f32.mrf.mxu0
        %v1798 = vadd.f32 0.0, %v1797
        %v1799 = vpop.f32.mrf.mxu0
        %v1800 = vadd.f32 0.0, %v1799
        %1801 = vmatmul.bf16.gmra.mxu0 %v1740
        %v1802 = vpop.f32.mrf.mxu0
        %v1803 = vadd.f32 0.0, %v1802
        %v1804 = vpop.f32.mrf.mxu0
        %v1805 = vadd.f32 0.0, %v1804
        %1806 = vmatmul.bf16.gmra.mxu0 %v1743
        %v1807 = vpop.f32.mrf.mxu0
        %v1808 = vadd.f32 0.0, %v1807
        %v1809 = vpop.f32.mrf.mxu0
        %v1810 = vadd.f32 0.0, %v1809
        %1811 = vmatmul.bf16.gmra.mxu0 %v1746
        %v1812 = vpop.f32.mrf.mxu0
        %v1813 = vadd.f32 0.0, %v1812
        %v1814 = vpop.f32.mrf.mxu0
        %v1815 = vadd.f32 0.0, %v1814
        %1816 = vmatmul.bf16.gmra.mxu0 %v1749
        %v1817 = vpop.f32.mrf.mxu0
        %v1818 = vadd.f32 0.0, %v1817
        %v1819 = vpop.f32.mrf.mxu0
        %v1820 = vadd.f32 0.0, %v1819
        %1821 = vmatmul.bf16.gmra.mxu0 %v1752
        %v1822 = vpop.f32.mrf.mxu0
        %v1823 = vadd.f32 0.0, %v1822
        %v1824 = vpop.f32.mrf.mxu0
        %v1825 = vadd.f32 0.0, %v1824
        %1826 = vmatmul.bf16.gmra.mxu0 %v1755
        %v1827 = vpop.f32.mrf.mxu0
        %v1828 = vadd.f32 0.0, %v1827
        %v1829 = vpop.f32.mrf.mxu0
        %v1830 = vadd.f32 0.0, %v1829
        %1831 = vmatmul.bf16.gmra.mxu0 %v1758
        %v1832 = vpop.f32.mrf.mxu0
        %v1833 = vadd.f32 0.0, %v1832
        %v1834 = vpop.f32.mrf.mxu0
        %v1835 = vadd.f32 0.0, %v1834
        %1836 = vmatmul.bf16.gmra.mxu0 %v1761
        %v1837 = vpop.f32.mrf.mxu0
        %v1838 = vadd.f32 0.0, %v1837
        %v1839 = vpop.f32.mrf.mxu0
        %v1840 = vadd.f32 0.0, %v1839
        %1841 = vmatmul.bf16.gmra.mxu0 %v1764
        %v1842 = vpop.f32.mrf.mxu0
        %v1843 = vadd.f32 0.0, %v1842
        %v1844 = vpop.f32.mrf.mxu0
        %v1845 = vadd.f32 0.0, %v1844
        %1846 = vmatmul.bf16.gmra.mxu0 %v1767
        %v1847 = vpop.f32.mrf.mxu0
        %v1848 = vadd.f32 0.0, %v1847
        %v1849 = vpop.f32.mrf.mxu0
        %v1850 = vadd.f32 0.0, %v1849
        %1851 = vmatmul.bf16.gmra.mxu0 %v1770
        %v1852 = vpop.f32.mrf.mxu0
        %v1853 = vadd.f32 0.0, %v1852
        %v1854 = vpop.f32.mrf.mxu0
        %v1855 = vadd.f32 0.0, %v1854
        %1856 = vmatmul.bf16.gmra.mxu0 %v1773
        %v1857 = vpop.f32.mrf.mxu0
        %v1858 = vadd.f32 0.0, %v1857
        %v1859 = vpop.f32.mrf.mxu0
        %v1860 = vadd.f32 0.0, %v1859
        %1861 = vmatmul.bf16.gmra.mxu0 %v1776
        %v1862 = vpop.f32.mrf.mxu0
        %v1863 = vadd.f32 0.0, %v1862
        %v1864 = vpop.f32.mrf.mxu0
        %v1865 = vadd.f32 0.0, %v1864
        %1866 = vmatmul.bf16.gmra.mxu0 %v1779
        %v1867 = vpop.f32.mrf.mxu0
        %v1868 = vadd.f32 0.0, %v1867
        %v1869 = vpop.f32.mrf.mxu0
        %v1870 = vadd.f32 0.0, %v1869
        %1871 = vmatmul.bf16.gmra.mxu0 %v1782
        %v1872 = vpop.f32.mrf.mxu0
        %v1873 = vadd.f32 0.0, %v1872
        %v1874 = vpop.f32.mrf.mxu0
        %v1875 = vadd.f32 0.0, %v1874
        %1876 = vdwg.mxu0
        %v1909 = vunpack.c.l.b16 %v1249
        %v1910 = vunpack.c.l.b16 %v1250
        %v1911 = vunpack.c.l.b16 %v1251
        %v1912 = vunpack.c.l.b16 %v1252
        %v1913 = vunpack.c.l.b16 %v1253
        %v1914 = vunpack.c.l.b16 %v1254
        %v1915 = vunpack.c.l.b16 %v1255
        %v1916 = vunpack.c.l.b16 %v1256
        %v1917 = vunpack.c.l.b16 %v1257
        %v1918 = vunpack.c.l.b16 %v1258
        %v1919 = vunpack.c.l.b16 %v1259
        %v1920 = vunpack.c.l.b16 %v1260
        %v1921 = vunpack.c.l.b16 %v1261
        %v1922 = vunpack.c.l.b16 %v1262
        %v1923 = vunpack.c.l.b16 %v1263
        %v1924 = vunpack.c.l.b16 %v1264
        %v1925 = vunpack.c.l.b16 %v1265
        %v1926 = vunpack.c.l.b16 %v1266
        %v1927 = vunpack.c.l.b16 %v1267
        %v1928 = vunpack.c.l.b16 %v1268
        %v1929 = vunpack.c.l.b16 %v1269
        %v1930 = vunpack.c.l.b16 %v1270
        %v1931 = vunpack.c.l.b16 %v1271
        %v1932 = vunpack.c.l.b16 %v1272
        %v1933 = vunpack.c.l.b16 %v1273
        %v1934 = vunpack.c.l.b16 %v1274
        %v1935 = vunpack.c.l.b16 %v1275
        %v1936 = vunpack.c.l.b16 %v1276
        %v1937 = vunpack.c.l.b16 %v1277
        %v1938 = vunpack.c.l.b16 %v1278
        %v1939 = vunpack.c.l.b16 %v1279
        %v1940 = vunpack.c.l.b16 %v1280
        %v1941 = vpack.c.b16 %v1910, %v1909
        %v1942 = vpack.c.b16 %v1912, %v1911
        %v1943 = vpack.c.b16 %v1914, %v1913
        %v1944 = vpack.c.b16 %v1916, %v1915
        %v1945 = vpack.c.b16 %v1918, %v1917
        %v1946 = vpack.c.b16 %v1920, %v1919
        %v1947 = vpack.c.b16 %v1922, %v1921
        %v1948 = vpack.c.b16 %v1924, %v1923
        %v1949 = vpack.c.b16 %v1926, %v1925
        %v1950 = vpack.c.b16 %v1928, %v1927
        %v1951 = vpack.c.b16 %v1930, %v1929
        %v1952 = vpack.c.b16 %v1932, %v1931
        %v1953 = vpack.c.b16 %v1934, %v1933
        %v1954 = vpack.c.b16 %v1936, %v1935
        %v1955 = vpack.c.b16 %v1938, %v1937
        %v1956 = vpack.c.b16 %v1940, %v1939
        %v1958 = vsel %vm1735, %v1941, 0
        %v1961 = vsel %vm1735, %v1942, 0
        %v1964 = vsel %vm1735, %v1943, 0
        %v1967 = vsel %vm1735, %v1944, 0
        %v1970 = vsel %vm1735, %v1945, 0
        %v1973 = vsel %vm1735, %v1946, 0
        %v1976 = vsel %vm1735, %v1947, 0
        %v1979 = vsel %vm1735, %v1948, 0
        %v1982 = vsel %vm1735, %v1949, 0
        %v1985 = vsel %vm1735, %v1950, 0
        %v1988 = vsel %vm1735, %v1951, 0
        %v1991 = vsel %vm1735, %v1952, 0
        %v1994 = vsel %vm1735, %v1953, 0
        %v1997 = vsel %vm1735, %v1954, 0
        %v2000 = vsel %vm1735, %v1955, 0
        %v2003 = vsel %vm1735, %v1956, 0
        %v2006 = vsel %vm1784, %v1281, 0
        %2008 = vmatpush.bf16.msra.mxu0 0
        %2009 = vmatpush.bf16.msra.mxu0 0
        %2010 = vmatpush.bf16.msra.mxu0 0
        %2011 = vmatpush.bf16.msra.mxu0 0
        %2012 = vmatpush.bf16.msra.mxu0 0
        %2013 = vmatpush.bf16.msra.mxu0 0
        %2014 = vmatpush.bf16.msra.mxu0 0
        %2015 = vmatpush.bf16.msra.mxu0 %v2006
        %2016 = vmatmul.bf16.gmra.mxu0 %v1958
        %v2017 = vpop.f32.mrf.mxu0
        %v2018 = vadd.f32 %v1798, %v2017
        %v2019 = vpop.f32.mrf.mxu0
        %v2020 = vadd.f32 %v1800, %v2019
        %2021 = vmatmul.bf16.gmra.mxu0 %v1961
        %v2022 = vpop.f32.mrf.mxu0
        %v2023 = vadd.f32 %v1803, %v2022
        %v2024 = vpop.f32.mrf.mxu0
        %v2025 = vadd.f32 %v1805, %v2024
        %2026 = vmatmul.bf16.gmra.mxu0 %v1964
        %v2027 = vpop.f32.mrf.mxu0
        %v2028 = vadd.f32 %v1808, %v2027
        %v2029 = vpop.f32.mrf.mxu0
        %v2030 = vadd.f32 %v1810, %v2029
        %2031 = vmatmul.bf16.gmra.mxu0 %v1967
        %v2032 = vpop.f32.mrf.mxu0
        %v2033 = vadd.f32 %v1813, %v2032
        %v2034 = vpop.f32.mrf.mxu0
        %v2035 = vadd.f32 %v1815, %v2034
        %2036 = vmatmul.bf16.gmra.mxu0 %v1970
        %v2037 = vpop.f32.mrf.mxu0
        %v2038 = vadd.f32 %v1818, %v2037
        %v2039 = vpop.f32.mrf.mxu0
        %v2040 = vadd.f32 %v1820, %v2039
        %2041 = vmatmul.bf16.gmra.mxu0 %v1973
        %v2042 = vpop.f32.mrf.mxu0
        %v2043 = vadd.f32 %v1823, %v2042
        %v2044 = vpop.f32.mrf.mxu0
        %v2045 = vadd.f32 %v1825, %v2044
        %2046 = vmatmul.bf16.gmra.mxu0 %v1976
        %v2047 = vpop.f32.mrf.mxu0
        %v2048 = vadd.f32 %v1828, %v2047
        %v2049 = vpop.f32.mrf.mxu0
        %v2050 = vadd.f32 %v1830, %v2049
        %2051 = vmatmul.bf16.gmra.mxu0 %v1979
        %v2052 = vpop.f32.mrf.mxu0
        %v2053 = vadd.f32 %v1833, %v2052
        %v2054 = vpop.f32.mrf.mxu0
        %v2055 = vadd.f32 %v1835, %v2054
        %2056 = vmatmul.bf16.gmra.mxu0 %v1982
        %v2057 = vpop.f32.mrf.mxu0
        %v2058 = vadd.f32 %v1838, %v2057
        %v2059 = vpop.f32.mrf.mxu0
        %v2060 = vadd.f32 %v1840, %v2059
        %2061 = vmatmul.bf16.gmra.mxu0 %v1985
        %v2062 = vpop.f32.mrf.mxu0
        %v2063 = vadd.f32 %v1843, %v2062
        %v2064 = vpop.f32.mrf.mxu0
        %v2065 = vadd.f32 %v1845, %v2064
        %2066 = vmatmul.bf16.gmra.mxu0 %v1988
        %v2067 = vpop.f32.mrf.mxu0
        %v2068 = vadd.f32 %v1848, %v2067
        %v2069 = vpop.f32.mrf.mxu0
        %v2070 = vadd.f32 %v1850, %v2069
        %2071 = vmatmul.bf16.gmra.mxu0 %v1991
        %v2072 = vpop.f32.mrf.mxu0
        %v2073 = vadd.f32 %v1853, %v2072
        %v2074 = vpop.f32.mrf.mxu0
        %v2075 = vadd.f32 %v1855, %v2074
        %2076 = vmatmul.bf16.gmra.mxu0 %v1994
        %v2077 = vpop.f32.mrf.mxu0
        %v2078 = vadd.f32 %v1858, %v2077
        %v2079 = vpop.f32.mrf.mxu0
        %v2080 = vadd.f32 %v1860, %v2079
        %2081 = vmatmul.bf16.gmra.mxu0 %v1997
        %v2082 = vpop.f32.mrf.mxu0
        %v2083 = vadd.f32 %v1863, %v2082
        %v2084 = vpop.f32.mrf.mxu0
        %v2085 = vadd.f32 %v1865, %v2084
        %2086 = vmatmul.bf16.gmra.mxu0 %v2000
        %v2087 = vpop.f32.mrf.mxu0
        %v2088 = vadd.f32 %v1868, %v2087
        %v2089 = vpop.f32.mrf.mxu0
        %v2090 = vadd.f32 %v1870, %v2089
        %2091 = vmatmul.bf16.gmra.mxu0 %v2003
        %v2092 = vpop.f32.mrf.mxu0
        %v2093 = vadd.f32 %v1873, %v2092
        %v2094 = vpop.f32.mrf.mxu0
        %v2095 = vadd.f32 %v1875, %v2094
        %2096 = vdwg.mxu0
        %v2097 = vld [vmem:[#allocation2] sm:$0xe]
        %v2098 = vld [vmem:[#allocation2 + $0xc] sm:$0xe]
        %v2099 = vld [vmem:[#allocation2 + $0x18] sm:$0xe]
        %v2100 = vld [vmem:[#allocation2 + $0x24] sm:$0xe]
        %v2101 = vld [vmem:[#allocation2 + $0x30] sm:$0xe]
        %v2102 = vld [vmem:[#allocation2 + $0x3c] sm:$0xe]
        %v2103 = vld [vmem:[#allocation2 + $0x48] sm:$0xe]
        %v2104 = vld [vmem:[#allocation2 + $0x54] sm:$0xe]
        %v2105 = vld [vmem:[#allocation2 + $0x60] sm:$0xe]
        %v2106 = vld [vmem:[#allocation2 + $0x6c] sm:$0xe]
        %v2107 = vld [vmem:[#allocation2 + $0x78] sm:$0xe]
        %v2108 = vld [vmem:[#allocation2 + $0x84] sm:$0xe]
        %v2109 = vld [vmem:[#allocation2 + $0x90] sm:$0xe]
        %v2110 = vld [vmem:[#allocation2 + $0x9c] sm:$0xe]
        %v2111 = vld [vmem:[#allocation2 + $0xa8] sm:$0xe]
        %v2112 = vld [vmem:[#allocation2 + $0xb4] sm:$0xe]
        %vm2145 = vcmask 1042432
        %vm2146 = vcmask 1046532
        %vm2147 = vmor %vm2145, %vm2146
        %v2148 = vrot.slane %v2097, 5
        %v2149 = vrot.slane %v2148, 4
        %v2150 = vrot.slane %v1250, 5
        %v2151 = vsel %vm2147, %v2149, %v2150
        %v2152 = vrot.slane %v2150, 4
        %v2153 = vrot.slane %v1282, 5
        %v2154 = vsel %vm2147, %v2152, %v2153
        %v2155 = vrot.slane %v2098, 5
        %v2156 = vrot.slane %v2155, 4
        %v2157 = vrot.slane %v1252, 5
        %v2158 = vsel %vm2147, %v2156, %v2157
        %v2159 = vrot.slane %v2157, 4
        %v2160 = vrot.slane %v1283, 5
        %v2161 = vsel %vm2147, %v2159, %v2160
        %v2162 = vrot.slane %v2099, 5
        %v2163 = vrot.slane %v2162, 4
        %v2164 = vrot.slane %v1254, 5
        %v2165 = vsel %vm2147, %v2163, %v2164
        %v2166 = vrot.slane %v2164, 4
        %v2167 = vrot.slane %v1284, 5
        %v2168 = vsel %vm2147, %v2166, %v2167
        %v2169 = vrot.slane %v2100, 5
        %v2170 = vrot.slane %v2169, 4
        %v2171 = vrot.slane %v1256, 5
        %v2172 = vsel %vm2147, %v2170, %v2171
        %v2173 = vrot.slane %v2171, 4
        %v2174 = vrot.slane %v1285, 5
        %v2175 = vsel %vm2147, %v2173, %v2174
        %v2176 = vrot.slane %v2101, 5
        %v2177 = vrot.slane %v2176, 4
        %v2178 = vrot.slane %v1258, 5
        %v2179 = vsel %vm2147, %v2177, %v2178
        %v2180 = vrot.slane %v2178, 4
        %v2181 = vrot.slane %v1286, 5
        %v2182 = vsel %vm2147, %v2180, %v2181
        %v2183 = vrot.slane %v2102, 5
        %v2184 = vrot.slane %v2183, 4
        %v2185 = vrot.slane %v1260, 5
        %v2186 = vsel %vm2147, %v2184, %v2185
        %v2187 = vrot.slane %v2185, 4
        %v2188 = vrot.slane %v1287, 5
        %v2189 = vsel %vm2147, %v2187, %v2188
        %v2190 = vrot.slane %v2103, 5
        %v2191 = vrot.slane %v2190, 4
        %v2192 = vrot.slane %v1262, 5
        %v2193 = vsel %vm2147, %v2191, %v2192
        %v2194 = vrot.slane %v2192, 4
        %v2195 = vrot.slane %v1288, 5
        %v2196 = vsel %vm2147, %v2194, %v2195
        %v2197 = vrot.slane %v2104, 5
        %v2198 = vrot.slane %v2197, 4
        %v2199 = vrot.slane %v1264, 5
        %v2200 = vsel %vm2147, %v2198, %v2199
        %v2201 = vrot.slane %v2199, 4
        %v2202 = vrot.slane %v1289, 5
        %v2203 = vsel %vm2147, %v2201, %v2202
        %v2204 = vrot.slane %v2105, 5
        %v2205 = vrot.slane %v2204, 4
        %v2206 = vrot.slane %v1266, 5
        %v2207 = vsel %vm2147, %v2205, %v2206
        %v2208 = vrot.slane %v2206, 4
        %v2209 = vrot.slane %v1290, 5
        %v2210 = vsel %vm2147, %v2208, %v2209
        %v2211 = vrot.slane %v2106, 5
        %v2212 = vrot.slane %v2211, 4
        %v2213 = vrot.slane %v1268, 5
        %v2214 = vsel %vm2147, %v2212, %v2213
        %v2215 = vrot.slane %v2213, 4
        %v2216 = vrot.slane %v1291, 5
        %v2217 = vsel %vm2147, %v2215, %v2216
        %v2218 = vrot.slane %v2107, 5
        %v2219 = vrot.slane %v2218, 4
        %v2220 = vrot.slane %v1270, 5
        %v2221 = vsel %vm2147, %v2219, %v2220
        %v2222 = vrot.slane %v2220, 4
        %v2223 = vrot.slane %v1292, 5
        %v2224 = vsel %vm2147, %v2222, %v2223
        %v2225 = vrot.slane %v2108, 5
        %v2226 = vrot.slane %v2225, 4
        %v2227 = vrot.slane %v1272, 5
        %v2228 = vsel %vm2147, %v2226, %v2227
        %v2229 = vrot.slane %v2227, 4
        %v2230 = vrot.slane %v1293, 5
        %v2231 = vsel %vm2147, %v2229, %v2230
        %v2232 = vrot.slane %v2109, 5
        %v2233 = vrot.slane %v2232, 4
        %v2234 = vrot.slane %v1274, 5
        %v2235 = vsel %vm2147, %v2233, %v2234
        %v2236 = vrot.slane %v2234, 4
        %v2237 = vrot.slane %v1294, 5
        %v2238 = vsel %vm2147, %v2236, %v2237
        %v2239 = vrot.slane %v2110, 5
        %v2240 = vrot.slane %v2239, 4
        %v2241 = vrot.slane %v1276, 5
        %v2242 = vsel %vm2147, %v2240, %v2241
        %v2243 = vrot.slane %v2241, 4
        %v2244 = vrot.slane %v1295, 5
        %v2245 = vsel %vm2147, %v2243, %v2244
        %v2246 = vrot.slane %v2111, 5
        %v2247 = vrot.slane %v2246, 4
        %v2248 = vrot.slane %v1278, 5
        %v2249 = vsel %vm2147, %v2247, %v2248
        %v2250 = vrot.slane %v2248, 4
        %v2251 = vrot.slane %v1296, 5
        %v2252 = vsel %vm2147, %v2250, %v2251
        %v2253 = vrot.slane %v2112, 5
        %v2254 = vrot.slane %v2253, 4
        %v2255 = vrot.slane %v1280, 5
        %v2256 = vsel %vm2147, %v2254, %v2255
        %v2257 = vrot.slane %v2255, 4
        %v2258 = vrot.slane %v1297, 5
        %v2259 = vsel %vm2147, %v2257, %v2258
        %s2260 = scalar_lea.vmem %s3, 4
        %v2261 = vld [vmem:[%s2260] sm:$0x3]
        %v2262 = vunpack.c.l.b16 %v2151
        %v2263 = vunpack.c.l.b16 %v2154
        %v2264 = vunpack.c.l.b16 %v2158
        %v2265 = vunpack.c.l.b16 %v2161
        %v2266 = vunpack.c.l.b16 %v2165
        %v2267 = vunpack.c.l.b16 %v2168
        %v2268 = vunpack.c.l.b16 %v2172
        %v2269 = vunpack.c.l.b16 %v2175
        %v2270 = vunpack.c.l.b16 %v2179
        %v2271 = vunpack.c.l.b16 %v2182
        %v2272 = vunpack.c.l.b16 %v2186
        %v2273 = vunpack.c.l.b16 %v2189
        %v2274 = vunpack.c.l.b16 %v2193
        %v2275 = vunpack.c.l.b16 %v2196
        %v2276 = vunpack.c.l.b16 %v2200
        %v2277 = vunpack.c.l.b16 %v2203
        %v2278 = vunpack.c.l.b16 %v2207
        %v2279 = vunpack.c.l.b16 %v2210
        %v2280 = vunpack.c.l.b16 %v2214
        %v2281 = vunpack.c.l.b16 %v2217
        %v2282 = vunpack.c.l.b16 %v2221
        %v2283 = vunpack.c.l.b16 %v2224
        %v2284 = vunpack.c.l.b16 %v2228
        %v2285 = vunpack.c.l.b16 %v2231
        %v2286 = vunpack.c.l.b16 %v2235
        %v2287 = vunpack.c.l.b16 %v2238
        %v2288 = vunpack.c.l.b16 %v2242
        %v2289 = vunpack.c.l.b16 %v2245
        %v2290 = vunpack.c.l.b16 %v2249
        %v2291 = vunpack.c.l.b16 %v2252
        %v2292 = vunpack.c.l.b16 %v2256
        %v2293 = vunpack.c.l.b16 %v2259
        %v2294 = vpack.c.b16 %v2263, %v2262
        %v2295 = vpack.c.b16 %v2265, %v2264
        %v2296 = vpack.c.b16 %v2267, %v2266
        %v2297 = vpack.c.b16 %v2269, %v2268
        %v2298 = vpack.c.b16 %v2271, %v2270
        %v2299 = vpack.c.b16 %v2273, %v2272
        %v2300 = vpack.c.b16 %v2275, %v2274
        %v2301 = vpack.c.b16 %v2277, %v2276
        %v2302 = vpack.c.b16 %v2279, %v2278
        %v2303 = vpack.c.b16 %v2281, %v2280
        %v2304 = vpack.c.b16 %v2283, %v2282
        %v2305 = vpack.c.b16 %v2285, %v2284
        %v2306 = vpack.c.b16 %v2287, %v2286
        %v2307 = vpack.c.b16 %v2289, %v2288
        %v2308 = vpack.c.b16 %v2291, %v2290
        %v2309 = vpack.c.b16 %v2293, %v2292
        %v2311 = vsel %vm1735, %v2294, 0
        %v2314 = vsel %vm1735, %v2295, 0
        %v2317 = vsel %vm1735, %v2296, 0
        %v2320 = vsel %vm1735, %v2297, 0
        %v2323 = vsel %vm1735, %v2298, 0
        %v2326 = vsel %vm1735, %v2299, 0
        %v2329 = vsel %vm1735, %v2300, 0
        %v2332 = vsel %vm1735, %v2301, 0
        %v2335 = vsel %vm1735, %v2302, 0
        %v2338 = vsel %vm1735, %v2303, 0
        %v2341 = vsel %vm1735, %v2304, 0
        %v2344 = vsel %vm1735, %v2305, 0
        %v2347 = vsel %vm1735, %v2306, 0
        %v2350 = vsel %vm1735, %v2307, 0
        %v2353 = vsel %vm1735, %v2308, 0
        %v2356 = vsel %vm1735, %v2309, 0
        %v2359 = vsel %vm1784, %v2261, 0
        %2361 = vmatpush.bf16.msra.mxu0 0
        %2362 = vmatpush.bf16.msra.mxu0 0
        %2363 = vmatpush.bf16.msra.mxu0 0
        %2364 = vmatpush.bf16.msra.mxu0 0
        %2365 = vmatpush.bf16.msra.mxu0 0
        %2366 = vmatpush.bf16.msra.mxu0 0
        %2367 = vmatpush.bf16.msra.mxu0 0
        %2368 = vmatpush.bf16.msra.mxu0 %v2359
        %2369 = vmatmul.bf16.gmra.mxu0 %v2311
        %v2370 = vpop.f32.mrf.mxu0
        %v2371 = vadd.f32 0.0, %v2370
        %v2372 = vpop.f32.mrf.mxu0
        %v2373 = vadd.f32 0.0, %v2372
        %2374 = vmatmul.bf16.gmra.mxu0 %v2314
        %v2375 = vpop.f32.mrf.mxu0
        %v2376 = vadd.f32 0.0, %v2375
        %v2377 = vpop.f32.mrf.mxu0
        %v2378 = vadd.f32 0.0, %v2377
        %2379 = vmatmul.bf16.gmra.mxu0 %v2317
        %v2380 = vpop.f32.mrf.mxu0
        %v2381 = vadd.f32 0.0, %v2380
        %v2382 = vpop.f32.mrf.mxu0
        %v2383 = vadd.f32 0.0, %v2382
        %2384 = vmatmul.bf16.gmra.mxu0 %v2320
        %v2385 = vpop.f32.mrf.mxu0
        %v2386 = vadd.f32 0.0, %v2385
        %v2387 = vpop.f32.mrf.mxu0
        %v2388 = vadd.f32 0.0, %v2387
        %2389 = vmatmul.bf16.gmra.mxu0 %v2323
        %v2390 = vpop.f32.mrf.mxu0
        %v2391 = vadd.f32 0.0, %v2390
        %v2392 = vpop.f32.mrf.mxu0
        %v2393 = vadd.f32 0.0, %v2392
        %2394 = vmatmul.bf16.gmra.mxu0 %v2326
        %v2395 = vpop.f32.mrf.mxu0
        %v2396 = vadd.f32 0.0, %v2395
        %v2397 = vpop.f32.mrf.mxu0
        %v2398 = vadd.f32 0.0, %v2397
        %2399 = vmatmul.bf16.gmra.mxu0 %v2329
        %v2400 = vpop.f32.mrf.mxu0
        %v2401 = vadd.f32 0.0, %v2400
        %v2402 = vpop.f32.mrf.mxu0
        %v2403 = vadd.f32 0.0, %v2402
        %2404 = vmatmul.bf16.gmra.mxu0 %v2332
        %v2405 = vpop.f32.mrf.mxu0
        %v2406 = vadd.f32 0.0, %v2405
        %v2407 = vpop.f32.mrf.mxu0
        %v2408 = vadd.f32 0.0, %v2407
        %2409 = vmatmul.bf16.gmra.mxu0 %v2335
        %v2410 = vpop.f32.mrf.mxu0
        %v2411 = vadd.f32 0.0, %v2410
        %v2412 = vpop.f32.mrf.mxu0
        %v2413 = vadd.f32 0.0, %v2412
        %2414 = vmatmul.bf16.gmra.mxu0 %v2338
        %v2415 = vpop.f32.mrf.mxu0
        %v2416 = vadd.f32 0.0, %v2415
        %v2417 = vpop.f32.mrf.mxu0
        %v2418 = vadd.f32 0.0, %v2417
        %2419 = vmatmul.bf16.gmra.mxu0 %v2341
        %v2420 = vpop.f32.mrf.mxu0
        %v2421 = vadd.f32 0.0, %v2420
        %v2422 = vpop.f32.mrf.mxu0
        %v2423 = vadd.f32 0.0, %v2422
        %2424 = vmatmul.bf16.gmra.mxu0 %v2344
        %v2425 = vpop.f32.mrf.mxu0
        %v2426 = vadd.f32 0.0, %v2425
        %v2427 = vpop.f32.mrf.mxu0
        %v2428 = vadd.f32 0.0, %v2427
        %2429 = vmatmul.bf16.gmra.mxu0 %v2347
        %v2430 = vpop.f32.mrf.mxu0
        %v2431 = vadd.f32 0.0, %v2430
        %v2432 = vpop.f32.mrf.mxu0
        %v2433 = vadd.f32 0.0, %v2432
        %2434 = vmatmul.bf16.gmra.mxu0 %v2350
        %v2435 = vpop.f32.mrf.mxu0
        %v2436 = vadd.f32 0.0, %v2435
        %v2437 = vpop.f32.mrf.mxu0
        %v2438 = vadd.f32 0.0, %v2437
        %2439 = vmatmul.bf16.gmra.mxu0 %v2353
        %v2440 = vpop.f32.mrf.mxu0
        %v2441 = vadd.f32 0.0, %v2440
        %v2442 = vpop.f32.mrf.mxu0
        %v2443 = vadd.f32 0.0, %v2442
        %2444 = vmatmul.bf16.gmra.mxu0 %v2356
        %v2445 = vpop.f32.mrf.mxu0
        %v2446 = vadd.f32 0.0, %v2445
        %v2447 = vpop.f32.mrf.mxu0
        %v2448 = vadd.f32 0.0, %v2447
        %2449 = vdwg.mxu0
        %v2450 = vadd.f32 %v2018, %v2371
        %v2451 = vadd.f32 %v2020, %v2373
        %v2452 = vadd.f32 %v2023, %v2376
        %v2453 = vadd.f32 %v2025, %v2378
        %v2454 = vadd.f32 %v2028, %v2381
        %v2455 = vadd.f32 %v2030, %v2383
        %v2456 = vadd.f32 %v2033, %v2386
        %v2457 = vadd.f32 %v2035, %v2388
        %v2458 = vadd.f32 %v2038, %v2391
        %v2459 = vadd.f32 %v2040, %v2393
        %v2460 = vadd.f32 %v2043, %v2396
        %v2461 = vadd.f32 %v2045, %v2398
        %v2462 = vadd.f32 %v2048, %v2401
        %v2463 = vadd.f32 %v2050, %v2403
        %v2464 = vadd.f32 %v2053, %v2406
        %v2465 = vadd.f32 %v2055, %v2408
        %v2466 = vadd.f32 %v2058, %v2411
        %v2467 = vadd.f32 %v2060, %v2413
        %v2468 = vadd.f32 %v2063, %v2416
        %v2469 = vadd.f32 %v2065, %v2418
        %v2470 = vadd.f32 %v2068, %v2421
        %v2471 = vadd.f32 %v2070, %v2423
        %v2472 = vadd.f32 %v2073, %v2426
        %v2473 = vadd.f32 %v2075, %v2428
        %v2474 = vadd.f32 %v2078, %v2431
        %v2475 = vadd.f32 %v2080, %v2433
        %v2476 = vadd.f32 %v2083, %v2436
        %v2477 = vadd.f32 %v2085, %v2438
        %v2478 = vadd.f32 %v2088, %v2441
        %v2479 = vadd.f32 %v2090, %v2443
        %v2480 = vadd.f32 %v2093, %v2446
        %v2481 = vadd.f32 %v2095, %v2448
        %v2482 = vld [vmem:[%s1134] sm:$0xf]
        %v2483 = vld [vmem:[%s1134 + $0x4] sm:$0xf]
        %v2484 = vld [vmem:[%s1134 + $0xc] sm:$0xf]
        %v2485 = vld [vmem:[%s1134 + $0x10] sm:$0xf]
        %v2486 = vld [vmem:[%s1134 + $0x18] sm:$0xf]
        %v2487 = vld [vmem:[%s1134 + $0x1c] sm:$0xf]
        %v2488 = vld [vmem:[%s1134 + $0x24] sm:$0xf]
        %v2489 = vld [vmem:[%s1134 + $0x28] sm:$0xf]
        %v2490 = vld [vmem:[%s1134 + $0x30] sm:$0xf]
        %v2491 = vld [vmem:[%s1134 + $0x34] sm:$0xf]
        %v2492 = vld [vmem:[%s1134 + $0x3c] sm:$0xf]
        %v2493 = vld [vmem:[%s1134 + $0x40] sm:$0xf]
        %v2494 = vld [vmem:[%s1134 + $0x48] sm:$0xf]
        %v2495 = vld [vmem:[%s1134 + $0x4c] sm:$0xf]
        %v2496 = vld [vmem:[%s1134 + $0x54] sm:$0xf]
        %v2497 = vld [vmem:[%s1134 + $0x58] sm:$0xf]
        %v2498 = vld [vmem:[%s1134 + $0x60] sm:$0xf]
        %v2499 = vld [vmem:[%s1134 + $0x64] sm:$0xf]
        %v2500 = vld [vmem:[%s1134 + $0x6c] sm:$0xf]
        %v2501 = vld [vmem:[%s1134 + $0x70] sm:$0xf]
        %v2502 = vld [vmem:[%s1134 + $0x78] sm:$0xf]
        %v2503 = vld [vmem:[%s1134 + $0x7c] sm:$0xf]
        %v2504 = vld [vmem:[%s1134 + $0x84] sm:$0xf]
        %v2505 = vld [vmem:[%s1134 + $0x88] sm:$0xf]
        %v2506 = vld [vmem:[%s1134 + $0x90] sm:$0xf]
        %v2507 = vld [vmem:[%s1134 + $0x94] sm:$0xf]
        %v2508 = vld [vmem:[%s1134 + $0x9c] sm:$0xf]
        %v2509 = vld [vmem:[%s1134 + $0xa0] sm:$0xf]
        %v2510 = vld [vmem:[%s1134 + $0xa8] sm:$0xf]
        %v2511 = vld [vmem:[%s1134 + $0xac] sm:$0xf]
        %v2512 = vld [vmem:[%s1134 + $0xb4] sm:$0xf]
        %v2513 = vld [vmem:[%s1134 + $0xb8] sm:$0xf]
        %s2514 = scalar_lea.vmem %s3, 6
        %v2515 = vld [vmem:[%s2514] sm:$0x3]
        %v2548 = vunpack.c.l.b16 %v2482
        %v2549 = vunpack.c.l.b16 %v2483
        %v2550 = vunpack.c.l.b16 %v2484
        %v2551 = vunpack.c.l.b16 %v2485
        %v2552 = vunpack.c.l.b16 %v2486
        %v2553 = vunpack.c.l.b16 %v2487
        %v2554 = vunpack.c.l.b16 %v2488
        %v2555 = vunpack.c.l.b16 %v2489
        %v2556 = vunpack.c.l.b16 %v2490
        %v2557 = vunpack.c.l.b16 %v2491
        %v2558 = vunpack.c.l.b16 %v2492
        %v2559 = vunpack.c.l.b16 %v2493
        %v2560 = vunpack.c.l.b16 %v2494
        %v2561 = vunpack.c.l.b16 %v2495
        %v2562 = vunpack.c.l.b16 %v2496
        %v2563 = vunpack.c.l.b16 %v2497
        %v2564 = vunpack.c.l.b16 %v2498
        %v2565 = vunpack.c.l.b16 %v2499
        %v2566 = vunpack.c.l.b16 %v2500
        %v2567 = vunpack.c.l.b16 %v2501
        %v2568 = vunpack.c.l.b16 %v2502
        %v2569 = vunpack.c.l.b16 %v2503
        %v2570 = vunpack.c.l.b16 %v2504
        %v2571 = vunpack.c.l.b16 %v2505
        %v2572 = vunpack.c.l.b16 %v2506
        %v2573 = vunpack.c.l.b16 %v2507
        %v2574 = vunpack.c.l.b16 %v2508
        %v2575 = vunpack.c.l.b16 %v2509
        %v2576 = vunpack.c.l.b16 %v2510
        %v2577 = vunpack.c.l.b16 %v2511
        %v2578 = vunpack.c.l.b16 %v2512
        %v2579 = vunpack.c.l.b16 %v2513
        %v2580 = vpack.c.b16 %v2549, %v2548
        %v2581 = vpack.c.b16 %v2551, %v2550
        %v2582 = vpack.c.b16 %v2553, %v2552
        %v2583 = vpack.c.b16 %v2555, %v2554
        %v2584 = vpack.c.b16 %v2557, %v2556
        %v2585 = vpack.c.b16 %v2559, %v2558
        %v2586 = vpack.c.b16 %v2561, %v2560
        %v2587 = vpack.c.b16 %v2563, %v2562
        %v2588 = vpack.c.b16 %v2565, %v2564
        %v2589 = vpack.c.b16 %v2567, %v2566
        %v2590 = vpack.c.b16 %v2569, %v2568
        %v2591 = vpack.c.b16 %v2571, %v2570
        %v2592 = vpack.c.b16 %v2573, %v2572
        %v2593 = vpack.c.b16 %v2575, %v2574
        %v2594 = vpack.c.b16 %v2577, %v2576
        %v2595 = vpack.c.b16 %v2579, %v2578
        %v2597 = vsel %vm1735, %v2580, 0
        %v2600 = vsel %vm1735, %v2581, 0
        %v2603 = vsel %vm1735, %v2582, 0
        %v2606 = vsel %vm1735, %v2583, 0
        %v2609 = vsel %vm1735, %v2584, 0
        %v2612 = vsel %vm1735, %v2585, 0
        %v2615 = vsel %vm1735, %v2586, 0
        %v2618 = vsel %vm1735, %v2587, 0
        %v2621 = vsel %vm1735, %v2588, 0
        %v2624 = vsel %vm1735, %v2589, 0
        %v2627 = vsel %vm1735, %v2590, 0
        %v2630 = vsel %vm1735, %v2591, 0
        %v2633 = vsel %vm1735, %v2592, 0
        %v2636 = vsel %vm1735, %v2593, 0
        %v2639 = vsel %vm1735, %v2594, 0
        %v2642 = vsel %vm1735, %v2595, 0
        %v2645 = vsel %vm1784, %v2515, 0
        %2647 = vmatpush.bf16.msra.mxu0 0
        %2648 = vmatpush.bf16.msra.mxu0 0
        %2649 = vmatpush.bf16.msra.mxu0 0
        %2650 = vmatpush.bf16.msra.mxu0 0
        %2651 = vmatpush.bf16.msra.mxu0 0
        %2652 = vmatpush.bf16.msra.mxu0 0
        %2653 = vmatpush.bf16.msra.mxu0 0
        %2654 = vmatpush.bf16.msra.mxu0 %v2645
        %2655 = vmatmul.bf16.gmra.mxu0 %v2597
        %v2656 = vpop.f32.mrf.mxu0
        %v2657 = vadd.f32 0.0, %v2656
        %v2658 = vpop.f32.mrf.mxu0
        %v2659 = vadd.f32 0.0, %v2658
        %2660 = vmatmul.bf16.gmra.mxu0 %v2600
        %v2661 = vpop.f32.mrf.mxu0
        %v2662 = vadd.f32 0.0, %v2661
        %v2663 = vpop.f32.mrf.mxu0
        %v2664 = vadd.f32 0.0, %v2663
        %2665 = vmatmul.bf16.gmra.mxu0 %v2603
        %v2666 = vpop.f32.mrf.mxu0
        %v2667 = vadd.f32 0.0, %v2666
        %v2668 = vpop.f32.mrf.mxu0
        %v2669 = vadd.f32 0.0, %v2668
        %2670 = vmatmul.bf16.gmra.mxu0 %v2606
        %v2671 = vpop.f32.mrf.mxu0
        %v2672 = vadd.f32 0.0, %v2671
        %v2673 = vpop.f32.mrf.mxu0
        %v2674 = vadd.f32 0.0, %v2673
        %2675 = vmatmul.bf16.gmra.mxu0 %v2609
        %v2676 = vpop.f32.mrf.mxu0
        %v2677 = vadd.f32 0.0, %v2676
        %v2678 = vpop.f32.mrf.mxu0
        %v2679 = vadd.f32 0.0, %v2678
        %2680 = vmatmul.bf16.gmra.mxu0 %v2612
        %v2681 = vpop.f32.mrf.mxu0
        %v2682 = vadd.f32 0.0, %v2681
        %v2683 = vpop.f32.mrf.mxu0
        %v2684 = vadd.f32 0.0, %v2683
        %2685 = vmatmul.bf16.gmra.mxu0 %v2615
        %v2686 = vpop.f32.mrf.mxu0
        %v2687 = vadd.f32 0.0, %v2686
        %v2688 = vpop.f32.mrf.mxu0
        %v2689 = vadd.f32 0.0, %v2688
        %2690 = vmatmul.bf16.gmra.mxu0 %v2618
        %v2691 = vpop.f32.mrf.mxu0
        %v2692 = vadd.f32 0.0, %v2691
        %v2693 = vpop.f32.mrf.mxu0
        %v2694 = vadd.f32 0.0, %v2693
        %2695 = vmatmul.bf16.gmra.mxu0 %v2621
        %v2696 = vpop.f32.mrf.mxu0
        %v2697 = vadd.f32 0.0, %v2696
        %v2698 = vpop.f32.mrf.mxu0
        %v2699 = vadd.f32 0.0, %v2698
        %2700 = vmatmul.bf16.gmra.mxu0 %v2624
        %v2701 = vpop.f32.mrf.mxu0
        %v2702 = vadd.f32 0.0, %v2701
        %v2703 = vpop.f32.mrf.mxu0
        %v2704 = vadd.f32 0.0, %v2703
        %2705 = vmatmul.bf16.gmra.mxu0 %v2627
        %v2706 = vpop.f32.mrf.mxu0
        %v2707 = vadd.f32 0.0, %v2706
        %v2708 = vpop.f32.mrf.mxu0
        %v2709 = vadd.f32 0.0, %v2708
        %2710 = vmatmul.bf16.gmra.mxu0 %v2630
        %v2711 = vpop.f32.mrf.mxu0
        %v2712 = vadd.f32 0.0, %v2711
        %v2713 = vpop.f32.mrf.mxu0
        %v2714 = vadd.f32 0.0, %v2713
        %2715 = vmatmul.bf16.gmra.mxu0 %v2633
        %v2716 = vpop.f32.mrf.mxu0
        %v2717 = vadd.f32 0.0, %v2716
        %v2718 = vpop.f32.mrf.mxu0
        %v2719 = vadd.f32 0.0, %v2718
        %2720 = vmatmul.bf16.gmra.mxu0 %v2636
        %v2721 = vpop.f32.mrf.mxu0
        %v2722 = vadd.f32 0.0, %v2721
        %v2723 = vpop.f32.mrf.mxu0
        %v2724 = vadd.f32 0.0, %v2723
        %2725 = vmatmul.bf16.gmra.mxu0 %v2639
        %v2726 = vpop.f32.mrf.mxu0
        %v2727 = vadd.f32 0.0, %v2726
        %v2728 = vpop.f32.mrf.mxu0
        %v2729 = vadd.f32 0.0, %v2728
        %2730 = vmatmul.bf16.gmra.mxu0 %v2642
        %v2731 = vpop.f32.mrf.mxu0
        %v2732 = vadd.f32 0.0, %v2731
        %v2733 = vpop.f32.mrf.mxu0
        %v2734 = vadd.f32 0.0, %v2733
        %2735 = vdwg.mxu0
        %v2736 = vadd.f32 %v2450, %v2657
        %v2737 = vadd.f32 %v2451, %v2659
        %v2738 = vadd.f32 %v2452, %v2662
        %v2739 = vadd.f32 %v2453, %v2664
        %v2740 = vadd.f32 %v2454, %v2667
        %v2741 = vadd.f32 %v2455, %v2669
        %v2742 = vadd.f32 %v2456, %v2672
        %v2743 = vadd.f32 %v2457, %v2674
        %v2744 = vadd.f32 %v2458, %v2677
        %v2745 = vadd.f32 %v2459, %v2679
        %v2746 = vadd.f32 %v2460, %v2682
        %v2747 = vadd.f32 %v2461, %v2684
        %v2748 = vadd.f32 %v2462, %v2687
        %v2749 = vadd.f32 %v2463, %v2689
        %v2750 = vadd.f32 %v2464, %v2692
        %v2751 = vadd.f32 %v2465, %v2694
        %v2752 = vadd.f32 %v2466, %v2697
        %v2753 = vadd.f32 %v2467, %v2699
        %v2754 = vadd.f32 %v2468, %v2702
        %v2755 = vadd.f32 %v2469, %v2704
        %v2756 = vadd.f32 %v2470, %v2707
        %v2757 = vadd.f32 %v2471, %v2709
        %v2758 = vadd.f32 %v2472, %v2712
        %v2759 = vadd.f32 %v2473, %v2714
        %v2760 = vadd.f32 %v2474, %v2717
        %v2761 = vadd.f32 %v2475, %v2719
        %v2762 = vadd.f32 %v2476, %v2722
        %v2763 = vadd.f32 %v2477, %v2724
        %v2764 = vadd.f32 %v2478, %v2727
        %v2765 = vadd.f32 %v2479, %v2729
        %v2766 = vadd.f32 %v2480, %v2732
        %v2767 = vadd.f32 %v2481, %v2734
        %v2768 = vld [vmem:[%s1134] sm:$0xf]
        %v2769 = vld [vmem:[%s1134 + $0x4] sm:$0xf]
        %v2770 = vld [vmem:[%s1134 + $0x8] sm:$0x1]
        %v2771 = vld [vmem:[%s1134 + $0xc] sm:$0xf]
        %v2772 = vld [vmem:[%s1134 + $0x10] sm:$0xf]
        %v2773 = vld [vmem:[%s1134 + $0x14] sm:$0x1]
        %v2774 = vld [vmem:[%s1134 + $0x18] sm:$0xf]
        %v2775 = vld [vmem:[%s1134 + $0x1c] sm:$0xf]
        %v2776 = vld [vmem:[%s1134 + $0x20] sm:$0x1]
        %v2777 = vld [vmem:[%s1134 + $0x24] sm:$0xf]
        %v2778 = vld [vmem:[%s1134 + $0x28] sm:$0xf]
        %v2779 = vld [vmem:[%s1134 + $0x2c] sm:$0x1]
        %v2780 = vld [vmem:[%s1134 + $0x30] sm:$0xf]
        %v2781 = vld [vmem:[%s1134 + $0x34] sm:$0xf]
        %v2782 = vld [vmem:[%s1134 + $0x38] sm:$0x1]
        %v2783 = vld [vmem:[%s1134 + $0x3c] sm:$0xf]
        %v2784 = vld [vmem:[%s1134 + $0x40] sm:$0xf]
        %v2785 = vld [vmem:[%s1134 + $0x44] sm:$0x1]
        %v2786 = vld [vmem:[%s1134 + $0x48] sm:$0xf]
        %v2787 = vld [vmem:[%s1134 + $0x4c] sm:$0xf]
        %v2788 = vld [vmem:[%s1134 + $0x50] sm:$0x1]
        %v2789 = vld [vmem:[%s1134 + $0x54] sm:$0xf]
        %v2790 = vld [vmem:[%s1134 + $0x58] sm:$0xf]
        %v2791 = vld [vmem:[%s1134 + $0x5c] sm:$0x1]
        %v2792 = vld [vmem:[%s1134 + $0x60] sm:$0xf]
        %v2793 = vld [vmem:[%s1134 + $0x64] sm:$0xf]
        %v2794 = vld [vmem:[%s1134 + $0x68] sm:$0x1]
        %v2795 = vld [vmem:[%s1134 + $0x6c] sm:$0xf]
        %v2796 = vld [vmem:[%s1134 + $0x70] sm:$0xf]
        %v2797 = vld [vmem:[%s1134 + $0x74] sm:$0x1]
        %v2798 = vld [vmem:[%s1134 + $0x78] sm:$0xf]
        %v2799 = vld [vmem:[%s1134 + $0x7c] sm:$0xf]
        %v2800 = vld [vmem:[%s1134 + $0x80] sm:$0x1]
        %v2801 = vld [vmem:[%s1134 + $0x84] sm:$0xf]
        %v2802 = vld [vmem:[%s1134 + $0x88] sm:$0xf]
        %v2803 = vld [vmem:[%s1134 + $0x8c] sm:$0x1]
        %v2804 = vld [vmem:[%s1134 + $0x90] sm:$0xf]
        %v2805 = vld [vmem:[%s1134 + $0x94] sm:$0xf]
        %v2806 = vld [vmem:[%s1134 + $0x98] sm:$0x1]
        %v2807 = vld [vmem:[%s1134 + $0x9c] sm:$0xf]
        %v2808 = vld [vmem:[%s1134 + $0xa0] sm:$0xf]
        %v2809 = vld [vmem:[%s1134 + $0xa4] sm:$0x1]
        %v2810 = vld [vmem:[%s1134 + $0xa8] sm:$0xf]
        %v2811 = vld [vmem:[%s1134 + $0xac] sm:$0xf]
        %v2812 = vld [vmem:[%s1134 + $0xb0] sm:$0x1]
        %v2813 = vld [vmem:[%s1134 + $0xb4] sm:$0xf]
        %v2814 = vld [vmem:[%s1134 + $0xb8] sm:$0xf]
        %v2815 = vld [vmem:[%s1134 + $0xbc] sm:$0x1]
        %v2817 = vshrl.u32 %v2768, 16
        %v2819 = vrot.slane %v2817, 4
        %v2820 = vshll.u32 %v2768, 16
        %v2822 = vrot.slane %v2820, 5
        %v2823 = vor.u32 %v2819, %v2822
        %v2824 = vrot.slane %v2823, 4
        %v2826 = vshll.u32 %v2769, 16
        %v2828 = vrot.slane %v2826, 5
        %v2829 = vsel %vm1300, %v2824, %v2828
        %v2830 = vshrl.u32 %v2769, 16
        %v2832 = vrot.slane %v2830, 4
        %v2833 = vor.u32 %v2832, %v2828
        %v2834 = vrot.slane %v2833, 4
        %v2836 = vshll.u32 %v2770, 16
        %v2838 = vrot.slane %v2836, 5
        %v2839 = vsel %vm1300, %v2834, %v2838
        %v2841 = vshrl.u32 %v2771, 16
        %v2843 = vrot.slane %v2841, 4
        %v2844 = vshll.u32 %v2771, 16
        %v2846 = vrot.slane %v2844, 5
        %v2847 = vor.u32 %v2843, %v2846
        %v2848 = vrot.slane %v2847, 4
        %v2850 = vshll.u32 %v2772, 16
        %v2852 = vrot.slane %v2850, 5
        %v2853 = vsel %vm1300, %v2848, %v2852
        %v2854 = vshrl.u32 %v2772, 16
        %v2856 = vrot.slane %v2854, 4
        %v2857 = vor.u32 %v2856, %v2852
        %v2858 = vrot.slane %v2857, 4
        %v2860 = vshll.u32 %v2773, 16
        %v2862 = vrot.slane %v2860, 5
        %v2863 = vsel %vm1300, %v2858, %v2862
        %v2865 = vshrl.u32 %v2774, 16
        %v2867 = vrot.slane %v2865, 4
        %v2868 = vshll.u32 %v2774, 16
        %v2870 = vrot.slane %v2868, 5
        %v2871 = vor.u32 %v2867, %v2870
        %v2872 = vrot.slane %v2871, 4
        %v2874 = vshll.u32 %v2775, 16
        %v2876 = vrot.slane %v2874, 5
        %v2877 = vsel %vm1300, %v2872, %v2876
        %v2878 = vshrl.u32 %v2775, 16
        %v2880 = vrot.slane %v2878, 4
        %v2881 = vor.u32 %v2880, %v2876
        %v2882 = vrot.slane %v2881, 4
        %v2884 = vshll.u32 %v2776, 16
        %v2886 = vrot.slane %v2884, 5
        %v2887 = vsel %vm1300, %v2882, %v2886
        %v2889 = vshrl.u32 %v2777, 16
        %v2891 = vrot.slane %v2889, 4
        %v2892 = vshll.u32 %v2777, 16
        %v2894 = vrot.slane %v2892, 5
        %v2895 = vor.u32 %v2891, %v2894
        %v2896 = vrot.slane %v2895, 4
        %v2898 = vshll.u32 %v2778, 16
        %v2900 = vrot.slane %v2898, 5
        %v2901 = vsel %vm1300, %v2896, %v2900
        %v2902 = vshrl.u32 %v2778, 16
        %v2904 = vrot.slane %v2902, 4
        %v2905 = vor.u32 %v2904, %v2900
        %v2906 = vrot.slane %v2905, 4
        %v2908 = vshll.u32 %v2779, 16
        %v2910 = vrot.slane %v2908, 5
        %v2911 = vsel %vm1300, %v2906, %v2910
        %v2913 = vshrl.u32 %v2780, 16
        %v2915 = vrot.slane %v2913, 4
        %v2916 = vshll.u32 %v2780, 16
        %v2918 = vrot.slane %v2916, 5
        %v2919 = vor.u32 %v2915, %v2918
        %v2920 = vrot.slane %v2919, 4
        %v2922 = vshll.u32 %v2781, 16
        %v2924 = vrot.slane %v2922, 5
        %v2925 = vsel %vm1300, %v2920, %v2924
        %v2926 = vshrl.u32 %v2781, 16
        %v2928 = vrot.slane %v2926, 4
        %v2929 = vor.u32 %v2928, %v2924
        %v2930 = vrot.slane %v2929, 4
        %v2932 = vshll.u32 %v2782, 16
        %v2934 = vrot.slane %v2932, 5
        %v2935 = vsel %vm1300, %v2930, %v2934
        %v2937 = vshrl.u32 %v2783, 16
        %v2939 = vrot.slane %v2937, 4
        %v2940 = vshll.u32 %v2783, 16
        %v2942 = vrot.slane %v2940, 5
        %v2943 = vor.u32 %v2939, %v2942
        %v2944 = vrot.slane %v2943, 4
        %v2946 = vshll.u32 %v2784, 16
        %v2948 = vrot.slane %v2946, 5
        %v2949 = vsel %vm1300, %v2944, %v2948
        %v2950 = vshrl.u32 %v2784, 16
        %v2952 = vrot.slane %v2950, 4
        %v2953 = vor.u32 %v2952, %v2948
        %v2954 = vrot.slane %v2953, 4
        %v2956 = vshll.u32 %v2785, 16
        %v2958 = vrot.slane %v2956, 5
        %v2959 = vsel %vm1300, %v2954, %v2958
        %v2961 = vshrl.u32 %v2786, 16
        %v2963 = vrot.slane %v2961, 4
        %v2964 = vshll.u32 %v2786, 16
        %v2966 = vrot.slane %v2964, 5
        %v2967 = vor.u32 %v2963, %v2966
        %v2968 = vrot.slane %v2967, 4
        %v2970 = vshll.u32 %v2787, 16
        %v2972 = vrot.slane %v2970, 5
        %v2973 = vsel %vm1300, %v2968, %v2972
        %v2974 = vshrl.u32 %v2787, 16
        %v2976 = vrot.slane %v2974, 4
        %v2977 = vor.u32 %v2976, %v2972
        %v2978 = vrot.slane %v2977, 4
        %v2980 = vshll.u32 %v2788, 16
        %v2982 = vrot.slane %v2980, 5
        %v2983 = vsel %vm1300, %v2978, %v2982
        %v2985 = vshrl.u32 %v2789, 16
        %v2987 = vrot.slane %v2985, 4
        %v2988 = vshll.u32 %v2789, 16
        %v2990 = vrot.slane %v2988, 5
        %v2991 = vor.u32 %v2987, %v2990
        %v2992 = vrot.slane %v2991, 4
        %v2994 = vshll.u32 %v2790, 16
        %v2996 = vrot.slane %v2994, 5
        %v2997 = vsel %vm1300, %v2992, %v2996
        %v2998 = vshrl.u32 %v2790, 16
        %v3000 = vrot.slane %v2998, 4
        %v3001 = vor.u32 %v3000, %v2996
        %v3002 = vrot.slane %v3001, 4
        %v3004 = vshll.u32 %v2791, 16
        %v3006 = vrot.slane %v3004, 5
        %v3007 = vsel %vm1300, %v3002, %v3006
        %v3009 = vshrl.u32 %v2792, 16
        %v3011 = vrot.slane %v3009, 4
        %v3012 = vshll.u32 %v2792, 16
        %v3014 = vrot.slane %v3012, 5
        %v3015 = vor.u32 %v3011, %v3014
        %v3016 = vrot.slane %v3015, 4
        %v3018 = vshll.u32 %v2793, 16
        %v3020 = vrot.slane %v3018, 5
        %v3021 = vsel %vm1300, %v3016, %v3020
        %v3022 = vshrl.u32 %v2793, 16
        %v3024 = vrot.slane %v3022, 4
        %v3025 = vor.u32 %v3024, %v3020
        %v3026 = vrot.slane %v3025, 4
        %v3028 = vshll.u32 %v2794, 16
        %v3030 = vrot.slane %v3028, 5
        %v3031 = vsel %vm1300, %v3026, %v3030
        %v3033 = vshrl.u32 %v2795, 16
        %v3035 = vrot.slane %v3033, 4
        %v3036 = vshll.u32 %v2795, 16
        %v3038 = vrot.slane %v3036, 5
        %v3039 = vor.u32 %v3035, %v3038
        %v3040 = vrot.slane %v3039, 4
        %v3042 = vshll.u32 %v2796, 16
        %v3044 = vrot.slane %v3042, 5
        %v3045 = vsel %vm1300, %v3040, %v3044
        %v3046 = vshrl.u32 %v2796, 16
        %v3048 = vrot.slane %v3046, 4
        %v3049 = vor.u32 %v3048, %v3044
        %v3050 = vrot.slane %v3049, 4
        %v3052 = vshll.u32 %v2797, 16
        %v3054 = vrot.slane %v3052, 5
        %v3055 = vsel %vm1300, %v3050, %v3054
        %v3057 = vshrl.u32 %v2798, 16
        %v3059 = vrot.slane %v3057, 4
        %v3060 = vshll.u32 %v2798, 16
        %v3062 = vrot.slane %v3060, 5
        %v3063 = vor.u32 %v3059, %v3062
        %v3064 = vrot.slane %v3063, 4
        %v3066 = vshll.u32 %v2799, 16
        %v3068 = vrot.slane %v3066, 5
        %v3069 = vsel %vm1300, %v3064, %v3068
        %v3070 = vshrl.u32 %v2799, 16
        %v3072 = vrot.slane %v3070, 4
        %v3073 = vor.u32 %v3072, %v3068
        %v3074 = vrot.slane %v3073, 4
        %v3076 = vshll.u32 %v2800, 16
        %v3078 = vrot.slane %v3076, 5
        %v3079 = vsel %vm1300, %v3074, %v3078
        %v3081 = vshrl.u32 %v2801, 16
        %v3083 = vrot.slane %v3081, 4
        %v3084 = vshll.u32 %v2801, 16
        %v3086 = vrot.slane %v3084, 5
        %v3087 = vor.u32 %v3083, %v3086
        %v3088 = vrot.slane %v3087, 4
        %v3090 = vshll.u32 %v2802, 16
        %v3092 = vrot.slane %v3090, 5
        %v3093 = vsel %vm1300, %v3088, %v3092
        %v3094 = vshrl.u32 %v2802, 16
        %v3096 = vrot.slane %v3094, 4
        %v3097 = vor.u32 %v3096, %v3092
        %v3098 = vrot.slane %v3097, 4
        %v3100 = vshll.u32 %v2803, 16
        %v3102 = vrot.slane %v3100, 5
        %v3103 = vsel %vm1300, %v3098, %v3102
        %v3105 = vshrl.u32 %v2804, 16
        %v3107 = vrot.slane %v3105, 4
        %v3108 = vshll.u32 %v2804, 16
        %v3110 = vrot.slane %v3108, 5
        %v3111 = vor.u32 %v3107, %v3110
        %v3112 = vrot.slane %v3111, 4
        %v3114 = vshll.u32 %v2805, 16
        %v3116 = vrot.slane %v3114, 5
        %v3117 = vsel %vm1300, %v3112, %v3116
        %v3118 = vshrl.u32 %v2805, 16
        %v3120 = vrot.slane %v3118, 4
        %v3121 = vor.u32 %v3120, %v3116
        %v3122 = vrot.slane %v3121, 4
        %v3124 = vshll.u32 %v2806, 16
        %v3126 = vrot.slane %v3124, 5
        %v3127 = vsel %vm1300, %v3122, %v3126
        %v3129 = vshrl.u32 %v2807, 16
        %v3131 = vrot.slane %v3129, 4
        %v3132 = vshll.u32 %v2807, 16
        %v3134 = vrot.slane %v3132, 5
        %v3135 = vor.u32 %v3131, %v3134
        %v3136 = vrot.slane %v3135, 4
        %v3138 = vshll.u32 %v2808, 16
        %v3140 = vrot.slane %v3138, 5
        %v3141 = vsel %vm1300, %v3136, %v3140
        %v3142 = vshrl.u32 %v2808, 16
        %v3144 = vrot.slane %v3142, 4
        %v3145 = vor.u32 %v3144, %v3140
        %v3146 = vrot.slane %v3145, 4
        %v3148 = vshll.u32 %v2809, 16
        %v3150 = vrot.slane %v3148, 5
        %v3151 = vsel %vm1300, %v3146, %v3150
        %v3153 = vshrl.u32 %v2810, 16
        %v3155 = vrot.slane %v3153, 4
        %v3156 = vshll.u32 %v2810, 16
        %v3158 = vrot.slane %v3156, 5
        %v3159 = vor.u32 %v3155, %v3158
        %v3160 = vrot.slane %v3159, 4
        %v3162 = vshll.u32 %v2811, 16
        %v3164 = vrot.slane %v3162, 5
        %v3165 = vsel %vm1300, %v3160, %v3164
        %v3166 = vshrl.u32 %v2811, 16
        %v3168 = vrot.slane %v3166, 4
        %v3169 = vor.u32 %v3168, %v3164
        %v3170 = vrot.slane %v3169, 4
        %v3172 = vshll.u32 %v2812, 16
        %v3174 = vrot.slane %v3172, 5
        %v3175 = vsel %vm1300, %v3170, %v3174
        %v3177 = vshrl.u32 %v2813, 16
        %v3179 = vrot.slane %v3177, 4
        %v3180 = vshll.u32 %v2813, 16
        %v3182 = vrot.slane %v3180, 5
        %v3183 = vor.u32 %v3179, %v3182
        %v3184 = vrot.slane %v3183, 4
        %v3186 = vshll.u32 %v2814, 16
        %v3188 = vrot.slane %v3186, 5
        %v3189 = vsel %vm1300, %v3184, %v3188
        %v3190 = vshrl.u32 %v2814, 16
        %v3192 = vrot.slane %v3190, 4
        %v3193 = vor.u32 %v3192, %v3188
        %v3194 = vrot.slane %v3193, 4
        %v3196 = vshll.u32 %v2815, 16
        %v3198 = vrot.slane %v3196, 5
        %v3199 = vsel %vm1300, %v3194, %v3198
        %s3200 = scalar_lea.vmem %s3, 8
        %v3201 = vld [vmem:[%s3200] sm:$0x3]
        %v3202 = vunpack.c.l.b16 %v2829
        %v3203 = vunpack.c.l.b16 %v2839
        %v3204 = vunpack.c.l.b16 %v2853
        %v3205 = vunpack.c.l.b16 %v2863
        %v3206 = vunpack.c.l.b16 %v2877
        %v3207 = vunpack.c.l.b16 %v2887
        %v3208 = vunpack.c.l.b16 %v2901
        %v3209 = vunpack.c.l.b16 %v2911
        %v3210 = vunpack.c.l.b16 %v2925
        %v3211 = vunpack.c.l.b16 %v2935
        %v3212 = vunpack.c.l.b16 %v2949
        %v3213 = vunpack.c.l.b16 %v2959
        %v3214 = vunpack.c.l.b16 %v2973
        %v3215 = vunpack.c.l.b16 %v2983
        %v3216 = vunpack.c.l.b16 %v2997
        %v3217 = vunpack.c.l.b16 %v3007
        %v3218 = vunpack.c.l.b16 %v3021
        %v3219 = vunpack.c.l.b16 %v3031
        %v3220 = vunpack.c.l.b16 %v3045
        %v3221 = vunpack.c.l.b16 %v3055
        %v3222 = vunpack.c.l.b16 %v3069
        %v3223 = vunpack.c.l.b16 %v3079
        %v3224 = vunpack.c.l.b16 %v3093
        %v3225 = vunpack.c.l.b16 %v3103
        %v3226 = vunpack.c.l.b16 %v3117
        %v3227 = vunpack.c.l.b16 %v3127
        %v3228 = vunpack.c.l.b16 %v3141
        %v3229 = vunpack.c.l.b16 %v3151
        %v3230 = vunpack.c.l.b16 %v3165
        %v3231 = vunpack.c.l.b16 %v3175
        %v3232 = vunpack.c.l.b16 %v3189
        %v3233 = vunpack.c.l.b16 %v3199
        %v3234 = vpack.c.b16 %v3203, %v3202
        %v3235 = vpack.c.b16 %v3205, %v3204
        %v3236 = vpack.c.b16 %v3207, %v3206
        %v3237 = vpack.c.b16 %v3209, %v3208
        %v3238 = vpack.c.b16 %v3211, %v3210
        %v3239 = vpack.c.b16 %v3213, %v3212
        %v3240 = vpack.c.b16 %v3215, %v3214
        %v3241 = vpack.c.b16 %v3217, %v3216
        %v3242 = vpack.c.b16 %v3219, %v3218
        %v3243 = vpack.c.b16 %v3221, %v3220
        %v3244 = vpack.c.b16 %v3223, %v3222
        %v3245 = vpack.c.b16 %v3225, %v3224
        %v3246 = vpack.c.b16 %v3227, %v3226
        %v3247 = vpack.c.b16 %v3229, %v3228
        %v3248 = vpack.c.b16 %v3231, %v3230
        %v3249 = vpack.c.b16 %v3233, %v3232
        %v3251 = vsel %vm1735, %v3234, 0
        %v3254 = vsel %vm1735, %v3235, 0
        %v3257 = vsel %vm1735, %v3236, 0
        %v3260 = vsel %vm1735, %v3237, 0
        %v3263 = vsel %vm1735, %v3238, 0
        %v3266 = vsel %vm1735, %v3239, 0
        %v3269 = vsel %vm1735, %v3240, 0
        %v3272 = vsel %vm1735, %v3241, 0
        %v3275 = vsel %vm1735, %v3242, 0
        %v3278 = vsel %vm1735, %v3243, 0
        %v3281 = vsel %vm1735, %v3244, 0
        %v3284 = vsel %vm1735, %v3245, 0
        %v3287 = vsel %vm1735, %v3246, 0
        %v3290 = vsel %vm1735, %v3247, 0
        %v3293 = vsel %vm1735, %v3248, 0
        %v3296 = vsel %vm1735, %v3249, 0
        %v3299 = vsel %vm1784, %v3201, 0
        %3301 = vmatpush.bf16.msra.mxu0 0
        %3302 = vmatpush.bf16.msra.mxu0 0
        %3303 = vmatpush.bf16.msra.mxu0 0
        %3304 = vmatpush.bf16.msra.mxu0 0
        %3305 = vmatpush.bf16.msra.mxu0 0
        %3306 = vmatpush.bf16.msra.mxu0 0
        %3307 = vmatpush.bf16.msra.mxu0 0
        %3308 = vmatpush.bf16.msra.mxu0 %v3299
        %3309 = vmatmul.bf16.gmra.mxu0 %v3251
        %v3310 = vpop.f32.mrf.mxu0
        %v3311 = vadd.f32 0.0, %v3310
        %v3312 = vpop.f32.mrf.mxu0
        %v3313 = vadd.f32 0.0, %v3312
        %3314 = vmatmul.bf16.gmra.mxu0 %v3254
        %v3315 = vpop.f32.mrf.mxu0
        %v3316 = vadd.f32 0.0, %v3315
        %v3317 = vpop.f32.mrf.mxu0
        %v3318 = vadd.f32 0.0, %v3317
        %3319 = vmatmul.bf16.gmra.mxu0 %v3257
        %v3320 = vpop.f32.mrf.mxu0
        %v3321 = vadd.f32 0.0, %v3320
        %v3322 = vpop.f32.mrf.mxu0
        %v3323 = vadd.f32 0.0, %v3322
        %3324 = vmatmul.bf16.gmra.mxu0 %v3260
        %v3325 = vpop.f32.mrf.mxu0
        %v3326 = vadd.f32 0.0, %v3325
        %v3327 = vpop.f32.mrf.mxu0
        %v3328 = vadd.f32 0.0, %v3327
        %3329 = vmatmul.bf16.gmra.mxu0 %v3263
        %v3330 = vpop.f32.mrf.mxu0
        %v3331 = vadd.f32 0.0, %v3330
        %v3332 = vpop.f32.mrf.mxu0
        %v3333 = vadd.f32 0.0, %v3332
        %3334 = vmatmul.bf16.gmra.mxu0 %v3266
        %v3335 = vpop.f32.mrf.mxu0
        %v3336 = vadd.f32 0.0, %v3335
        %v3337 = vpop.f32.mrf.mxu0
        %v3338 = vadd.f32 0.0, %v3337
        %3339 = vmatmul.bf16.gmra.mxu0 %v3269
        %v3340 = vpop.f32.mrf.mxu0
        %v3341 = vadd.f32 0.0, %v3340
        %v3342 = vpop.f32.mrf.mxu0
        %v3343 = vadd.f32 0.0, %v3342
        %3344 = vmatmul.bf16.gmra.mxu0 %v3272
        %v3345 = vpop.f32.mrf.mxu0
        %v3346 = vadd.f32 0.0, %v3345
        %v3347 = vpop.f32.mrf.mxu0
        %v3348 = vadd.f32 0.0, %v3347
        %3349 = vmatmul.bf16.gmra.mxu0 %v3275
        %v3350 = vpop.f32.mrf.mxu0
        %v3351 = vadd.f32 0.0, %v3350
        %v3352 = vpop.f32.mrf.mxu0
        %v3353 = vadd.f32 0.0, %v3352
        %3354 = vmatmul.bf16.gmra.mxu0 %v3278
        %v3355 = vpop.f32.mrf.mxu0
        %v3356 = vadd.f32 0.0, %v3355
        %v3357 = vpop.f32.mrf.mxu0
        %v3358 = vadd.f32 0.0, %v3357
        %3359 = vmatmul.bf16.gmra.mxu0 %v3281
        %v3360 = vpop.f32.mrf.mxu0
        %v3361 = vadd.f32 0.0, %v3360
        %v3362 = vpop.f32.mrf.mxu0
        %v3363 = vadd.f32 0.0, %v3362
        %3364 = vmatmul.bf16.gmra.mxu0 %v3284
        %v3365 = vpop.f32.mrf.mxu0
        %v3366 = vadd.f32 0.0, %v3365
        %v3367 = vpop.f32.mrf.mxu0
        %v3368 = vadd.f32 0.0, %v3367
        %3369 = vmatmul.bf16.gmra.mxu0 %v3287
        %v3370 = vpop.f32.mrf.mxu0
        %v3371 = vadd.f32 0.0, %v3370
        %v3372 = vpop.f32.mrf.mxu0
        %v3373 = vadd.f32 0.0, %v3372
        %3374 = vmatmul.bf16.gmra.mxu0 %v3290
        %v3375 = vpop.f32.mrf.mxu0
        %v3376 = vadd.f32 0.0, %v3375
        %v3377 = vpop.f32.mrf.mxu0
        %v3378 = vadd.f32 0.0, %v3377
        %3379 = vmatmul.bf16.gmra.mxu0 %v3293
        %v3380 = vpop.f32.mrf.mxu0
        %v3381 = vadd.f32 0.0, %v3380
        %v3382 = vpop.f32.mrf.mxu0
        %v3383 = vadd.f32 0.0, %v3382
        %3384 = vmatmul.bf16.gmra.mxu0 %v3296
        %v3385 = vpop.f32.mrf.mxu0
        %v3386 = vadd.f32 0.0, %v3385
        %v3387 = vpop.f32.mrf.mxu0
        %v3388 = vadd.f32 0.0, %v3387
        %3389 = vdwg.mxu0
        %v3390 = vadd.f32 %v2736, %v3311
        %v3391 = vadd.f32 %v2737, %v3313
        %v3392 = vadd.f32 %v2738, %v3316
        %v3393 = vadd.f32 %v2739, %v3318
        %v3394 = vadd.f32 %v2740, %v3321
        %v3395 = vadd.f32 %v2741, %v3323
        %v3396 = vadd.f32 %v2742, %v3326
        %v3397 = vadd.f32 %v2743, %v3328
        %v3398 = vadd.f32 %v2744, %v3331
        %v3399 = vadd.f32 %v2745, %v3333
        %v3400 = vadd.f32 %v2746, %v3336
        %v3401 = vadd.f32 %v2747, %v3338
        %v3402 = vadd.f32 %v2748, %v3341
        %v3403 = vadd.f32 %v2749, %v3343
        %v3404 = vadd.f32 %v2750, %v3346
        %v3405 = vadd.f32 %v2751, %v3348
        %v3406 = vadd.f32 %v2752, %v3351
        %v3407 = vadd.f32 %v2753, %v3353
        %v3408 = vadd.f32 %v2754, %v3356
        %v3409 = vadd.f32 %v2755, %v3358
        %v3410 = vadd.f32 %v2756, %v3361
        %v3411 = vadd.f32 %v2757, %v3363
        %v3412 = vadd.f32 %v2758, %v3366
        %v3413 = vadd.f32 %v2759, %v3368
        %v3414 = vadd.f32 %v2760, %v3371
        %v3415 = vadd.f32 %v2761, %v3373
        %v3416 = vadd.f32 %v2762, %v3376
        %v3417 = vadd.f32 %v2763, %v3378
        %v3418 = vadd.f32 %v2764, %v3381
        %v3419 = vadd.f32 %v2765, %v3383
        %v3420 = vadd.f32 %v2766, %v3386
        %v3421 = vadd.f32 %v2767, %v3388
        %v3422 = vld [vmem:[%s1134] sm:$0xe]
        %v3423 = vld [vmem:[%s1134 + $0xc] sm:$0xe]
        %v3424 = vld [vmem:[%s1134 + $0x18] sm:$0xe]
        %v3425 = vld [vmem:[%s1134 + $0x24] sm:$0xe]
        %v3426 = vld [vmem:[%s1134 + $0x30] sm:$0xe]
        %v3427 = vld [vmem:[%s1134 + $0x3c] sm:$0xe]
        %v3428 = vld [vmem:[%s1134 + $0x48] sm:$0xe]
        %v3429 = vld [vmem:[%s1134 + $0x54] sm:$0xe]
        %v3430 = vld [vmem:[%s1134 + $0x60] sm:$0xe]
        %v3431 = vld [vmem:[%s1134 + $0x6c] sm:$0xe]
        %v3432 = vld [vmem:[%s1134 + $0x78] sm:$0xe]
        %v3433 = vld [vmem:[%s1134 + $0x84] sm:$0xe]
        %v3434 = vld [vmem:[%s1134 + $0x90] sm:$0xe]
        %v3435 = vld [vmem:[%s1134 + $0x9c] sm:$0xe]
        %v3436 = vld [vmem:[%s1134 + $0xa8] sm:$0xe]
        %v3437 = vld [vmem:[%s1134 + $0xb4] sm:$0xe]
        %v3486 = vrot.slane %v3422, 5
        %v3487 = vrot.slane %v3486, 4
        %v3488 = vrot.slane %v2769, 5
        %v3489 = vsel %vm2147, %v3487, %v3488
        %v3490 = vrot.slane %v3488, 4
        %v3491 = vrot.slane %v2770, 5
        %v3492 = vsel %vm2147, %v3490, %v3491
        %v3493 = vrot.slane %v3423, 5
        %v3494 = vrot.slane %v3493, 4
        %v3495 = vrot.slane %v2772, 5
        %v3496 = vsel %vm2147, %v3494, %v3495
        %v3497 = vrot.slane %v3495, 4
        %v3498 = vrot.slane %v2773, 5
        %v3499 = vsel %vm2147, %v3497, %v3498
        %v3500 = vrot.slane %v3424, 5
        %v3501 = vrot.slane %v3500, 4
        %v3502 = vrot.slane %v2775, 5
        %v3503 = vsel %vm2147, %v3501, %v3502
        %v3504 = vrot.slane %v3502, 4
        %v3505 = vrot.slane %v2776, 5
        %v3506 = vsel %vm2147, %v3504, %v3505
        %v3507 = vrot.slane %v3425, 5
        %v3508 = vrot.slane %v3507, 4
        %v3509 = vrot.slane %v2778, 5
        %v3510 = vsel %vm2147, %v3508, %v3509
        %v3511 = vrot.slane %v3509, 4
        %v3512 = vrot.slane %v2779, 5
        %v3513 = vsel %vm2147, %v3511, %v3512
        %v3514 = vrot.slane %v3426, 5
        %v3515 = vrot.slane %v3514, 4
        %v3516 = vrot.slane %v2781, 5
        %v3517 = vsel %vm2147, %v3515, %v3516
        %v3518 = vrot.slane %v3516, 4
        %v3519 = vrot.slane %v2782, 5
        %v3520 = vsel %vm2147, %v3518, %v3519
        %v3521 = vrot.slane %v3427, 5
        %v3522 = vrot.slane %v3521, 4
        %v3523 = vrot.slane %v2784, 5
        %v3524 = vsel %vm2147, %v3522, %v3523
        %v3525 = vrot.slane %v3523, 4
        %v3526 = vrot.slane %v2785, 5
        %v3527 = vsel %vm2147, %v3525, %v3526
        %v3528 = vrot.slane %v3428, 5
        %v3529 = vrot.slane %v3528, 4
        %v3530 = vrot.slane %v2787, 5
        %v3531 = vsel %vm2147, %v3529, %v3530
        %v3532 = vrot.slane %v3530, 4
        %v3533 = vrot.slane %v2788, 5
        %v3534 = vsel %vm2147, %v3532, %v3533
        %v3535 = vrot.slane %v3429, 5
        %v3536 = vrot.slane %v3535, 4
        %v3537 = vrot.slane %v2790, 5
        %v3538 = vsel %vm2147, %v3536, %v3537
        %v3539 = vrot.slane %v3537, 4
        %v3540 = vrot.slane %v2791, 5
        %v3541 = vsel %vm2147, %v3539, %v3540
        %v3542 = vrot.slane %v3430, 5
        %v3543 = vrot.slane %v3542, 4
        %v3544 = vrot.slane %v2793, 5
        %v3545 = vsel %vm2147, %v3543, %v3544
        %v3546 = vrot.slane %v3544, 4
        %v3547 = vrot.slane %v2794, 5
        %v3548 = vsel %vm2147, %v3546, %v3547
        %v3549 = vrot.slane %v3431, 5
        %v3550 = vrot.slane %v3549, 4
        %v3551 = vrot.slane %v2796, 5
        %v3552 = vsel %vm2147, %v3550, %v3551
        %v3553 = vrot.slane %v3551, 4
        %v3554 = vrot.slane %v2797, 5
        %v3555 = vsel %vm2147, %v3553, %v3554
        %v3556 = vrot.slane %v3432, 5
        %v3557 = vrot.slane %v3556, 4
        %v3558 = vrot.slane %v2799, 5
        %v3559 = vsel %vm2147, %v3557, %v3558
        %v3560 = vrot.slane %v3558, 4
        %v3561 = vrot.slane %v2800, 5
        %v3562 = vsel %vm2147, %v3560, %v3561
        %v3563 = vrot.slane %v3433, 5
        %v3564 = vrot.slane %v3563, 4
        %v3565 = vrot.slane %v2802, 5
        %v3566 = vsel %vm2147, %v3564, %v3565
        %v3567 = vrot.slane %v3565, 4
        %v3568 = vrot.slane %v2803, 5
        %v3569 = vsel %vm2147, %v3567, %v3568
        %v3570 = vrot.slane %v3434, 5
        %v3571 = vrot.slane %v3570, 4
        %v3572 = vrot.slane %v2805, 5
        %v3573 = vsel %vm2147, %v3571, %v3572
        %v3574 = vrot.slane %v3572, 4
        %v3575 = vrot.slane %v2806, 5
        %v3576 = vsel %vm2147, %v3574, %v3575
        %v3577 = vrot.slane %v3435, 5
        %v3578 = vrot.slane %v3577, 4
        %v3579 = vrot.slane %v2808, 5
        %v3580 = vsel %vm2147, %v3578, %v3579
        %v3581 = vrot.slane %v3579, 4
        %v3582 = vrot.slane %v2809, 5
        %v3583 = vsel %vm2147, %v3581, %v3582
        %v3584 = vrot.slane %v3436, 5
        %v3585 = vrot.slane %v3584, 4
        %v3586 = vrot.slane %v2811, 5
        %v3587 = vsel %vm2147, %v3585, %v3586
        %v3588 = vrot.slane %v3586, 4
        %v3589 = vrot.slane %v2812, 5
        %v3590 = vsel %vm2147, %v3588, %v3589
        %v3591 = vrot.slane %v3437, 5
        %v3592 = vrot.slane %v3591, 4
        %v3593 = vrot.slane %v2814, 5
        %v3594 = vsel %vm2147, %v3592, %v3593
        %v3595 = vrot.slane %v3593, 4
        %v3596 = vrot.slane %v2815, 5
        %v3597 = vsel %vm2147, %v3595, %v3596
        %s3598 = scalar_lea.vmem %s3, 10
        %v3599 = vld [vmem:[%s3598] sm:$0x3]
        %v3600 = vunpack.c.l.b16 %v3489
        %v3601 = vunpack.c.l.b16 %v3492
        %v3602 = vunpack.c.l.b16 %v3496
        %v3603 = vunpack.c.l.b16 %v3499
        %v3604 = vunpack.c.l.b16 %v3503
        %v3605 = vunpack.c.l.b16 %v3506
        %v3606 = vunpack.c.l.b16 %v3510
        %v3607 = vunpack.c.l.b16 %v3513
        %v3608 = vunpack.c.l.b16 %v3517
        %v3609 = vunpack.c.l.b16 %v3520
        %v3610 = vunpack.c.l.b16 %v3524
        %v3611 = vunpack.c.l.b16 %v3527
        %v3612 = vunpack.c.l.b16 %v3531
        %v3613 = vunpack.c.l.b16 %v3534
        %v3614 = vunpack.c.l.b16 %v3538
        %v3615 = vunpack.c.l.b16 %v3541
        %v3616 = vunpack.c.l.b16 %v3545
        %v3617 = vunpack.c.l.b16 %v3548
        %v3618 = vunpack.c.l.b16 %v3552
        %v3619 = vunpack.c.l.b16 %v3555
        %v3620 = vunpack.c.l.b16 %v3559
        %v3621 = vunpack.c.l.b16 %v3562
        %v3622 = vunpack.c.l.b16 %v3566
        %v3623 = vunpack.c.l.b16 %v3569
        %v3624 = vunpack.c.l.b16 %v3573
        %v3625 = vunpack.c.l.b16 %v3576
        %v3626 = vunpack.c.l.b16 %v3580
        %v3627 = vunpack.c.l.b16 %v3583
        %v3628 = vunpack.c.l.b16 %v3587
        %v3629 = vunpack.c.l.b16 %v3590
        %v3630 = vunpack.c.l.b16 %v3594
        %v3631 = vunpack.c.l.b16 %v3597
        %v3632 = vpack.c.b16 %v3601, %v3600
        %v3633 = vpack.c.b16 %v3603, %v3602
        %v3634 = vpack.c.b16 %v3605, %v3604
        %v3635 = vpack.c.b16 %v3607, %v3606
        %v3636 = vpack.c.b16 %v3609, %v3608
        %v3637 = vpack.c.b16 %v3611, %v3610
        %v3638 = vpack.c.b16 %v3613, %v3612
        %v3639 = vpack.c.b16 %v3615, %v3614
        %v3640 = vpack.c.b16 %v3617, %v3616
        %v3641 = vpack.c.b16 %v3619, %v3618
        %v3642 = vpack.c.b16 %v3621, %v3620
        %v3643 = vpack.c.b16 %v3623, %v3622
        %v3644 = vpack.c.b16 %v3625, %v3624
        %v3645 = vpack.c.b16 %v3627, %v3626
        %v3646 = vpack.c.b16 %v3629, %v3628
        %v3647 = vpack.c.b16 %v3631, %v3630
        %v3649 = vsel %vm1735, %v3632, 0
        %v3652 = vsel %vm1735, %v3633, 0
        %v3655 = vsel %vm1735, %v3634, 0
        %v3658 = vsel %vm1735, %v3635, 0
        %v3661 = vsel %vm1735, %v3636, 0
        %v3664 = vsel %vm1735, %v3637, 0
        %v3667 = vsel %vm1735, %v3638, 0
        %v3670 = vsel %vm1735, %v3639, 0
        %v3673 = vsel %vm1735, %v3640, 0
        %v3676 = vsel %vm1735, %v3641, 0
        %v3679 = vsel %vm1735, %v3642, 0
        %v3682 = vsel %vm1735, %v3643, 0
        %v3685 = vsel %vm1735, %v3644, 0
        %v3688 = vsel %vm1735, %v3645, 0
        %v3691 = vsel %vm1735, %v3646, 0
        %v3694 = vsel %vm1735, %v3647, 0
        %v3697 = vsel %vm1784, %v3599, 0
        %3699 = vmatpush.bf16.msra.mxu0 0
        %3700 = vmatpush.bf16.msra.mxu0 0
        %3701 = vmatpush.bf16.msra.mxu0 0
        %3702 = vmatpush.bf16.msra.mxu0 0
        %3703 = vmatpush.bf16.msra.mxu0 0
        %3704 = vmatpush.bf16.msra.mxu0 0
        %3705 = vmatpush.bf16.msra.mxu0 0
        %3706 = vmatpush.bf16.msra.mxu0 %v3697
        %3707 = vmatmul.bf16.gmra.mxu0 %v3649
        %v3708 = vpop.f32.mrf.mxu0
        %v3709 = vadd.f32 0.0, %v3708
        %v3710 = vpop.f32.mrf.mxu0
        %v3711 = vadd.f32 0.0, %v3710
        %3712 = vmatmul.bf16.gmra.mxu0 %v3652
        %v3713 = vpop.f32.mrf.mxu0
        %v3714 = vadd.f32 0.0, %v3713
        %v3715 = vpop.f32.mrf.mxu0
        %v3716 = vadd.f32 0.0, %v3715
        %3717 = vmatmul.bf16.gmra.mxu0 %v3655
        %v3718 = vpop.f32.mrf.mxu0
        %v3719 = vadd.f32 0.0, %v3718
        %v3720 = vpop.f32.mrf.mxu0
        %v3721 = vadd.f32 0.0, %v3720
        %3722 = vmatmul.bf16.gmra.mxu0 %v3658
        %v3723 = vpop.f32.mrf.mxu0
        %v3724 = vadd.f32 0.0, %v3723
        %v3725 = vpop.f32.mrf.mxu0
        %v3726 = vadd.f32 0.0, %v3725
        %3727 = vmatmul.bf16.gmra.mxu0 %v3661
        %v3728 = vpop.f32.mrf.mxu0
        %v3729 = vadd.f32 0.0, %v3728
        %v3730 = vpop.f32.mrf.mxu0
        %v3731 = vadd.f32 0.0, %v3730
        %3732 = vmatmul.bf16.gmra.mxu0 %v3664
        %v3733 = vpop.f32.mrf.mxu0
        %v3734 = vadd.f32 0.0, %v3733
        %v3735 = vpop.f32.mrf.mxu0
        %v3736 = vadd.f32 0.0, %v3735
        %3737 = vmatmul.bf16.gmra.mxu0 %v3667
        %v3738 = vpop.f32.mrf.mxu0
        %v3739 = vadd.f32 0.0, %v3738
        %v3740 = vpop.f32.mrf.mxu0
        %v3741 = vadd.f32 0.0, %v3740
        %3742 = vmatmul.bf16.gmra.mxu0 %v3670
        %v3743 = vpop.f32.mrf.mxu0
        %v3744 = vadd.f32 0.0, %v3743
        %v3745 = vpop.f32.mrf.mxu0
        %v3746 = vadd.f32 0.0, %v3745
        %3747 = vmatmul.bf16.gmra.mxu0 %v3673
        %v3748 = vpop.f32.mrf.mxu0
        %v3749 = vadd.f32 0.0, %v3748
        %v3750 = vpop.f32.mrf.mxu0
        %v3751 = vadd.f32 0.0, %v3750
        %3752 = vmatmul.bf16.gmra.mxu0 %v3676
        %v3753 = vpop.f32.mrf.mxu0
        %v3754 = vadd.f32 0.0, %v3753
        %v3755 = vpop.f32.mrf.mxu0
        %v3756 = vadd.f32 0.0, %v3755
        %3757 = vmatmul.bf16.gmra.mxu0 %v3679
        %v3758 = vpop.f32.mrf.mxu0
        %v3759 = vadd.f32 0.0, %v3758
        %v3760 = vpop.f32.mrf.mxu0
        %v3761 = vadd.f32 0.0, %v3760
        %3762 = vmatmul.bf16.gmra.mxu0 %v3682
        %v3763 = vpop.f32.mrf.mxu0
        %v3764 = vadd.f32 0.0, %v3763
        %v3765 = vpop.f32.mrf.mxu0
        %v3766 = vadd.f32 0.0, %v3765
        %3767 = vmatmul.bf16.gmra.mxu0 %v3685
        %v3768 = vpop.f32.mrf.mxu0
        %v3769 = vadd.f32 0.0, %v3768
        %v3770 = vpop.f32.mrf.mxu0
        %v3771 = vadd.f32 0.0, %v3770
        %3772 = vmatmul.bf16.gmra.mxu0 %v3688
        %v3773 = vpop.f32.mrf.mxu0
        %v3774 = vadd.f32 0.0, %v3773
        %v3775 = vpop.f32.mrf.mxu0
        %v3776 = vadd.f32 0.0, %v3775
        %3777 = vmatmul.bf16.gmra.mxu0 %v3691
        %v3778 = vpop.f32.mrf.mxu0
        %v3779 = vadd.f32 0.0, %v3778
        %v3780 = vpop.f32.mrf.mxu0
        %v3781 = vadd.f32 0.0, %v3780
        %3782 = vmatmul.bf16.gmra.mxu0 %v3694
        %v3783 = vpop.f32.mrf.mxu0
        %v3784 = vadd.f32 0.0, %v3783
        %v3785 = vpop.f32.mrf.mxu0
        %v3786 = vadd.f32 0.0, %v3785
        %3787 = vdwg.mxu0
        %v3788 = vadd.f32 %v3390, %v3709
        %v3789 = vadd.f32 %v3391, %v3711
        %v3790 = vadd.f32 %v3392, %v3714
        %v3791 = vadd.f32 %v3393, %v3716
        %v3792 = vadd.f32 %v3394, %v3719
        %v3793 = vadd.f32 %v3395, %v3721
        %v3794 = vadd.f32 %v3396, %v3724
        %v3795 = vadd.f32 %v3397, %v3726
        %v3796 = vadd.f32 %v3398, %v3729
        %v3797 = vadd.f32 %v3399, %v3731
        %v3798 = vadd.f32 %v3400, %v3734
        %v3799 = vadd.f32 %v3401, %v3736
        %v3800 = vadd.f32 %v3402, %v3739
        %v3801 = vadd.f32 %v3403, %v3741
        %v3802 = vadd.f32 %v3404, %v3744
        %v3803 = vadd.f32 %v3405, %v3746
        %v3804 = vadd.f32 %v3406, %v3749
        %v3805 = vadd.f32 %v3407, %v3751
        %v3806 = vadd.f32 %v3408, %v3754
        %v3807 = vadd.f32 %v3409, %v3756
        %v3808 = vadd.f32 %v3410, %v3759
        %v3809 = vadd.f32 %v3411, %v3761
        %v3810 = vadd.f32 %v3412, %v3764
        %v3811 = vadd.f32 %v3413, %v3766
        %v3812 = vadd.f32 %v3414, %v3769
        %v3813 = vadd.f32 %v3415, %v3771
        %v3814 = vadd.f32 %v3416, %v3774
        %v3815 = vadd.f32 %v3417, %v3776
        %v3816 = vadd.f32 %v3418, %v3779
        %v3817 = vadd.f32 %v3419, %v3781
        %v3818 = vadd.f32 %v3420, %v3784
        %v3819 = vadd.f32 %v3421, %v3786
        %s3820 = scalar_lea.vmem [#allocation2], 24
        %v3821 = vld [vmem:[%s3820] sm:$0xf]
        %v3822 = vld [vmem:[%s3820 + $0x4] sm:$0xf]
        %v3823 = vld [vmem:[%s3820 + $0xc] sm:$0xf]
        %v3824 = vld [vmem:[%s3820 + $0x10] sm:$0xf]
        %v3825 = vld [vmem:[%s3820 + $0x18] sm:$0xf]
        %v3826 = vld [vmem:[%s3820 + $0x1c] sm:$0xf]
        %v3827 = vld [vmem:[%s3820 + $0x24] sm:$0xf]
        %v3828 = vld [vmem:[%s3820 + $0x28] sm:$0xf]
        %v3829 = vld [vmem:[%s3820 + $0x30] sm:$0xf]
        %v3830 = vld [vmem:[%s3820 + $0x34] sm:$0xf]
        %v3831 = vld [vmem:[%s3820 + $0x3c] sm:$0xf]
        %v3832 = vld [vmem:[%s3820 + $0x40] sm:$0xf]
        %v3833 = vld [vmem:[%s3820 + $0x48] sm:$0xf]
        %v3834 = vld [vmem:[%s3820 + $0x4c] sm:$0xf]
        %v3835 = vld [vmem:[%s3820 + $0x54] sm:$0xf]
        %v3836 = vld [vmem:[%s3820 + $0x58] sm:$0xf]
        %v3837 = vld [vmem:[%s3820 + $0x60] sm:$0xf]
        %v3838 = vld [vmem:[%s3820 + $0x64] sm:$0xf]
        %v3839 = vld [vmem:[%s3820 + $0x6c] sm:$0xf]
        %v3840 = vld [vmem:[%s3820 + $0x70] sm:$0xf]
        %v3841 = vld [vmem:[%s3820 + $0x78] sm:$0xf]
        %v3842 = vld [vmem:[%s3820 + $0x7c] sm:$0xf]
        %v3843 = vld [vmem:[%s3820 + $0x84] sm:$0xf]
        %v3844 = vld [vmem:[%s3820 + $0x88] sm:$0xf]
        %v3845 = vld [vmem:[%s3820 + $0x90] sm:$0xf]
        %v3846 = vld [vmem:[%s3820 + $0x94] sm:$0xf]
        %v3847 = vld [vmem:[%s3820 + $0x9c] sm:$0xf]
        %v3848 = vld [vmem:[%s3820 + $0xa0] sm:$0xf]
        %v3849 = vld [vmem:[%s3820 + $0xa8] sm:$0xf]
        %v3850 = vld [vmem:[%s3820 + $0xac] sm:$0xf]
        %v3851 = vld [vmem:[%s3820 + $0xb4] sm:$0xf]
        %v3852 = vld [vmem:[%s3820 + $0xb8] sm:$0xf]
        %s3853 = scalar_lea.vmem %s3, 12
        %v3854 = vld [vmem:[%s3853] sm:$0x3]
        %v3887 = vunpack.c.l.b16 %v3821
        %v3888 = vunpack.c.l.b16 %v3822
        %v3889 = vunpack.c.l.b16 %v3823
        %v3890 = vunpack.c.l.b16 %v3824
        %v3891 = vunpack.c.l.b16 %v3825
        %v3892 = vunpack.c.l.b16 %v3826
        %v3893 = vunpack.c.l.b16 %v3827
        %v3894 = vunpack.c.l.b16 %v3828
        %v3895 = vunpack.c.l.b16 %v3829
        %v3896 = vunpack.c.l.b16 %v3830
        %v3897 = vunpack.c.l.b16 %v3831
        %v3898 = vunpack.c.l.b16 %v3832
        %v3899 = vunpack.c.l.b16 %v3833
        %v3900 = vunpack.c.l.b16 %v3834
        %v3901 = vunpack.c.l.b16 %v3835
        %v3902 = vunpack.c.l.b16 %v3836
        %v3903 = vunpack.c.l.b16 %v3837
        %v3904 = vunpack.c.l.b16 %v3838
        %v3905 = vunpack.c.l.b16 %v3839
        %v3906 = vunpack.c.l.b16 %v3840
        %v3907 = vunpack.c.l.b16 %v3841
        %v3908 = vunpack.c.l.b16 %v3842
        %v3909 = vunpack.c.l.b16 %v3843
        %v3910 = vunpack.c.l.b16 %v3844
        %v3911 = vunpack.c.l.b16 %v3845
        %v3912 = vunpack.c.l.b16 %v3846
        %v3913 = vunpack.c.l.b16 %v3847
        %v3914 = vunpack.c.l.b16 %v3848
        %v3915 = vunpack.c.l.b16 %v3849
        %v3916 = vunpack.c.l.b16 %v3850
        %v3917 = vunpack.c.l.b16 %v3851
        %v3918 = vunpack.c.l.b16 %v3852
        %v3919 = vpack.c.b16 %v3888, %v3887
        %v3920 = vpack.c.b16 %v3890, %v3889
        %v3921 = vpack.c.b16 %v3892, %v3891
        %v3922 = vpack.c.b16 %v3894, %v3893
        %v3923 = vpack.c.b16 %v3896, %v3895
        %v3924 = vpack.c.b16 %v3898, %v3897
        %v3925 = vpack.c.b16 %v3900, %v3899
        %v3926 = vpack.c.b16 %v3902, %v3901
        %v3927 = vpack.c.b16 %v3904, %v3903
        %v3928 = vpack.c.b16 %v3906, %v3905
        %v3929 = vpack.c.b16 %v3908, %v3907
        %v3930 = vpack.c.b16 %v3910, %v3909
        %v3931 = vpack.c.b16 %v3912, %v3911
        %v3932 = vpack.c.b16 %v3914, %v3913
        %v3933 = vpack.c.b16 %v3916, %v3915
        %v3934 = vpack.c.b16 %v3918, %v3917
        %v3936 = vsel %vm1735, %v3919, 0
        %v3939 = vsel %vm1735, %v3920, 0
        %v3942 = vsel %vm1735, %v3921, 0
        %v3945 = vsel %vm1735, %v3922, 0
        %v3948 = vsel %vm1735, %v3923, 0
        %v3951 = vsel %vm1735, %v3924, 0
        %v3954 = vsel %vm1735, %v3925, 0
        %v3957 = vsel %vm1735, %v3926, 0
        %v3960 = vsel %vm1735, %v3927, 0
        %v3963 = vsel %vm1735, %v3928, 0
        %v3966 = vsel %vm1735, %v3929, 0
        %v3969 = vsel %vm1735, %v3930, 0
        %v3972 = vsel %vm1735, %v3931, 0
        %v3975 = vsel %vm1735, %v3932, 0
        %v3978 = vsel %vm1735, %v3933, 0
        %v3981 = vsel %vm1735, %v3934, 0
        %v3984 = vsel %vm1784, %v3854, 0
        %3986 = vmatpush.bf16.msra.mxu0 0
        %3987 = vmatpush.bf16.msra.mxu0 0
        %3988 = vmatpush.bf16.msra.mxu0 0
        %3989 = vmatpush.bf16.msra.mxu0 0
        %3990 = vmatpush.bf16.msra.mxu0 0
        %3991 = vmatpush.bf16.msra.mxu0 0
        %3992 = vmatpush.bf16.msra.mxu0 0
        %3993 = vmatpush.bf16.msra.mxu0 %v3984
        %3994 = vmatmul.bf16.gmra.mxu0 %v3936
        %v3995 = vpop.f32.mrf.mxu0
        %v3996 = vadd.f32 0.0, %v3995
        %v3997 = vpop.f32.mrf.mxu0
        %v3998 = vadd.f32 0.0, %v3997
        %3999 = vmatmul.bf16.gmra.mxu0 %v3939
        %v4000 = vpop.f32.mrf.mxu0
        %v4001 = vadd.f32 0.0, %v4000
        %v4002 = vpop.f32.mrf.mxu0
        %v4003 = vadd.f32 0.0, %v4002
        %4004 = vmatmul.bf16.gmra.mxu0 %v3942
        %v4005 = vpop.f32.mrf.mxu0
        %v4006 = vadd.f32 0.0, %v4005
        %v4007 = vpop.f32.mrf.mxu0
        %v4008 = vadd.f32 0.0, %v4007
        %4009 = vmatmul.bf16.gmra.mxu0 %v3945
        %v4010 = vpop.f32.mrf.mxu0
        %v4011 = vadd.f32 0.0, %v4010
        %v4012 = vpop.f32.mrf.mxu0
        %v4013 = vadd.f32 0.0, %v4012
        %4014 = vmatmul.bf16.gmra.mxu0 %v3948
        %v4015 = vpop.f32.mrf.mxu0
        %v4016 = vadd.f32 0.0, %v4015
        %v4017 = vpop.f32.mrf.mxu0
        %v4018 = vadd.f32 0.0, %v4017
        %4019 = vmatmul.bf16.gmra.mxu0 %v3951
        %v4020 = vpop.f32.mrf.mxu0
        %v4021 = vadd.f32 0.0, %v4020
        %v4022 = vpop.f32.mrf.mxu0
        %v4023 = vadd.f32 0.0, %v4022
        %4024 = vmatmul.bf16.gmra.mxu0 %v3954
        %v4025 = vpop.f32.mrf.mxu0
        %v4026 = vadd.f32 0.0, %v4025
        %v4027 = vpop.f32.mrf.mxu0
        %v4028 = vadd.f32 0.0, %v4027
        %4029 = vmatmul.bf16.gmra.mxu0 %v3957
        %v4030 = vpop.f32.mrf.mxu0
        %v4031 = vadd.f32 0.0, %v4030
        %v4032 = vpop.f32.mrf.mxu0
        %v4033 = vadd.f32 0.0, %v4032
        %4034 = vmatmul.bf16.gmra.mxu0 %v3960
        %v4035 = vpop.f32.mrf.mxu0
        %v4036 = vadd.f32 0.0, %v4035
        %v4037 = vpop.f32.mrf.mxu0
        %v4038 = vadd.f32 0.0, %v4037
        %4039 = vmatmul.bf16.gmra.mxu0 %v3963
        %v4040 = vpop.f32.mrf.mxu0
        %v4041 = vadd.f32 0.0, %v4040
        %v4042 = vpop.f32.mrf.mxu0
        %v4043 = vadd.f32 0.0, %v4042
        %4044 = vmatmul.bf16.gmra.mxu0 %v3966
        %v4045 = vpop.f32.mrf.mxu0
        %v4046 = vadd.f32 0.0, %v4045
        %v4047 = vpop.f32.mrf.mxu0
        %v4048 = vadd.f32 0.0, %v4047
        %4049 = vmatmul.bf16.gmra.mxu0 %v3969
        %v4050 = vpop.f32.mrf.mxu0
        %v4051 = vadd.f32 0.0, %v4050
        %v4052 = vpop.f32.mrf.mxu0
        %v4053 = vadd.f32 0.0, %v4052
        %4054 = vmatmul.bf16.gmra.mxu0 %v3972
        %v4055 = vpop.f32.mrf.mxu0
        %v4056 = vadd.f32 0.0, %v4055
        %v4057 = vpop.f32.mrf.mxu0
        %v4058 = vadd.f32 0.0, %v4057
        %4059 = vmatmul.bf16.gmra.mxu0 %v3975
        %v4060 = vpop.f32.mrf.mxu0
        %v4061 = vadd.f32 0.0, %v4060
        %v4062 = vpop.f32.mrf.mxu0
        %v4063 = vadd.f32 0.0, %v4062
        %4064 = vmatmul.bf16.gmra.mxu0 %v3978
        %v4065 = vpop.f32.mrf.mxu0
        %v4066 = vadd.f32 0.0, %v4065
        %v4067 = vpop.f32.mrf.mxu0
        %v4068 = vadd.f32 0.0, %v4067
        %4069 = vmatmul.bf16.gmra.mxu0 %v3981
        %v4070 = vpop.f32.mrf.mxu0
        %v4071 = vadd.f32 0.0, %v4070
        %v4072 = vpop.f32.mrf.mxu0
        %v4073 = vadd.f32 0.0, %v4072
        %4074 = vdwg.mxu0
        %v4075 = vadd.f32 %v3788, %v3996
        %v4076 = vadd.f32 %v3789, %v3998
        %v4077 = vadd.f32 %v3790, %v4001
        %v4078 = vadd.f32 %v3791, %v4003
        %v4079 = vadd.f32 %v3792, %v4006
        %v4080 = vadd.f32 %v3793, %v4008
        %v4081 = vadd.f32 %v3794, %v4011
        %v4082 = vadd.f32 %v3795, %v4013
        %v4083 = vadd.f32 %v3796, %v4016
        %v4084 = vadd.f32 %v3797, %v4018
        %v4085 = vadd.f32 %v3798, %v4021
        %v4086 = vadd.f32 %v3799, %v4023
        %v4087 = vadd.f32 %v3800, %v4026
        %v4088 = vadd.f32 %v3801, %v4028
        %v4089 = vadd.f32 %v3802, %v4031
        %v4090 = vadd.f32 %v3803, %v4033
        %v4091 = vadd.f32 %v3804, %v4036
        %v4092 = vadd.f32 %v3805, %v4038
        %v4093 = vadd.f32 %v3806, %v4041
        %v4094 = vadd.f32 %v3807, %v4043
        %v4095 = vadd.f32 %v3808, %v4046
        %v4096 = vadd.f32 %v3809, %v4048
        %v4097 = vadd.f32 %v3810, %v4051
        %v4098 = vadd.f32 %v3811, %v4053
        %v4099 = vadd.f32 %v3812, %v4056
        %v4100 = vadd.f32 %v3813, %v4058
        %v4101 = vadd.f32 %v3814, %v4061
        %v4102 = vadd.f32 %v3815, %v4063
        %v4103 = vadd.f32 %v3816, %v4066
        %v4104 = vadd.f32 %v3817, %v4068
        %v4105 = vadd.f32 %v3818, %v4071
        %v4106 = vadd.f32 %v3819, %v4073
        %v4107 = vld [vmem:[%s3820] sm:$0xf]
        %v4108 = vld [vmem:[%s3820 + $0x4] sm:$0xf]
        %v4109 = vld [vmem:[%s3820 + $0x8] sm:$0x1]
        %v4110 = vld [vmem:[%s3820 + $0xc] sm:$0xf]
        %v4111 = vld [vmem:[%s3820 + $0x10] sm:$0xf]
        %v4112 = vld [vmem:[%s3820 + $0x14] sm:$0x1]
        %v4113 = vld [vmem:[%s3820 + $0x18] sm:$0xf]
        %v4114 = vld [vmem:[%s3820 + $0x1c] sm:$0xf]
        %v4115 = vld [vmem:[%s3820 + $0x20] sm:$0x1]
        %v4116 = vld [vmem:[%s3820 + $0x24] sm:$0xf]
        %v4117 = vld [vmem:[%s3820 + $0x28] sm:$0xf]
        %v4118 = vld [vmem:[%s3820 + $0x2c] sm:$0x1]
        %v4119 = vld [vmem:[%s3820 + $0x30] sm:$0xf]
        %v4120 = vld [vmem:[%s3820 + $0x34] sm:$0xf]
        %v4121 = vld [vmem:[%s3820 + $0x38] sm:$0x1]
        %v4122 = vld [vmem:[%s3820 + $0x3c] sm:$0xf]
        %v4123 = vld [vmem:[%s3820 + $0x40] sm:$0xf]
        %v4124 = vld [vmem:[%s3820 + $0x44] sm:$0x1]
        %v4125 = vld [vmem:[%s3820 + $0x48] sm:$0xf]
        %v4126 = vld [vmem:[%s3820 + $0x4c] sm:$0xf]
        %v4127 = vld [vmem:[%s3820 + $0x50] sm:$0x1]
        %v4128 = vld [vmem:[%s3820 + $0x54] sm:$0xf]
        %v4129 = vld [vmem:[%s3820 + $0x58] sm:$0xf]
        %v4130 = vld [vmem:[%s3820 + $0x5c] sm:$0x1]
        %v4131 = vld [vmem:[%s3820 + $0x60] sm:$0xf]
        %v4132 = vld [vmem:[%s3820 + $0x64] sm:$0xf]
        %v4133 = vld [vmem:[%s3820 + $0x68] sm:$0x1]
        %v4134 = vld [vmem:[%s3820 + $0x6c] sm:$0xf]
        %v4135 = vld [vmem:[%s3820 + $0x70] sm:$0xf]
        %v4136 = vld [vmem:[%s3820 + $0x74] sm:$0x1]
        %v4137 = vld [vmem:[%s3820 + $0x78] sm:$0xf]
        %v4138 = vld [vmem:[%s3820 + $0x7c] sm:$0xf]
        %v4139 = vld [vmem:[%s3820 + $0x80] sm:$0x1]
        %v4140 = vld [vmem:[%s3820 + $0x84] sm:$0xf]
        %v4141 = vld [vmem:[%s3820 + $0x88] sm:$0xf]
        %v4142 = vld [vmem:[%s3820 + $0x8c] sm:$0x1]
        %v4143 = vld [vmem:[%s3820 + $0x90] sm:$0xf]
        %v4144 = vld [vmem:[%s3820 + $0x94] sm:$0xf]
        %v4145 = vld [vmem:[%s3820 + $0x98] sm:$0x1]
        %v4146 = vld [vmem:[%s3820 + $0x9c] sm:$0xf]
        %v4147 = vld [vmem:[%s3820 + $0xa0] sm:$0xf]
        %v4148 = vld [vmem:[%s3820 + $0xa4] sm:$0x1]
        %v4149 = vld [vmem:[%s3820 + $0xa8] sm:$0xf]
        %v4150 = vld [vmem:[%s3820 + $0xac] sm:$0xf]
        %v4151 = vld [vmem:[%s3820 + $0xb0] sm:$0x1]
        %v4152 = vld [vmem:[%s3820 + $0xb4] sm:$0xf]
        %v4153 = vld [vmem:[%s3820 + $0xb8] sm:$0xf]
        %v4154 = vld [vmem:[%s3820 + $0xbc] sm:$0x1]
        %v4156 = vshrl.u32 %v4107, 16
        %v4158 = vrot.slane %v4156, 4
        %v4159 = vshll.u32 %v4107, 16
        %v4161 = vrot.slane %v4159, 5
        %v4162 = vor.u32 %v4158, %v4161
        %v4163 = vrot.slane %v4162, 4
        %v4165 = vshll.u32 %v4108, 16
        %v4167 = vrot.slane %v4165, 5
        %v4168 = vsel %vm1300, %v4163, %v4167
        %v4169 = vshrl.u32 %v4108, 16
        %v4171 = vrot.slane %v4169, 4
        %v4172 = vor.u32 %v4171, %v4167
        %v4173 = vrot.slane %v4172, 4
        %v4175 = vshll.u32 %v4109, 16
        %v4177 = vrot.slane %v4175, 5
        %v4178 = vsel %vm1300, %v4173, %v4177
        %v4180 = vshrl.u32 %v4110, 16
        %v4182 = vrot.slane %v4180, 4
        %v4183 = vshll.u32 %v4110, 16
        %v4185 = vrot.slane %v4183, 5
        %v4186 = vor.u32 %v4182, %v4185
        %v4187 = vrot.slane %v4186, 4
        %v4189 = vshll.u32 %v4111, 16
        %v4191 = vrot.slane %v4189, 5
        %v4192 = vsel %vm1300, %v4187, %v4191
        %v4193 = vshrl.u32 %v4111, 16
        %v4195 = vrot.slane %v4193, 4
        %v4196 = vor.u32 %v4195, %v4191
        %v4197 = vrot.slane %v4196, 4
        %v4199 = vshll.u32 %v4112, 16
        %v4201 = vrot.slane %v4199, 5
        %v4202 = vsel %vm1300, %v4197, %v4201
        %v4204 = vshrl.u32 %v4113, 16
        %v4206 = vrot.slane %v4204, 4
        %v4207 = vshll.u32 %v4113, 16
        %v4209 = vrot.slane %v4207, 5
        %v4210 = vor.u32 %v4206, %v4209
        %v4211 = vrot.slane %v4210, 4
        %v4213 = vshll.u32 %v4114, 16
        %v4215 = vrot.slane %v4213, 5
        %v4216 = vsel %vm1300, %v4211, %v4215
        %v4217 = vshrl.u32 %v4114, 16
        %v4219 = vrot.slane %v4217, 4
        %v4220 = vor.u32 %v4219, %v4215
        %v4221 = vrot.slane %v4220, 4
        %v4223 = vshll.u32 %v4115, 16
        %v4225 = vrot.slane %v4223, 5
        %v4226 = vsel %vm1300, %v4221, %v4225
        %v4228 = vshrl.u32 %v4116, 16
        %v4230 = vrot.slane %v4228, 4
        %v4231 = vshll.u32 %v4116, 16
        %v4233 = vrot.slane %v4231, 5
        %v4234 = vor.u32 %v4230, %v4233
        %v4235 = vrot.slane %v4234, 4
        %v4237 = vshll.u32 %v4117, 16
        %v4239 = vrot.slane %v4237, 5
        %v4240 = vsel %vm1300, %v4235, %v4239
        %v4241 = vshrl.u32 %v4117, 16
        %v4243 = vrot.slane %v4241, 4
        %v4244 = vor.u32 %v4243, %v4239
        %v4245 = vrot.slane %v4244, 4
        %v4247 = vshll.u32 %v4118, 16
        %v4249 = vrot.slane %v4247, 5
        %v4250 = vsel %vm1300, %v4245, %v4249
        %v4252 = vshrl.u32 %v4119, 16
        %v4254 = vrot.slane %v4252, 4
        %v4255 = vshll.u32 %v4119, 16
        %v4257 = vrot.slane %v4255, 5
        %v4258 = vor.u32 %v4254, %v4257
        %v4259 = vrot.slane %v4258, 4
        %v4261 = vshll.u32 %v4120, 16
        %v4263 = vrot.slane %v4261, 5
        %v4264 = vsel %vm1300, %v4259, %v4263
        %v4265 = vshrl.u32 %v4120, 16
        %v4267 = vrot.slane %v4265, 4
        %v4268 = vor.u32 %v4267, %v4263
        %v4269 = vrot.slane %v4268, 4
        %v4271 = vshll.u32 %v4121, 16
        %v4273 = vrot.slane %v4271, 5
        %v4274 = vsel %vm1300, %v4269, %v4273
        %v4276 = vshrl.u32 %v4122, 16
        %v4278 = vrot.slane %v4276, 4
        %v4279 = vshll.u32 %v4122, 16
        %v4281 = vrot.slane %v4279, 5
        %v4282 = vor.u32 %v4278, %v4281
        %v4283 = vrot.slane %v4282, 4
        %v4285 = vshll.u32 %v4123, 16
        %v4287 = vrot.slane %v4285, 5
        %v4288 = vsel %vm1300, %v4283, %v4287
        %v4289 = vshrl.u32 %v4123, 16
        %v4291 = vrot.slane %v4289, 4
        %v4292 = vor.u32 %v4291, %v4287
        %v4293 = vrot.slane %v4292, 4
        %v4295 = vshll.u32 %v4124, 16
        %v4297 = vrot.slane %v4295, 5
        %v4298 = vsel %vm1300, %v4293, %v4297
        %v4300 = vshrl.u32 %v4125, 16
        %v4302 = vrot.slane %v4300, 4
        %v4303 = vshll.u32 %v4125, 16
        %v4305 = vrot.slane %v4303, 5
        %v4306 = vor.u32 %v4302, %v4305
        %v4307 = vrot.slane %v4306, 4
        %v4309 = vshll.u32 %v4126, 16
        %v4311 = vrot.slane %v4309, 5
        %v4312 = vsel %vm1300, %v4307, %v4311
        %v4313 = vshrl.u32 %v4126, 16
        %v4315 = vrot.slane %v4313, 4
        %v4316 = vor.u32 %v4315, %v4311
        %v4317 = vrot.slane %v4316, 4
        %v4319 = vshll.u32 %v4127, 16
        %v4321 = vrot.slane %v4319, 5
        %v4322 = vsel %vm1300, %v4317, %v4321
        %v4324 = vshrl.u32 %v4128, 16
        %v4326 = vrot.slane %v4324, 4
        %v4327 = vshll.u32 %v4128, 16
        %v4329 = vrot.slane %v4327, 5
        %v4330 = vor.u32 %v4326, %v4329
        %v4331 = vrot.slane %v4330, 4
        %v4333 = vshll.u32 %v4129, 16
        %v4335 = vrot.slane %v4333, 5
        %v4336 = vsel %vm1300, %v4331, %v4335
        %v4337 = vshrl.u32 %v4129, 16
        %v4339 = vrot.slane %v4337, 4
        %v4340 = vor.u32 %v4339, %v4335
        %v4341 = vrot.slane %v4340, 4
        %v4343 = vshll.u32 %v4130, 16
        %v4345 = vrot.slane %v4343, 5
        %v4346 = vsel %vm1300, %v4341, %v4345
        %v4348 = vshrl.u32 %v4131, 16
        %v4350 = vrot.slane %v4348, 4
        %v4351 = vshll.u32 %v4131, 16
        %v4353 = vrot.slane %v4351, 5
        %v4354 = vor.u32 %v4350, %v4353
        %v4355 = vrot.slane %v4354, 4
        %v4357 = vshll.u32 %v4132, 16
        %v4359 = vrot.slane %v4357, 5
        %v4360 = vsel %vm1300, %v4355, %v4359
        %v4361 = vshrl.u32 %v4132, 16
        %v4363 = vrot.slane %v4361, 4
        %v4364 = vor.u32 %v4363, %v4359
        %v4365 = vrot.slane %v4364, 4
        %v4367 = vshll.u32 %v4133, 16
        %v4369 = vrot.slane %v4367, 5
        %v4370 = vsel %vm1300, %v4365, %v4369
        %v4372 = vshrl.u32 %v4134, 16
        %v4374 = vrot.slane %v4372, 4
        %v4375 = vshll.u32 %v4134, 16
        %v4377 = vrot.slane %v4375, 5
        %v4378 = vor.u32 %v4374, %v4377
        %v4379 = vrot.slane %v4378, 4
        %v4381 = vshll.u32 %v4135, 16
        %v4383 = vrot.slane %v4381, 5
        %v4384 = vsel %vm1300, %v4379, %v4383
        %v4385 = vshrl.u32 %v4135, 16
        %v4387 = vrot.slane %v4385, 4
        %v4388 = vor.u32 %v4387, %v4383
        %v4389 = vrot.slane %v4388, 4
        %v4391 = vshll.u32 %v4136, 16
        %v4393 = vrot.slane %v4391, 5
        %v4394 = vsel %vm1300, %v4389, %v4393
        %v4396 = vshrl.u32 %v4137, 16
        %v4398 = vrot.slane %v4396, 4
        %v4399 = vshll.u32 %v4137, 16
        %v4401 = vrot.slane %v4399, 5
        %v4402 = vor.u32 %v4398, %v4401
        %v4403 = vrot.slane %v4402, 4
        %v4405 = vshll.u32 %v4138, 16
        %v4407 = vrot.slane %v4405, 5
        %v4408 = vsel %vm1300, %v4403, %v4407
        %v4409 = vshrl.u32 %v4138, 16
        %v4411 = vrot.slane %v4409, 4
        %v4412 = vor.u32 %v4411, %v4407
        %v4413 = vrot.slane %v4412, 4
        %v4415 = vshll.u32 %v4139, 16
        %v4417 = vrot.slane %v4415, 5
        %v4418 = vsel %vm1300, %v4413, %v4417
        %v4420 = vshrl.u32 %v4140, 16
        %v4422 = vrot.slane %v4420, 4
        %v4423 = vshll.u32 %v4140, 16
        %v4425 = vrot.slane %v4423, 5
        %v4426 = vor.u32 %v4422, %v4425
        %v4427 = vrot.slane %v4426, 4
        %v4429 = vshll.u32 %v4141, 16
        %v4431 = vrot.slane %v4429, 5
        %v4432 = vsel %vm1300, %v4427, %v4431
        %v4433 = vshrl.u32 %v4141, 16
        %v4435 = vrot.slane %v4433, 4
        %v4436 = vor.u32 %v4435, %v4431
        %v4437 = vrot.slane %v4436, 4
        %v4439 = vshll.u32 %v4142, 16
        %v4441 = vrot.slane %v4439, 5
        %v4442 = vsel %vm1300, %v4437, %v4441
        %v4444 = vshrl.u32 %v4143, 16
        %v4446 = vrot.slane %v4444, 4
        %v4447 = vshll.u32 %v4143, 16
        %v4449 = vrot.slane %v4447, 5
        %v4450 = vor.u32 %v4446, %v4449
        %v4451 = vrot.slane %v4450, 4
        %v4453 = vshll.u32 %v4144, 16
        %v4455 = vrot.slane %v4453, 5
        %v4456 = vsel %vm1300, %v4451, %v4455
        %v4457 = vshrl.u32 %v4144, 16
        %v4459 = vrot.slane %v4457, 4
        %v4460 = vor.u32 %v4459, %v4455
        %v4461 = vrot.slane %v4460, 4
        %v4463 = vshll.u32 %v4145, 16
        %v4465 = vrot.slane %v4463, 5
        %v4466 = vsel %vm1300, %v4461, %v4465
        %v4468 = vshrl.u32 %v4146, 16
        %v4470 = vrot.slane %v4468, 4
        %v4471 = vshll.u32 %v4146, 16
        %v4473 = vrot.slane %v4471, 5
        %v4474 = vor.u32 %v4470, %v4473
        %v4475 = vrot.slane %v4474, 4
        %v4477 = vshll.u32 %v4147, 16
        %v4479 = vrot.slane %v4477, 5
        %v4480 = vsel %vm1300, %v4475, %v4479
        %v4481 = vshrl.u32 %v4147, 16
        %v4483 = vrot.slane %v4481, 4
        %v4484 = vor.u32 %v4483, %v4479
        %v4485 = vrot.slane %v4484, 4
        %v4487 = vshll.u32 %v4148, 16
        %v4489 = vrot.slane %v4487, 5
        %v4490 = vsel %vm1300, %v4485, %v4489
        %v4492 = vshrl.u32 %v4149, 16
        %v4494 = vrot.slane %v4492, 4
        %v4495 = vshll.u32 %v4149, 16
        %v4497 = vrot.slane %v4495, 5
        %v4498 = vor.u32 %v4494, %v4497
        %v4499 = vrot.slane %v4498, 4
        %v4501 = vshll.u32 %v4150, 16
        %v4503 = vrot.slane %v4501, 5
        %v4504 = vsel %vm1300, %v4499, %v4503
        %v4505 = vshrl.u32 %v4150, 16
        %v4507 = vrot.slane %v4505, 4
        %v4508 = vor.u32 %v4507, %v4503
        %v4509 = vrot.slane %v4508, 4
        %v4511 = vshll.u32 %v4151, 16
        %v4513 = vrot.slane %v4511, 5
        %v4514 = vsel %vm1300, %v4509, %v4513
        %v4516 = vshrl.u32 %v4152, 16
        %v4518 = vrot.slane %v4516, 4
        %v4519 = vshll.u32 %v4152, 16
        %v4521 = vrot.slane %v4519, 5
        %v4522 = vor.u32 %v4518, %v4521
        %v4523 = vrot.slane %v4522, 4
        %v4525 = vshll.u32 %v4153, 16
        %v4527 = vrot.slane %v4525, 5
        %v4528 = vsel %vm1300, %v4523, %v4527
        %v4529 = vshrl.u32 %v4153, 16
        %v4531 = vrot.slane %v4529, 4
        %v4532 = vor.u32 %v4531, %v4527
        %v4533 = vrot.slane %v4532, 4
        %v4535 = vshll.u32 %v4154, 16
        %v4537 = vrot.slane %v4535, 5
        %v4538 = vsel %vm1300, %v4533, %v4537
        %s4539 = scalar_lea.vmem %s3, 14
        %v4540 = vld [vmem:[%s4539] sm:$0x3]
        %v4541 = vunpack.c.l.b16 %v4168
        %v4542 = vunpack.c.l.b16 %v4178
        %v4543 = vunpack.c.l.b16 %v4192
        %v4544 = vunpack.c.l.b16 %v4202
        %v4545 = vunpack.c.l.b16 %v4216
        %v4546 = vunpack.c.l.b16 %v4226
        %v4547 = vunpack.c.l.b16 %v4240
        %v4548 = vunpack.c.l.b16 %v4250
        %v4549 = vunpack.c.l.b16 %v4264
        %v4550 = vunpack.c.l.b16 %v4274
        %v4551 = vunpack.c.l.b16 %v4288
        %v4552 = vunpack.c.l.b16 %v4298
        %v4553 = vunpack.c.l.b16 %v4312
        %v4554 = vunpack.c.l.b16 %v4322
        %v4555 = vunpack.c.l.b16 %v4336
        %v4556 = vunpack.c.l.b16 %v4346
        %v4557 = vunpack.c.l.b16 %v4360
        %v4558 = vunpack.c.l.b16 %v4370
        %v4559 = vunpack.c.l.b16 %v4384
        %v4560 = vunpack.c.l.b16 %v4394
        %v4561 = vunpack.c.l.b16 %v4408
        %v4562 = vunpack.c.l.b16 %v4418
        %v4563 = vunpack.c.l.b16 %v4432
        %v4564 = vunpack.c.l.b16 %v4442
        %v4565 = vunpack.c.l.b16 %v4456
        %v4566 = vunpack.c.l.b16 %v4466
        %v4567 = vunpack.c.l.b16 %v4480
        %v4568 = vunpack.c.l.b16 %v4490
        %v4569 = vunpack.c.l.b16 %v4504
        %v4570 = vunpack.c.l.b16 %v4514
        %v4571 = vunpack.c.l.b16 %v4528
        %v4572 = vunpack.c.l.b16 %v4538
        %v4573 = vpack.c.b16 %v4542, %v4541
        %v4574 = vpack.c.b16 %v4544, %v4543
        %v4575 = vpack.c.b16 %v4546, %v4545
        %v4576 = vpack.c.b16 %v4548, %v4547
        %v4577 = vpack.c.b16 %v4550, %v4549
        %v4578 = vpack.c.b16 %v4552, %v4551
        %v4579 = vpack.c.b16 %v4554, %v4553
        %v4580 = vpack.c.b16 %v4556, %v4555
        %v4581 = vpack.c.b16 %v4558, %v4557
        %v4582 = vpack.c.b16 %v4560, %v4559
        %v4583 = vpack.c.b16 %v4562, %v4561
        %v4584 = vpack.c.b16 %v4564, %v4563
        %v4585 = vpack.c.b16 %v4566, %v4565
        %v4586 = vpack.c.b16 %v4568, %v4567
        %v4587 = vpack.c.b16 %v4570, %v4569
        %v4588 = vpack.c.b16 %v4572, %v4571
        %v4590 = vsel %vm1735, %v4573, 0
        %v4593 = vsel %vm1735, %v4574, 0
        %v4596 = vsel %vm1735, %v4575, 0
        %v4599 = vsel %vm1735, %v4576, 0
        %v4602 = vsel %vm1735, %v4577, 0
        %v4605 = vsel %vm1735, %v4578, 0
        %v4608 = vsel %vm1735, %v4579, 0
        %v4611 = vsel %vm1735, %v4580, 0
        %v4614 = vsel %vm1735, %v4581, 0
        %v4617 = vsel %vm1735, %v4582, 0
        %v4620 = vsel %vm1735, %v4583, 0
        %v4623 = vsel %vm1735, %v4584, 0
        %v4626 = vsel %vm1735, %v4585, 0
        %v4629 = vsel %vm1735, %v4586, 0
        %v4632 = vsel %vm1735, %v4587, 0
        %v4635 = vsel %vm1735, %v4588, 0
        %v4638 = vsel %vm1784, %v4540, 0
        %4640 = vmatpush.bf16.msra.mxu0 0
        %4641 = vmatpush.bf16.msra.mxu0 0
        %4642 = vmatpush.bf16.msra.mxu0 0
        %4643 = vmatpush.bf16.msra.mxu0 0
        %4644 = vmatpush.bf16.msra.mxu0 0
        %4645 = vmatpush.bf16.msra.mxu0 0
        %4646 = vmatpush.bf16.msra.mxu0 0
        %4647 = vmatpush.bf16.msra.mxu0 %v4638
        %4648 = vmatmul.bf16.gmra.mxu0 %v4590
        %v4649 = vpop.f32.mrf.mxu0
        %v4650 = vadd.f32 0.0, %v4649
        %v4651 = vpop.f32.mrf.mxu0
        %v4652 = vadd.f32 0.0, %v4651
        %4653 = vmatmul.bf16.gmra.mxu0 %v4593
        %v4654 = vpop.f32.mrf.mxu0
        %v4655 = vadd.f32 0.0, %v4654
        %v4656 = vpop.f32.mrf.mxu0
        %v4657 = vadd.f32 0.0, %v4656
        %4658 = vmatmul.bf16.gmra.mxu0 %v4596
        %v4659 = vpop.f32.mrf.mxu0
        %v4660 = vadd.f32 0.0, %v4659
        %v4661 = vpop.f32.mrf.mxu0
        %v4662 = vadd.f32 0.0, %v4661
        %4663 = vmatmul.bf16.gmra.mxu0 %v4599
        %v4664 = vpop.f32.mrf.mxu0
        %v4665 = vadd.f32 0.0, %v4664
        %v4666 = vpop.f32.mrf.mxu0
        %v4667 = vadd.f32 0.0, %v4666
        %4668 = vmatmul.bf16.gmra.mxu0 %v4602
        %v4669 = vpop.f32.mrf.mxu0
        %v4670 = vadd.f32 0.0, %v4669
        %v4671 = vpop.f32.mrf.mxu0
        %v4672 = vadd.f32 0.0, %v4671
        %4673 = vmatmul.bf16.gmra.mxu0 %v4605
        %v4674 = vpop.f32.mrf.mxu0
        %v4675 = vadd.f32 0.0, %v4674
        %v4676 = vpop.f32.mrf.mxu0
        %v4677 = vadd.f32 0.0, %v4676
        %4678 = vmatmul.bf16.gmra.mxu0 %v4608
        %v4679 = vpop.f32.mrf.mxu0
        %v4680 = vadd.f32 0.0, %v4679
        %v4681 = vpop.f32.mrf.mxu0
        %v4682 = vadd.f32 0.0, %v4681
        %4683 = vmatmul.bf16.gmra.mxu0 %v4611
        %v4684 = vpop.f32.mrf.mxu0
        %v4685 = vadd.f32 0.0, %v4684
        %v4686 = vpop.f32.mrf.mxu0
        %v4687 = vadd.f32 0.0, %v4686
        %4688 = vmatmul.bf16.gmra.mxu0 %v4614
        %v4689 = vpop.f32.mrf.mxu0
        %v4690 = vadd.f32 0.0, %v4689
        %v4691 = vpop.f32.mrf.mxu0
        %v4692 = vadd.f32 0.0, %v4691
        %4693 = vmatmul.bf16.gmra.mxu0 %v4617
        %v4694 = vpop.f32.mrf.mxu0
        %v4695 = vadd.f32 0.0, %v4694
        %v4696 = vpop.f32.mrf.mxu0
        %v4697 = vadd.f32 0.0, %v4696
        %4698 = vmatmul.bf16.gmra.mxu0 %v4620
        %v4699 = vpop.f32.mrf.mxu0
        %v4700 = vadd.f32 0.0, %v4699
        %v4701 = vpop.f32.mrf.mxu0
        %v4702 = vadd.f32 0.0, %v4701
        %4703 = vmatmul.bf16.gmra.mxu0 %v4623
        %v4704 = vpop.f32.mrf.mxu0
        %v4705 = vadd.f32 0.0, %v4704
        %v4706 = vpop.f32.mrf.mxu0
        %v4707 = vadd.f32 0.0, %v4706
        %4708 = vmatmul.bf16.gmra.mxu0 %v4626
        %v4709 = vpop.f32.mrf.mxu0
        %v4710 = vadd.f32 0.0, %v4709
        %v4711 = vpop.f32.mrf.mxu0
        %v4712 = vadd.f32 0.0, %v4711
        %4713 = vmatmul.bf16.gmra.mxu0 %v4629
        %v4714 = vpop.f32.mrf.mxu0
        %v4715 = vadd.f32 0.0, %v4714
        %v4716 = vpop.f32.mrf.mxu0
        %v4717 = vadd.f32 0.0, %v4716
        %4718 = vmatmul.bf16.gmra.mxu0 %v4632
        %v4719 = vpop.f32.mrf.mxu0
        %v4720 = vadd.f32 0.0, %v4719
        %v4721 = vpop.f32.mrf.mxu0
        %v4722 = vadd.f32 0.0, %v4721
        %4723 = vmatmul.bf16.gmra.mxu0 %v4635
        %v4724 = vpop.f32.mrf.mxu0
        %v4725 = vadd.f32 0.0, %v4724
        %v4726 = vpop.f32.mrf.mxu0
        %v4727 = vadd.f32 0.0, %v4726
        %4728 = vdwg.mxu0
        %v4729 = vadd.f32 %v4075, %v4650
        %v4730 = vadd.f32 %v4076, %v4652
        %v4731 = vadd.f32 %v4077, %v4655
        %v4732 = vadd.f32 %v4078, %v4657
        %v4733 = vadd.f32 %v4079, %v4660
        %v4734 = vadd.f32 %v4080, %v4662
        %v4735 = vadd.f32 %v4081, %v4665
        %v4736 = vadd.f32 %v4082, %v4667
        %v4737 = vadd.f32 %v4083, %v4670
        %v4738 = vadd.f32 %v4084, %v4672
        %v4739 = vadd.f32 %v4085, %v4675
        %v4740 = vadd.f32 %v4086, %v4677
        %v4741 = vadd.f32 %v4087, %v4680
        %v4742 = vadd.f32 %v4088, %v4682
        %v4743 = vadd.f32 %v4089, %v4685
        %v4744 = vadd.f32 %v4090, %v4687
        %v4745 = vadd.f32 %v4091, %v4690
        %v4746 = vadd.f32 %v4092, %v4692
        %v4747 = vadd.f32 %v4093, %v4695
        %v4748 = vadd.f32 %v4094, %v4697
        %v4749 = vadd.f32 %v4095, %v4700
        %v4750 = vadd.f32 %v4096, %v4702
        %v4751 = vadd.f32 %v4097, %v4705
        %v4752 = vadd.f32 %v4098, %v4707
        %v4753 = vadd.f32 %v4099, %v4710
        %v4754 = vadd.f32 %v4100, %v4712
        %v4755 = vadd.f32 %v4101, %v4715
        %v4756 = vadd.f32 %v4102, %v4717
        %v4757 = vadd.f32 %v4103, %v4720
        %v4758 = vadd.f32 %v4104, %v4722
        %v4759 = vadd.f32 %v4105, %v4725
        %v4760 = vadd.f32 %v4106, %v4727
        %v4761 = vld [vmem:[%s3820] sm:$0xe]
        %v4762 = vld [vmem:[%s3820 + $0xc] sm:$0xe]
        %v4763 = vld [vmem:[%s3820 + $0x18] sm:$0xe]
        %v4764 = vld [vmem:[%s3820 + $0x24] sm:$0xe]
        %v4765 = vld [vmem:[%s3820 + $0x30] sm:$0xe]
        %v4766 = vld [vmem:[%s3820 + $0x3c] sm:$0xe]
        %v4767 = vld [vmem:[%s3820 + $0x48] sm:$0xe]
        %v4768 = vld [vmem:[%s3820 + $0x54] sm:$0xe]
        %v4769 = vld [vmem:[%s3820 + $0x60] sm:$0xe]
        %v4770 = vld [vmem:[%s3820 + $0x6c] sm:$0xe]
        %v4771 = vld [vmem:[%s3820 + $0x78] sm:$0xe]
        %v4772 = vld [vmem:[%s3820 + $0x84] sm:$0xe]
        %v4773 = vld [vmem:[%s3820 + $0x90] sm:$0xe]
        %v4774 = vld [vmem:[%s3820 + $0x9c] sm:$0xe]
        %v4775 = vld [vmem:[%s3820 + $0xa8] sm:$0xe]
        %v4776 = vld [vmem:[%s3820 + $0xb4] sm:$0xe]
        %v4825 = vrot.slane %v4761, 5
        %v4826 = vrot.slane %v4825, 4
        %v4827 = vrot.slane %v4108, 5
        %v4828 = vsel %vm2147, %v4826, %v4827
        %v4829 = vrot.slane %v4827, 4
        %v4830 = vrot.slane %v4109, 5
        %v4831 = vsel %vm2147, %v4829, %v4830
        %v4832 = vrot.slane %v4762, 5
        %v4833 = vrot.slane %v4832, 4
        %v4834 = vrot.slane %v4111, 5
        %v4835 = vsel %vm2147, %v4833, %v4834
        %v4836 = vrot.slane %v4834, 4
        %v4837 = vrot.slane %v4112, 5
        %v4838 = vsel %vm2147, %v4836, %v4837
        %v4839 = vrot.slane %v4763, 5
        %v4840 = vrot.slane %v4839, 4
        %v4841 = vrot.slane %v4114, 5
        %v4842 = vsel %vm2147, %v4840, %v4841
        %v4843 = vrot.slane %v4841, 4
        %v4844 = vrot.slane %v4115, 5
        %v4845 = vsel %vm2147, %v4843, %v4844
        %v4846 = vrot.slane %v4764, 5
        %v4847 = vrot.slane %v4846, 4
        %v4848 = vrot.slane %v4117, 5
        %v4849 = vsel %vm2147, %v4847, %v4848
        %v4850 = vrot.slane %v4848, 4
        %v4851 = vrot.slane %v4118, 5
        %v4852 = vsel %vm2147, %v4850, %v4851
        %v4853 = vrot.slane %v4765, 5
        %v4854 = vrot.slane %v4853, 4
        %v4855 = vrot.slane %v4120, 5
        %v4856 = vsel %vm2147, %v4854, %v4855
        %v4857 = vrot.slane %v4855, 4
        %v4858 = vrot.slane %v4121, 5
        %v4859 = vsel %vm2147, %v4857, %v4858
        %v4860 = vrot.slane %v4766, 5
        %v4861 = vrot.slane %v4860, 4
        %v4862 = vrot.slane %v4123, 5
        %v4863 = vsel %vm2147, %v4861, %v4862
        %v4864 = vrot.slane %v4862, 4
        %v4865 = vrot.slane %v4124, 5
        %v4866 = vsel %vm2147, %v4864, %v4865
        %v4867 = vrot.slane %v4767, 5
        %v4868 = vrot.slane %v4867, 4
        %v4869 = vrot.slane %v4126, 5
        %v4870 = vsel %vm2147, %v4868, %v4869
        %v4871 = vrot.slane %v4869, 4
        %v4872 = vrot.slane %v4127, 5
        %v4873 = vsel %vm2147, %v4871, %v4872
        %v4874 = vrot.slane %v4768, 5
        %v4875 = vrot.slane %v4874, 4
        %v4876 = vrot.slane %v4129, 5
        %v4877 = vsel %vm2147, %v4875, %v4876
        %v4878 = vrot.slane %v4876, 4
        %v4879 = vrot.slane %v4130, 5
        %v4880 = vsel %vm2147, %v4878, %v4879
        %v4881 = vrot.slane %v4769, 5
        %v4882 = vrot.slane %v4881, 4
        %v4883 = vrot.slane %v4132, 5
        %v4884 = vsel %vm2147, %v4882, %v4883
        %v4885 = vrot.slane %v4883, 4
        %v4886 = vrot.slane %v4133, 5
        %v4887 = vsel %vm2147, %v4885, %v4886
        %v4888 = vrot.slane %v4770, 5
        %v4889 = vrot.slane %v4888, 4
        %v4890 = vrot.slane %v4135, 5
        %v4891 = vsel %vm2147, %v4889, %v4890
        %v4892 = vrot.slane %v4890, 4
        %v4893 = vrot.slane %v4136, 5
        %v4894 = vsel %vm2147, %v4892, %v4893
        %v4895 = vrot.slane %v4771, 5
        %v4896 = vrot.slane %v4895, 4
        %v4897 = vrot.slane %v4138, 5
        %v4898 = vsel %vm2147, %v4896, %v4897
        %v4899 = vrot.slane %v4897, 4
        %v4900 = vrot.slane %v4139, 5
        %v4901 = vsel %vm2147, %v4899, %v4900
        %v4902 = vrot.slane %v4772, 5
        %v4903 = vrot.slane %v4902, 4
        %v4904 = vrot.slane %v4141, 5
        %v4905 = vsel %vm2147, %v4903, %v4904
        %v4906 = vrot.slane %v4904, 4
        %v4907 = vrot.slane %v4142, 5
        %v4908 = vsel %vm2147, %v4906, %v4907
        %v4909 = vrot.slane %v4773, 5
        %v4910 = vrot.slane %v4909, 4
        %v4911 = vrot.slane %v4144, 5
        %v4912 = vsel %vm2147, %v4910, %v4911
        %v4913 = vrot.slane %v4911, 4
        %v4914 = vrot.slane %v4145, 5
        %v4915 = vsel %vm2147, %v4913, %v4914
        %v4916 = vrot.slane %v4774, 5
        %v4917 = vrot.slane %v4916, 4
        %v4918 = vrot.slane %v4147, 5
        %v4919 = vsel %vm2147, %v4917, %v4918
        %v4920 = vrot.slane %v4918, 4
        %v4921 = vrot.slane %v4148, 5
        %v4922 = vsel %vm2147, %v4920, %v4921
        %v4923 = vrot.slane %v4775, 5
        %v4924 = vrot.slane %v4923, 4
        %v4925 = vrot.slane %v4150, 5
        %v4926 = vsel %vm2147, %v4924, %v4925
        %v4927 = vrot.slane %v4925, 4
        %v4928 = vrot.slane %v4151, 5
        %v4929 = vsel %vm2147, %v4927, %v4928
        %v4930 = vrot.slane %v4776, 5
        %v4931 = vrot.slane %v4930, 4
        %v4932 = vrot.slane %v4153, 5
        %v4933 = vsel %vm2147, %v4931, %v4932
        %v4934 = vrot.slane %v4932, 4
        %v4935 = vrot.slane %v4154, 5
        %v4936 = vsel %vm2147, %v4934, %v4935
        %s4937 = scalar_lea.vmem %s3, 16
        %v4938 = vld [vmem:[%s4937] sm:$0x3]
        %v4939 = vunpack.c.l.b16 %v4828
        %v4940 = vunpack.c.l.b16 %v4831
        %v4941 = vunpack.c.l.b16 %v4835
        %v4942 = vunpack.c.l.b16 %v4838
        %v4943 = vunpack.c.l.b16 %v4842
        %v4944 = vunpack.c.l.b16 %v4845
        %v4945 = vunpack.c.l.b16 %v4849
        %v4946 = vunpack.c.l.b16 %v4852
        %v4947 = vunpack.c.l.b16 %v4856
        %v4948 = vunpack.c.l.b16 %v4859
        %v4949 = vunpack.c.l.b16 %v4863
        %v4950 = vunpack.c.l.b16 %v4866
        %v4951 = vunpack.c.l.b16 %v4870
        %v4952 = vunpack.c.l.b16 %v4873
        %v4953 = vunpack.c.l.b16 %v4877
        %v4954 = vunpack.c.l.b16 %v4880
        %v4955 = vunpack.c.l.b16 %v4884
        %v4956 = vunpack.c.l.b16 %v4887
        %v4957 = vunpack.c.l.b16 %v4891
        %v4958 = vunpack.c.l.b16 %v4894
        %v4959 = vunpack.c.l.b16 %v4898
        %v4960 = vunpack.c.l.b16 %v4901
        %v4961 = vunpack.c.l.b16 %v4905
        %v4962 = vunpack.c.l.b16 %v4908
        %v4963 = vunpack.c.l.b16 %v4912
        %v4964 = vunpack.c.l.b16 %v4915
        %v4965 = vunpack.c.l.b16 %v4919
        %v4966 = vunpack.c.l.b16 %v4922
        %v4967 = vunpack.c.l.b16 %v4926
        %v4968 = vunpack.c.l.b16 %v4929
        %v4969 = vunpack.c.l.b16 %v4933
        %v4970 = vunpack.c.l.b16 %v4936
        %v4971 = vpack.c.b16 %v4940, %v4939
        %v4972 = vpack.c.b16 %v4942, %v4941
        %v4973 = vpack.c.b16 %v4944, %v4943
        %v4974 = vpack.c.b16 %v4946, %v4945
        %v4975 = vpack.c.b16 %v4948, %v4947
        %v4976 = vpack.c.b16 %v4950, %v4949
        %v4977 = vpack.c.b16 %v4952, %v4951
        %v4978 = vpack.c.b16 %v4954, %v4953
        %v4979 = vpack.c.b16 %v4956, %v4955
        %v4980 = vpack.c.b16 %v4958, %v4957
        %v4981 = vpack.c.b16 %v4960, %v4959
        %v4982 = vpack.c.b16 %v4962, %v4961
        %v4983 = vpack.c.b16 %v4964, %v4963
        %v4984 = vpack.c.b16 %v4966, %v4965
        %v4985 = vpack.c.b16 %v4968, %v4967
        %v4986 = vpack.c.b16 %v4970, %v4969
        %v4988 = vsel %vm1735, %v4971, 0
        %v4991 = vsel %vm1735, %v4972, 0
        %v4994 = vsel %vm1735, %v4973, 0
        %v4997 = vsel %vm1735, %v4974, 0
        %v5000 = vsel %vm1735, %v4975, 0
        %v5003 = vsel %vm1735, %v4976, 0
        %v5006 = vsel %vm1735, %v4977, 0
        %v5009 = vsel %vm1735, %v4978, 0
        %v5012 = vsel %vm1735, %v4979, 0
        %v5015 = vsel %vm1735, %v4980, 0
        %v5018 = vsel %vm1735, %v4981, 0
        %v5021 = vsel %vm1735, %v4982, 0
        %v5024 = vsel %vm1735, %v4983, 0
        %v5027 = vsel %vm1735, %v4984, 0
        %v5030 = vsel %vm1735, %v4985, 0
        %v5033 = vsel %vm1735, %v4986, 0
        %v5036 = vsel %vm1784, %v4938, 0
        %5038 = vmatpush.bf16.msra.mxu0 0
        %5039 = vmatpush.bf16.msra.mxu0 0
        %5040 = vmatpush.bf16.msra.mxu0 0
        %5041 = vmatpush.bf16.msra.mxu0 0
        %5042 = vmatpush.bf16.msra.mxu0 0
        %5043 = vmatpush.bf16.msra.mxu0 0
        %5044 = vmatpush.bf16.msra.mxu0 0
        %5045 = vmatpush.bf16.msra.mxu0 %v5036
        %5046 = vmatmul.bf16.gmra.mxu0 %v4988
        %v5047 = vpop.f32.mrf.mxu0
        %v5048 = vadd.f32 0.0, %v5047
        %v5049 = vpop.f32.mrf.mxu0
        %v5050 = vadd.f32 0.0, %v5049
        %5051 = vmatmul.bf16.gmra.mxu0 %v4991
        %v5052 = vpop.f32.mrf.mxu0
        %v5053 = vadd.f32 0.0, %v5052
        %v5054 = vpop.f32.mrf.mxu0
        %v5055 = vadd.f32 0.0, %v5054
        %5056 = vmatmul.bf16.gmra.mxu0 %v4994
        %v5057 = vpop.f32.mrf.mxu0
        %v5058 = vadd.f32 0.0, %v5057
        %v5059 = vpop.f32.mrf.mxu0
        %v5060 = vadd.f32 0.0, %v5059
        %5061 = vmatmul.bf16.gmra.mxu0 %v4997
        %v5062 = vpop.f32.mrf.mxu0
        %v5063 = vadd.f32 0.0, %v5062
        %v5064 = vpop.f32.mrf.mxu0
        %v5065 = vadd.f32 0.0, %v5064
        %5066 = vmatmul.bf16.gmra.mxu0 %v5000
        %v5067 = vpop.f32.mrf.mxu0
        %v5068 = vadd.f32 0.0, %v5067
        %v5069 = vpop.f32.mrf.mxu0
        %v5070 = vadd.f32 0.0, %v5069
        %5071 = vmatmul.bf16.gmra.mxu0 %v5003
        %v5072 = vpop.f32.mrf.mxu0
        %v5073 = vadd.f32 0.0, %v5072
        %v5074 = vpop.f32.mrf.mxu0
        %v5075 = vadd.f32 0.0, %v5074
        %5076 = vmatmul.bf16.gmra.mxu0 %v5006
        %v5077 = vpop.f32.mrf.mxu0
        %v5078 = vadd.f32 0.0, %v5077
        %v5079 = vpop.f32.mrf.mxu0
        %v5080 = vadd.f32 0.0, %v5079
        %5081 = vmatmul.bf16.gmra.mxu0 %v5009
        %v5082 = vpop.f32.mrf.mxu0
        %v5083 = vadd.f32 0.0, %v5082
        %v5084 = vpop.f32.mrf.mxu0
        %v5085 = vadd.f32 0.0, %v5084
        %5086 = vmatmul.bf16.gmra.mxu0 %v5012
        %v5087 = vpop.f32.mrf.mxu0
        %v5088 = vadd.f32 0.0, %v5087
        %v5089 = vpop.f32.mrf.mxu0
        %v5090 = vadd.f32 0.0, %v5089
        %5091 = vmatmul.bf16.gmra.mxu0 %v5015
        %v5092 = vpop.f32.mrf.mxu0
        %v5093 = vadd.f32 0.0, %v5092
        %v5094 = vpop.f32.mrf.mxu0
        %v5095 = vadd.f32 0.0, %v5094
        %5096 = vmatmul.bf16.gmra.mxu0 %v5018
        %v5097 = vpop.f32.mrf.mxu0
        %v5098 = vadd.f32 0.0, %v5097
        %v5099 = vpop.f32.mrf.mxu0
        %v5100 = vadd.f32 0.0, %v5099
        %5101 = vmatmul.bf16.gmra.mxu0 %v5021
        %v5102 = vpop.f32.mrf.mxu0
        %v5103 = vadd.f32 0.0, %v5102
        %v5104 = vpop.f32.mrf.mxu0
        %v5105 = vadd.f32 0.0, %v5104
        %5106 = vmatmul.bf16.gmra.mxu0 %v5024
        %v5107 = vpop.f32.mrf.mxu0
        %v5108 = vadd.f32 0.0, %v5107
        %v5109 = vpop.f32.mrf.mxu0
        %v5110 = vadd.f32 0.0, %v5109
        %5111 = vmatmul.bf16.gmra.mxu0 %v5027
        %v5112 = vpop.f32.mrf.mxu0
        %v5113 = vadd.f32 0.0, %v5112
        %v5114 = vpop.f32.mrf.mxu0
        %v5115 = vadd.f32 0.0, %v5114
        %5116 = vmatmul.bf16.gmra.mxu0 %v5030
        %v5117 = vpop.f32.mrf.mxu0
        %v5118 = vadd.f32 0.0, %v5117
        %v5119 = vpop.f32.mrf.mxu0
        %v5120 = vadd.f32 0.0, %v5119
        %5121 = vmatmul.bf16.gmra.mxu0 %v5033
        %v5122 = vpop.f32.mrf.mxu0
        %v5123 = vadd.f32 0.0, %v5122
        %v5124 = vpop.f32.mrf.mxu0
        %v5125 = vadd.f32 0.0, %v5124
        %5126 = vdwg.mxu0
        %v5127 = vadd.f32 %v4729, %v5048
        %v5128 = vadd.f32 %v4730, %v5050
        %v5129 = vadd.f32 %v4731, %v5053
        %v5130 = vadd.f32 %v4732, %v5055
        %v5131 = vadd.f32 %v4733, %v5058
        %v5132 = vadd.f32 %v4734, %v5060
        %v5133 = vadd.f32 %v4735, %v5063
        %v5134 = vadd.f32 %v4736, %v5065
        %v5135 = vadd.f32 %v4737, %v5068
        %v5136 = vadd.f32 %v4738, %v5070
        %v5137 = vadd.f32 %v4739, %v5073
        %v5138 = vadd.f32 %v4740, %v5075
        %v5139 = vadd.f32 %v4741, %v5078
        %v5140 = vadd.f32 %v4742, %v5080
        %v5141 = vadd.f32 %v4743, %v5083
        %v5142 = vadd.f32 %v4744, %v5085
        %v5143 = vadd.f32 %v4745, %v5088
        %v5144 = vadd.f32 %v4746, %v5090
        %v5145 = vadd.f32 %v4747, %v5093
        %v5146 = vadd.f32 %v4748, %v5095
        %v5147 = vadd.f32 %v4749, %v5098
        %v5148 = vadd.f32 %v4750, %v5100
        %v5149 = vadd.f32 %v4751, %v5103
        %v5150 = vadd.f32 %v4752, %v5105
        %v5151 = vadd.f32 %v4753, %v5108
        %v5152 = vadd.f32 %v4754, %v5110
        %v5153 = vadd.f32 %v4755, %v5113
        %v5154 = vadd.f32 %v4756, %v5115
        %v5155 = vadd.f32 %v4757, %v5118
        %v5156 = vadd.f32 %v4758, %v5120
        %v5157 = vadd.f32 %v4759, %v5123
        %v5158 = vadd.f32 %v4760, %v5125
        %v5159 = vld [vmem:[%s4] sm:$0x1]
        %v5161 = vperm.slane %v5159, 0
        %v5163 = vadd.f32 %v5127, %v5161
        %v5164 = vadd.f32 %v5128, %v5161
        %v5165 = vadd.f32 %v5129, %v5161
        %v5166 = vadd.f32 %v5130, %v5161
        %v5167 = vadd.f32 %v5131, %v5161
        %v5168 = vadd.f32 %v5132, %v5161
        %v5169 = vadd.f32 %v5133, %v5161
        %v5170 = vadd.f32 %v5134, %v5161
        %v5171 = vadd.f32 %v5135, %v5161
        %v5172 = vadd.f32 %v5136, %v5161
        %v5173 = vadd.f32 %v5137, %v5161
        %v5174 = vadd.f32 %v5138, %v5161
        %v5175 = vadd.f32 %v5139, %v5161
        %v5176 = vadd.f32 %v5140, %v5161
        %v5177 = vadd.f32 %v5141, %v5161
        %v5178 = vadd.f32 %v5142, %v5161
        %v5179 = vadd.f32 %v5143, %v5161
        %v5180 = vadd.f32 %v5144, %v5161
        %v5181 = vadd.f32 %v5145, %v5161
        %v5182 = vadd.f32 %v5146, %v5161
        %v5183 = vadd.f32 %v5147, %v5161
        %v5184 = vadd.f32 %v5148, %v5161
        %v5185 = vadd.f32 %v5149, %v5161
        %v5186 = vadd.f32 %v5150, %v5161
        %v5187 = vadd.f32 %v5151, %v5161
        %v5188 = vadd.f32 %v5152, %v5161
        %v5189 = vadd.f32 %v5153, %v5161
        %v5190 = vadd.f32 %v5154, %v5161
        %v5191 = vadd.f32 %v5155, %v5161
        %v5192 = vadd.f32 %v5156, %v5161
        %v5193 = vadd.f32 %v5157, %v5161
        %v5194 = vadd.f32 %v5158, %v5161
        %v5195 = vmul.f32 %v5163, 0.5
        %v5196 = vmul.f32 %v5164, 0.5
        %v5197 = vmul.f32 %v5165, 0.5
        %v5198 = vmul.f32 %v5166, 0.5
        %v5199 = vmul.f32 %v5167, 0.5
        %v5200 = vmul.f32 %v5168, 0.5
        %v5201 = vmul.f32 %v5169, 0.5
        %v5202 = vmul.f32 %v5170, 0.5
        %v5203 = vmul.f32 %v5171, 0.5
        %v5204 = vmul.f32 %v5172, 0.5
        %v5205 = vmul.f32 %v5173, 0.5
        %v5206 = vmul.f32 %v5174, 0.5
        %v5207 = vmul.f32 %v5175, 0.5
        %v5208 = vmul.f32 %v5176, 0.5
        %v5209 = vmul.f32 %v5177, 0.5
        %v5210 = vmul.f32 %v5178, 0.5
        %v5211 = vmul.f32 %v5179, 0.5
        %v5212 = vmul.f32 %v5180, 0.5
        %v5213 = vmul.f32 %v5181, 0.5
        %v5214 = vmul.f32 %v5182, 0.5
        %v5215 = vmul.f32 %v5183, 0.5
        %v5216 = vmul.f32 %v5184, 0.5
        %v5217 = vmul.f32 %v5185, 0.5
        %v5218 = vmul.f32 %v5186, 0.5
        %v5219 = vmul.f32 %v5187, 0.5
        %v5220 = vmul.f32 %v5188, 0.5
        %v5221 = vmul.f32 %v5189, 0.5
        %v5222 = vmul.f32 %v5190, 0.5
        %v5223 = vmul.f32 %v5191, 0.5
        %v5224 = vmul.f32 %v5192, 0.5
        %v5225 = vmul.f32 %v5193, 0.5
        %v5226 = vmul.f32 %v5194, 0.5
        %v5227 = vtanh.pop %v5195
        %v5228 = vtanh.pop %v5196
        %v5229 = vtanh.pop %v5197
        %v5230 = vtanh.pop %v5198
        %v5231 = vtanh.pop %v5199
        %v5232 = vtanh.pop %v5200
        %v5233 = vtanh.pop %v5201
        %v5234 = vtanh.pop %v5202
        %v5235 = vtanh.pop %v5203
        %v5236 = vtanh.pop %v5204
        %v5237 = vtanh.pop %v5205
        %v5238 = vtanh.pop %v5206
        %v5239 = vtanh.pop %v5207
        %v5240 = vtanh.pop %v5208
        %v5241 = vtanh.pop %v5209
        %v5242 = vtanh.pop %v5210
        %v5243 = vtanh.pop %v5211
        %v5244 = vtanh.pop %v5212
        %v5245 = vtanh.pop %v5213
        %v5246 = vtanh.pop %v5214
        %v5247 = vtanh.pop %v5215
        %v5248 = vtanh.pop %v5216
        %v5249 = vtanh.pop %v5217
        %v5250 = vtanh.pop %v5218
        %v5251 = vtanh.pop %v5219
        %v5252 = vtanh.pop %v5220
        %v5253 = vtanh.pop %v5221
        %v5254 = vtanh.pop %v5222
        %v5255 = vtanh.pop %v5223
        %v5256 = vtanh.pop %v5224
        %v5257 = vtanh.pop %v5225
        %v5258 = vtanh.pop %v5226
        %v5259 = vmul.f32 %v5227, 0.5
        %v5260 = vmul.f32 %v5228, 0.5
        %v5261 = vmul.f32 %v5229, 0.5
        %v5262 = vmul.f32 %v5230, 0.5
        %v5263 = vmul.f32 %v5231, 0.5
        %v5264 = vmul.f32 %v5232, 0.5
        %v5265 = vmul.f32 %v5233, 0.5
        %v5266 = vmul.f32 %v5234, 0.5
        %v5267 = vmul.f32 %v5235, 0.5
        %v5268 = vmul.f32 %v5236, 0.5
        %v5269 = vmul.f32 %v5237, 0.5
        %v5270 = vmul.f32 %v5238, 0.5
        %v5271 = vmul.f32 %v5239, 0.5
        %v5272 = vmul.f32 %v5240, 0.5
        %v5273 = vmul.f32 %v5241, 0.5
        %v5274 = vmul.f32 %v5242, 0.5
        %v5275 = vmul.f32 %v5243, 0.5
        %v5276 = vmul.f32 %v5244, 0.5
        %v5277 = vmul.f32 %v5245, 0.5
        %v5278 = vmul.f32 %v5246, 0.5
        %v5279 = vmul.f32 %v5247, 0.5
        %v5280 = vmul.f32 %v5248, 0.5
        %v5281 = vmul.f32 %v5249, 0.5
        %v5282 = vmul.f32 %v5250, 0.5
        %v5283 = vmul.f32 %v5251, 0.5
        %v5284 = vmul.f32 %v5252, 0.5
        %v5285 = vmul.f32 %v5253, 0.5
        %v5286 = vmul.f32 %v5254, 0.5
        %v5287 = vmul.f32 %v5255, 0.5
        %v5288 = vmul.f32 %v5256, 0.5
        %v5289 = vmul.f32 %v5257, 0.5
        %v5290 = vmul.f32 %v5258, 0.5
        %v5291 = vadd.f32 %v5259, 0.5
        %v5292 = vadd.f32 %v5260, 0.5
        %v5293 = vadd.f32 %v5261, 0.5
        %v5294 = vadd.f32 %v5262, 0.5
        %v5295 = vadd.f32 %v5263, 0.5
        %v5296 = vadd.f32 %v5264, 0.5
        %v5297 = vadd.f32 %v5265, 0.5
        %v5298 = vadd.f32 %v5266, 0.5
        %v5299 = vadd.f32 %v5267, 0.5
        %v5300 = vadd.f32 %v5268, 0.5
        %v5301 = vadd.f32 %v5269, 0.5
        %v5302 = vadd.f32 %v5270, 0.5
        %v5303 = vadd.f32 %v5271, 0.5
        %v5304 = vadd.f32 %v5272, 0.5
        %v5305 = vadd.f32 %v5273, 0.5
        %v5306 = vadd.f32 %v5274, 0.5
        %v5307 = vadd.f32 %v5275, 0.5
        %v5308 = vadd.f32 %v5276, 0.5
        %v5309 = vadd.f32 %v5277, 0.5
        %v5310 = vadd.f32 %v5278, 0.5
        %v5311 = vadd.f32 %v5279, 0.5
        %v5312 = vadd.f32 %v5280, 0.5
        %v5313 = vadd.f32 %v5281, 0.5
        %v5314 = vadd.f32 %v5282, 0.5
        %v5315 = vadd.f32 %v5283, 0.5
        %v5316 = vadd.f32 %v5284, 0.5
        %v5317 = vadd.f32 %v5285, 0.5
        %v5318 = vadd.f32 %v5286, 0.5
        %v5319 = vadd.f32 %v5287, 0.5
        %v5320 = vadd.f32 %v5288, 0.5
        %v5321 = vadd.f32 %v5289, 0.5
        %v5322 = vadd.f32 %v5290, 0.5
        %v5323 = vmul.f32 %v5163, %v5291
        %v5324 = vmul.f32 %v5164, %v5292
        %v5325 = vmul.f32 %v5165, %v5293
        %v5326 = vmul.f32 %v5166, %v5294
        %v5327 = vmul.f32 %v5167, %v5295
        %v5328 = vmul.f32 %v5168, %v5296
        %v5329 = vmul.f32 %v5169, %v5297
        %v5330 = vmul.f32 %v5170, %v5298
        %v5331 = vmul.f32 %v5171, %v5299
        %v5332 = vmul.f32 %v5172, %v5300
        %v5333 = vmul.f32 %v5173, %v5301
        %v5334 = vmul.f32 %v5174, %v5302
        %v5335 = vmul.f32 %v5175, %v5303
        %v5336 = vmul.f32 %v5176, %v5304
        %v5337 = vmul.f32 %v5177, %v5305
        %v5338 = vmul.f32 %v5178, %v5306
        %v5339 = vmul.f32 %v5179, %v5307
        %v5340 = vmul.f32 %v5180, %v5308
        %v5341 = vmul.f32 %v5181, %v5309
        %v5342 = vmul.f32 %v5182, %v5310
        %v5343 = vmul.f32 %v5183, %v5311
        %v5344 = vmul.f32 %v5184, %v5312
        %v5345 = vmul.f32 %v5185, %v5313
        %v5346 = vmul.f32 %v5186, %v5314
        %v5347 = vmul.f32 %v5187, %v5315
        %v5348 = vmul.f32 %v5188, %v5316
        %v5349 = vmul.f32 %v5189, %v5317
        %v5350 = vmul.f32 %v5190, %v5318
        %v5351 = vmul.f32 %v5191, %v5319
        %v5352 = vmul.f32 %v5192, %v5320
        %v5353 = vmul.f32 %v5193, %v5321
        %v5354 = vmul.f32 %v5194, %v5322
        %v5355 = vpack.c.bf16 %v5324, %v5323
        %v5356 = vpack.c.bf16 %v5326, %v5325
        %v5357 = vpack.c.bf16 %v5328, %v5327
        %v5358 = vpack.c.bf16 %v5330, %v5329
        %v5359 = vpack.c.bf16 %v5332, %v5331
        %v5360 = vpack.c.bf16 %v5334, %v5333
        %v5361 = vpack.c.bf16 %v5336, %v5335
        %v5362 = vpack.c.bf16 %v5338, %v5337
        %v5363 = vpack.c.bf16 %v5340, %v5339
        %v5364 = vpack.c.bf16 %v5342, %v5341
        %v5365 = vpack.c.bf16 %v5344, %v5343
        %v5366 = vpack.c.bf16 %v5346, %v5345
        %v5367 = vpack.c.bf16 %v5348, %v5347
        %v5368 = vpack.c.bf16 %v5350, %v5349
        %v5369 = vpack.c.bf16 %v5352, %v5351
        %v5370 = vpack.c.bf16 %v5354, %v5353
        %v5371 = vld [vmem:[%s5] sm:$0x3]
        %v5372 = vld [vmem:[%s6] sm:$0x1]
        %v5374 = vperm.slane %v5372, 0
        %v5377 = vsel %vm1735, %v5355, 0
        %v5380 = vsel %vm1735, %v5356, 0
        %v5383 = vsel %vm1735, %v5357, 0
        %v5386 = vsel %vm1735, %v5358, 0
        %v5389 = vsel %vm1735, %v5359, 0
        %v5392 = vsel %vm1735, %v5360, 0
        %v5395 = vsel %vm1735, %v5361, 0
        %v5398 = vsel %vm1735, %v5362, 0
        %v5401 = vsel %vm1735, %v5363, 0
        %v5404 = vsel %vm1735, %v5364, 0
        %v5407 = vsel %vm1735, %v5365, 0
        %v5410 = vsel %vm1735, %v5366, 0
        %v5413 = vsel %vm1735, %v5367, 0
        %v5416 = vsel %vm1735, %v5368, 0
        %v5419 = vsel %vm1735, %v5369, 0
        %v5422 = vsel %vm1735, %v5370, 0
        %v5425 = vsel %vm1784, %v5371, 0
        %5427 = vmatpush.bf16.msra.mxu0 0
        %5428 = vmatpush.bf16.msra.mxu0 0
        %5429 = vmatpush.bf16.msra.mxu0 0
        %5430 = vmatpush.bf16.msra.mxu0 0
        %5431 = vmatpush.bf16.msra.mxu0 0
        %5432 = vmatpush.bf16.msra.mxu0 0
        %5433 = vmatpush.bf16.msra.mxu0 0
        %5434 = vmatpush.bf16.msra.mxu0 %v5425
        %5435 = vmatmul.bf16.gmra.mxu0 %v5377
        %v5436 = vpop.f32.mrf.mxu0
        %v5437 = vadd.f32 %v5374, %v5436
        %v5438 = vpop.f32.mrf.mxu0
        %v5439 = vadd.f32 %v5374, %v5438
        %5440 = vmatmul.bf16.gmra.mxu0 %v5380
        %v5441 = vpop.f32.mrf.mxu0
        %v5442 = vadd.f32 %v5374, %v5441
        %v5443 = vpop.f32.mrf.mxu0
        %v5444 = vadd.f32 %v5374, %v5443
        %5445 = vmatmul.bf16.gmra.mxu0 %v5383
        %v5446 = vpop.f32.mrf.mxu0
        %v5447 = vadd.f32 %v5374, %v5446
        %v5448 = vpop.f32.mrf.mxu0
        %v5449 = vadd.f32 %v5374, %v5448
        %5450 = vmatmul.bf16.gmra.mxu0 %v5386
        %v5451 = vpop.f32.mrf.mxu0
        %v5452 = vadd.f32 %v5374, %v5451
        %v5453 = vpop.f32.mrf.mxu0
        %v5454 = vadd.f32 %v5374, %v5453
        %5455 = vmatmul.bf16.gmra.mxu0 %v5389
        %v5456 = vpop.f32.mrf.mxu0
        %v5457 = vadd.f32 %v5374, %v5456
        %v5458 = vpop.f32.mrf.mxu0
        %v5459 = vadd.f32 %v5374, %v5458
        %5460 = vmatmul.bf16.gmra.mxu0 %v5392
        %v5461 = vpop.f32.mrf.mxu0
        %v5462 = vadd.f32 %v5374, %v5461
        %v5463 = vpop.f32.mrf.mxu0
        %v5464 = vadd.f32 %v5374, %v5463
        %5465 = vmatmul.bf16.gmra.mxu0 %v5395
        %v5466 = vpop.f32.mrf.mxu0
        %v5467 = vadd.f32 %v5374, %v5466
        %v5468 = vpop.f32.mrf.mxu0
        %v5469 = vadd.f32 %v5374, %v5468
        %5470 = vmatmul.bf16.gmra.mxu0 %v5398
        %v5471 = vpop.f32.mrf.mxu0
        %v5472 = vadd.f32 %v5374, %v5471
        %v5473 = vpop.f32.mrf.mxu0
        %v5474 = vadd.f32 %v5374, %v5473
        %5475 = vmatmul.bf16.gmra.mxu0 %v5401
        %v5476 = vpop.f32.mrf.mxu0
        %v5477 = vadd.f32 %v5374, %v5476
        %v5478 = vpop.f32.mrf.mxu0
        %v5479 = vadd.f32 %v5374, %v5478
        %5480 = vmatmul.bf16.gmra.mxu0 %v5404
        %v5481 = vpop.f32.mrf.mxu0
        %v5482 = vadd.f32 %v5374, %v5481
        %v5483 = vpop.f32.mrf.mxu0
        %v5484 = vadd.f32 %v5374, %v5483
        %5485 = vmatmul.bf16.gmra.mxu0 %v5407
        %v5486 = vpop.f32.mrf.mxu0
        %v5487 = vadd.f32 %v5374, %v5486
        %v5488 = vpop.f32.mrf.mxu0
        %v5489 = vadd.f32 %v5374, %v5488
        %5490 = vmatmul.bf16.gmra.mxu0 %v5410
        %v5491 = vpop.f32.mrf.mxu0
        %v5492 = vadd.f32 %v5374, %v5491
        %v5493 = vpop.f32.mrf.mxu0
        %v5494 = vadd.f32 %v5374, %v5493
        %5495 = vmatmul.bf16.gmra.mxu0 %v5413
        %v5496 = vpop.f32.mrf.mxu0
        %v5497 = vadd.f32 %v5374, %v5496
        %v5498 = vpop.f32.mrf.mxu0
        %v5499 = vadd.f32 %v5374, %v5498
        %5500 = vmatmul.bf16.gmra.mxu0 %v5416
        %v5501 = vpop.f32.mrf.mxu0
        %v5502 = vadd.f32 %v5374, %v5501
        %v5503 = vpop.f32.mrf.mxu0
        %v5504 = vadd.f32 %v5374, %v5503
        %5505 = vmatmul.bf16.gmra.mxu0 %v5419
        %v5506 = vpop.f32.mrf.mxu0
        %v5507 = vadd.f32 %v5374, %v5506
        %v5508 = vpop.f32.mrf.mxu0
        %v5509 = vadd.f32 %v5374, %v5508
        %5510 = vmatmul.bf16.gmra.mxu0 %v5422
        %v5511 = vpop.f32.mrf.mxu0
        %v5512 = vadd.f32 %v5374, %v5511
        %v5513 = vpop.f32.mrf.mxu0
        %v5514 = vadd.f32 %v5374, %v5513
        %5515 = vdwg.mxu0
        %v5516 = vld [vmem:[%s267] sm:$0xff]
        %v5517 = vld [vmem:[%s267 + $0x8] sm:$0xff]
        %v5518 = vld [vmem:[%s267 + $0x10] sm:$0xff]
        %v5519 = vld [vmem:[%s267 + $0x18] sm:$0xff]
        %v5520 = vld [vmem:[%s267 + $0x20] sm:$0xff]
        %v5521 = vld [vmem:[%s267 + $0x28] sm:$0xff]
        %v5522 = vld [vmem:[%s267 + $0x30] sm:$0xff]
        %v5523 = vld [vmem:[%s267 + $0x38] sm:$0xff]
        %v5524 = vld [vmem:[%s267 + $0x40] sm:$0xff]
        %v5525 = vld [vmem:[%s267 + $0x48] sm:$0xff]
        %v5526 = vld [vmem:[%s267 + $0x50] sm:$0xff]
        %v5527 = vld [vmem:[%s267 + $0x58] sm:$0xff]
        %v5528 = vld [vmem:[%s267 + $0x60] sm:$0xff]
        %v5529 = vld [vmem:[%s267 + $0x68] sm:$0xff]
        %v5530 = vld [vmem:[%s267 + $0x70] sm:$0xff]
        %v5531 = vld [vmem:[%s267 + $0x78] sm:$0xff]
        %v5532 = vld [vmem:[%s267 + $0x80] sm:$0xff]
        %v5533 = vld [vmem:[%s267 + $0x88] sm:$0xff]
        %v5534 = vld [vmem:[%s267 + $0x90] sm:$0xff]
        %v5535 = vld [vmem:[%s267 + $0x98] sm:$0xff]
        %v5536 = vld [vmem:[%s267 + $0xa0] sm:$0xff]
        %v5537 = vld [vmem:[%s267 + $0xa8] sm:$0xff]
        %v5538 = vld [vmem:[%s267 + $0xb0] sm:$0xff]
        %v5539 = vld [vmem:[%s267 + $0xb8] sm:$0xff]
        %v5540 = vld [vmem:[%s267 + $0xc0] sm:$0xff]
        %v5541 = vld [vmem:[%s267 + $0xc8] sm:$0xff]
        %v5542 = vld [vmem:[%s267 + $0xd0] sm:$0xff]
        %v5543 = vld [vmem:[%s267 + $0xd8] sm:$0xff]
        %v5544 = vld [vmem:[%s267 + $0xe0] sm:$0xff]
        %v5545 = vld [vmem:[%s267 + $0xe8] sm:$0xff]
        %v5546 = vld [vmem:[%s267 + $0xf0] sm:$0xff]
        %v5547 = vld [vmem:[%s267 + $0xf8] sm:$0xff]
        %v5548 = vadd.f32 %v5437, %v5516
        %v5549 = vadd.f32 %v5439, %v5517
        %v5550 = vadd.f32 %v5442, %v5518
        %v5551 = vadd.f32 %v5444, %v5519
        %v5552 = vadd.f32 %v5447, %v5520
        %v5553 = vadd.f32 %v5449, %v5521
        %v5554 = vadd.f32 %v5452, %v5522
        %v5555 = vadd.f32 %v5454, %v5523
        %v5556 = vadd.f32 %v5457, %v5524
        %v5557 = vadd.f32 %v5459, %v5525
        %v5558 = vadd.f32 %v5462, %v5526
        %v5559 = vadd.f32 %v5464, %v5527
        %v5560 = vadd.f32 %v5467, %v5528
        %v5561 = vadd.f32 %v5469, %v5529
        %v5562 = vadd.f32 %v5472, %v5530
        %v5563 = vadd.f32 %v5474, %v5531
        %v5564 = vadd.f32 %v5477, %v5532
        %v5565 = vadd.f32 %v5479, %v5533
        %v5566 = vadd.f32 %v5482, %v5534
        %v5567 = vadd.f32 %v5484, %v5535
        %v5568 = vadd.f32 %v5487, %v5536
        %v5569 = vadd.f32 %v5489, %v5537
        %v5570 = vadd.f32 %v5492, %v5538
        %v5571 = vadd.f32 %v5494, %v5539
        %v5572 = vadd.f32 %v5497, %v5540
        %v5573 = vadd.f32 %v5499, %v5541
        %v5574 = vadd.f32 %v5502, %v5542
        %v5575 = vadd.f32 %v5504, %v5543
        %v5576 = vadd.f32 %v5507, %v5544
        %v5577 = vadd.f32 %v5509, %v5545
        %v5578 = vadd.f32 %v5512, %v5546
        %v5579 = vadd.f32 %v5514, %v5547
        %v5580 = vmax.f32 %v5548, 0.0
        %v5581 = vmax.f32 %v5549, 0.0
        %v5582 = vmax.f32 %v5550, 0.0
        %v5583 = vmax.f32 %v5551, 0.0
        %v5584 = vmax.f32 %v5552, 0.0
        %v5585 = vmax.f32 %v5553, 0.0
        %v5586 = vmax.f32 %v5554, 0.0
        %v5587 = vmax.f32 %v5555, 0.0
        %v5588 = vmax.f32 %v5556, 0.0
        %v5589 = vmax.f32 %v5557, 0.0
        %v5590 = vmax.f32 %v5558, 0.0
        %v5591 = vmax.f32 %v5559, 0.0
        %v5592 = vmax.f32 %v5560, 0.0
        %v5593 = vmax.f32 %v5561, 0.0
        %v5594 = vmax.f32 %v5562, 0.0
        %v5595 = vmax.f32 %v5563, 0.0
        %v5596 = vmax.f32 %v5564, 0.0
        %v5597 = vmax.f32 %v5565, 0.0
        %v5598 = vmax.f32 %v5566, 0.0
        %v5599 = vmax.f32 %v5567, 0.0
        %v5600 = vmax.f32 %v5568, 0.0
        %v5601 = vmax.f32 %v5569, 0.0
        %v5602 = vmax.f32 %v5570, 0.0
        %v5603 = vmax.f32 %v5571, 0.0
        %v5604 = vmax.f32 %v5572, 0.0
        %v5605 = vmax.f32 %v5573, 0.0
        %v5606 = vmax.f32 %v5574, 0.0
        %v5607 = vmax.f32 %v5575, 0.0
        %v5608 = vmax.f32 %v5576, 0.0
        %v5609 = vmax.f32 %v5577, 0.0
        %v5610 = vmax.f32 %v5578, 0.0
        %v5611 = vmax.f32 %v5579, 0.0
        %5612 = vst.msk [vmem:[%s298] sm:$0xff] %vm360, %v5580
        %5613 = vst.msk [vmem:[%s298 + $0x8] sm:$0xff] %vm360, %v5581
        %5614 = vst.msk [vmem:[%s298 + $0x10] sm:$0xff] %vm360, %v5582
        %5615 = vst.msk [vmem:[%s298 + $0x18] sm:$0xff] %vm360, %v5583
        %5616 = vst.msk [vmem:[%s298 + $0x20] sm:$0xff] %vm360, %v5584
        %5617 = vst.msk [vmem:[%s298 + $0x28] sm:$0xff] %vm360, %v5585
        %5618 = vst.msk [vmem:[%s298 + $0x30] sm:$0xff] %vm360, %v5586
        %5619 = vst.msk [vmem:[%s298 + $0x38] sm:$0xff] %vm360, %v5587
        %5620 = vst.msk [vmem:[%s298 + $0x40] sm:$0xff] %vm360, %v5588
        %5621 = vst.msk [vmem:[%s298 + $0x48] sm:$0xff] %vm360, %v5589
        %5622 = vst.msk [vmem:[%s298 + $0x50] sm:$0xff] %vm360, %v5590
        %5623 = vst.msk [vmem:[%s298 + $0x58] sm:$0xff] %vm360, %v5591
        %5624 = vst.msk [vmem:[%s298 + $0x60] sm:$0xff] %vm360, %v5592
        %5625 = vst.msk [vmem:[%s298 + $0x68] sm:$0xff] %vm360, %v5593
        %5626 = vst.msk [vmem:[%s298 + $0x70] sm:$0xff] %vm360, %v5594
        %5627 = vst.msk [vmem:[%s298 + $0x78] sm:$0xff] %vm360, %v5595
        %5628 = vst.msk [vmem:[%s298 + $0x80] sm:$0xff] %vm360, %v5596
        %5629 = vst.msk [vmem:[%s298 + $0x88] sm:$0xff] %vm360, %v5597
        %5630 = vst.msk [vmem:[%s298 + $0x90] sm:$0xff] %vm360, %v5598
        %5631 = vst.msk [vmem:[%s298 + $0x98] sm:$0xff] %vm360, %v5599
        %5632 = vst.msk [vmem:[%s298 + $0xa0] sm:$0xff] %vm360, %v5600
        %5633 = vst.msk [vmem:[%s298 + $0xa8] sm:$0xff] %vm360, %v5601
        %5634 = vst.msk [vmem:[%s298 + $0xb0] sm:$0xff] %vm360, %v5602
        %5635 = vst.msk [vmem:[%s298 + $0xb8] sm:$0xff] %vm360, %v5603
        %5636 = vst.msk [vmem:[%s298 + $0xc0] sm:$0xff] %vm360, %v5604
        %5637 = vst.msk [vmem:[%s298 + $0xc8] sm:$0xff] %vm360, %v5605
        %5638 = vst.msk [vmem:[%s298 + $0xd0] sm:$0xff] %vm360, %v5606
        %5639 = vst.msk [vmem:[%s298 + $0xd8] sm:$0xff] %vm360, %v5607
        %5640 = vst.msk [vmem:[%s298 + $0xe0] sm:$0xff] %vm360, %v5608
        %5641 = vst.msk [vmem:[%s298 + $0xe8] sm:$0xff] %vm360, %v5609
        %5642 = vst.msk [vmem:[%s298 + $0xf0] sm:$0xff] %vm360, %v5610
        %5643 = vst.msk [vmem:[%s298 + $0xf8] sm:$0xff] %vm360, %v5611
        %s5644 = sand.u32 %s184, 1
        %s5645 = scalar_lea.sflag [#allocation5], %s5644
        %s5646 = sand.u32 %s184, 1
        %s5647 = smul.addr %s5646, 256
        %s5648 = scalar_lea.vmem [#allocation6], %s5647
        // Predicated region
        $region53: #{tpu_custom_call.1} parent=47 // pred_check
          %p5649 = pneg %p194
        $region54: #{tpu_custom_call.1} parent=47 // pred_check_branch
          %5651 = sbr.rel (%p5649) target = $region56
        $region55: #{tpu_custom_call.1} parent=47 // pred_region
          %5653 = vsyncadd %s5645, 0
          %s5654 = smul.addr %s24, 32
          %s5655 = smul.addr %s5654, 8
          %s5656 = scalar_lea.hbm %s7, %s5655
          %s5657 = sshll.u32 %s5648, 4
          %s5658 = int_to_ptr.vmem [resolvable:$true] %s5657
          %s5659 = sshll.u32 %s5656, 4
          %s5660 = int_to_ptr.hbm [resolvable:$true] %s5659
          %5665 = dma.vmem_to_hbm [thread:$0]  %s5658, 4096, %s5660, %s5645, 128, 128, 8
        $region56: #{tpu_custom_call.1} parent=47 // pred_fallthru
          _
      $region48: #{tpu_custom_call.1} parent=5 // pred_fallthru
        _
      %p5666 = scmp.le.s32.totalorder 2, %s19
      // Predicated region
      $region57: #{tpu_custom_call.1} parent=5 // pred_check
        %p5667 = pneg %p5666
      $region58: #{tpu_custom_call.1} parent=5 // pred_check_branch
        %5669 = sbr.rel (%p5667) target = $region60
      $region59: #{tpu_custom_call.1} parent=5 // pred_region
        %s5670 = ssub.s32 %s19, 2
        // Predicated region
        $region61: #{tpu_custom_call.1} parent=59 // pred_check
          %p5671 = pneg %p200
        $region62: #{tpu_custom_call.1} parent=59 // pred_check_branch
          %5673 = sbr.rel (%p5671) target = $region64
        $region63: #{tpu_custom_call.1} parent=59 // pred_region
          %s5674 = sand.u32 %s185, 1
          %s5675 = scalar_lea.sflag [#allocation5], %s5674
          %s5676 = sand.u32 %s185, 1
          %s5677 = smul.addr %s5676, 256
          %s5678 = scalar_lea.vmem [#allocation6], %s5677
          %5680 = dma.done %s5675, 4096
        $region64: #{tpu_custom_call.1} parent=59 // pred_fallthru
          _
      $region60: #{tpu_custom_call.1} parent=5 // pred_fallthru
        _
    $region6: #{tpu_custom_call.1} parent=1 // loop_footer
      %s23 = sadd.s32 1, %s19
    $region7: #{tpu_custom_call.1} parent=1 // loop_footer_branch
      %18 = sbr.rel target = $region3
    $region8: #{tpu_custom_call.1} parent=1 // loop_exit
      _
    %5681 = vsyncpa [#allocation4], 1
    %s5682 = scalar_lea.sflag [#allocation4], 1
    %5683 = vsyncpa %s5682, 1
    %5684 = vsyncpa [#allocation5], 1
    %s5685 = scalar_lea.sflag [#allocation5], 1
    %5686 = vsyncpa %s5685, 1

</llo_original>
